<compile_context>
chip_gen: v7x
topology: tpu7x:2x2x1
jax: 0.10.0
libtpu: 0.0.40
codegen_flags: <defaults>
</compile_context>

<pallas_src>
import jax
import jax.numpy as jnp
from jax import lax
from jax.experimental import pallas as pl

# ----------------------------- model config ---------------------------------
VOCAB = 256
HIDDEN = 128
N_LAYERS = 2
N_HEADS = 4
HEAD_DIM = HIDDEN // N_HEADS          # 32
INTERMEDIATE = 256
BATCH = 2
SEQ = 8
RMS_EPS = 1e-6
ROPE_THETA = 10000.0
IGNORE_INDEX = 0                      # pad_token_id (!= eos) per init_criterion()

_BF16 = jnp.bfloat16
_F32 = jnp.float32


# ------------------------- in-kernel helper (traced) -------------------------
def _rms_norm(x, w):
    # Gemma RMSNorm (f32): x * rsqrt(mean(x^2)+eps) * (1 + weight)
    var = jnp.mean(x * x, axis=-1, keepdims=True)
    return x * lax.rsqrt(var + RMS_EPS) * (1.0 + w)


# ------------------- single fused forward Pallas kernel ----------------------
def _gemma_forward_kernel(x_ref, bias_ref, cos_ref, sin_ref, hmask_ref,
                          ln1_ref, wqkv_ref, wo_ref, ln2_ref, wgu_ref, wd_ref,
                          lnf_ref, embed_ref, labels_ref,
                          logits_ref, loss_ref):
    n_rows = x_ref.shape[0]                         # B*S
    x = x_ref[...]                                  # (BS, H) f32
    bias = bias_ref[...]                            # (BS, N_HEADS*BS) 0/-1e30
    cos = cos_ref[...]                              # (BS, H) f32
    sin = sin_ref[...]                              # (BS, H) f32
    hmask = hmask_ref[...]                          # (N_HEADS, H) f32 0/1
    scale = 1.0 / (HEAD_DIM ** 0.5)

    for lyr in range(N_LAYERS):                     # statically unrolled
        # ---------------- attention sub-block ----------------
        h = _rms_norm(x, ln1_ref[lyr])              # (BS, H) f32
        # fused [q | q_rot | k | k_rot | v] projection (bf16 MXU, f32 acc)
        qkv = jnp.dot(h.astype(_BF16), wqkv_ref[lyr],
                      preferred_element_type=_F32)  # (BS, 5H)
        q = qkv[:, 0 * HIDDEN:1 * HIDDEN]
        q_rot = qkv[:, 1 * HIDDEN:2 * HIDDEN]
        k = qkv[:, 2 * HIDDEN:3 * HIDDEN]
        k_rot = qkv[:, 3 * HIDDEN:4 * HIDDEN]
        v = qkv[:, 4 * HIDDEN:5 * HIDDEN]

        # RoPE: rotate_half already folded into the pre-rotated weight columns.
        q = q * cos + q_rot * sin
        k = k * cos + k_rot * sin

        # head-block-masked K/V slabs -> per-head attention with 2 matmuls.
        k_blk = jnp.concatenate(
            [k * hmask[hd:hd + 1, :] for hd in range(N_HEADS)], axis=0
        ).astype(_BF16)                             # (N_HEADS*BS, H)
        v_blk = jnp.concatenate(
            [v * hmask[hd:hd + 1, :] for hd in range(N_HEADS)], axis=0
        ).astype(_BF16)                             # (N_HEADS*BS, H)

        # ONE score matmul for all heads; additive mask bias (f32 path).
        s = lax.dot_general(q.astype(_BF16), k_blk, (((1,), (1,)), ((), ())),
                            preferred_element_type=_F32) * scale + bias

        # segmented softmax over each head's BS-wide column block
        probs = []
        for hd in range(N_HEADS):
            s_h = s[:, hd * n_rows:(hd + 1) * n_rows]          # (BS, BS)
            m = jnp.max(s_h, axis=-1, keepdims=True)
            p = jnp.exp(s_h - m)
            p = p * pl.reciprocal(jnp.sum(p, axis=-1, keepdims=True),
                                  approx=True)
            probs.append(p)
        p_full = jnp.concatenate(probs, axis=1).astype(_BF16)  # (BS, 4*BS)

        attn = jnp.dot(p_full, v_blk,
                       preferred_element_type=_F32)            # (BS, H)
        x = x + jnp.dot(attn.astype(_BF16), wo_ref[lyr],
                        preferred_element_type=_F32)

        # ---------------- GeGLU MLP sub-block ----------------
        h2 = _rms_norm(x, ln2_ref[lyr])
        gu = jnp.dot(h2.astype(_BF16), wgu_ref[lyr],
                     preferred_element_type=_F32)   # (BS, 2I) fused gate|up
        g = gu[:, :INTERMEDIATE]
        u = gu[:, INTERMEDIATE:]
        act = jax.nn.gelu(g, approximate=True) * u  # gelu_pytorch_tanh (EUP)
        x = x + jnp.dot(act.astype(_BF16), wd_ref[lyr],
                        preferred_element_type=_F32)

    # ------------- final RMSNorm + tied lm_head + cross-entropy -------------
    hf = _rms_norm(x, lnf_ref[...])
    # contract on HIDDEN against the bf16 (V, H) embedding (no transpose)
    logits = lax.dot_general(hf.astype(_BF16), embed_ref[...],
                             (((1,), (1,)), ((), ())),
                             preferred_element_type=_F32)      # (BS, V)
    logits_ref[...] = logits

    labels = labels_ref[...]                                   # (BS, 1) int32
    mx = jnp.max(logits, axis=-1, keepdims=True)
    lse = jnp.log(jnp.sum(jnp.exp(logits - mx), axis=-1, keepdims=True)) + mx
    col = lax.broadcasted_iota(jnp.int32, logits.shape, 1)
    tgt = jnp.sum(jnp.where(col == labels, logits, 0.0), axis=-1, keepdims=True)
    valid = (labels != IGNORE_INDEX).astype(_F32)              # (BS, 1)
    per_row = (lse - tgt) * valid
    loss_sum = jnp.sum(per_row, axis=0, keepdims=True)         # (1, 1)
    n_valid = jnp.sum(valid, axis=0, keepdims=True)            # (1, 1)
    loss_ref[...] = loss_sum / jnp.maximum(n_valid, 1.0)


def gemma_fused_forward(x0, bias_t, cos, sin, hmask, params, labels):
    bs, h = x0.shape
    v = params["embed_bf16"].shape[0]
    in_specs = [
        pl.BlockSpec((bs, h), lambda: (0, 0)),                           # x
        pl.BlockSpec((bs, N_HEADS * bs), lambda: (0, 0)),                # bias
        pl.BlockSpec((bs, h), lambda: (0, 0)),                           # cos
        pl.BlockSpec((bs, h), lambda: (0, 0)),                           # sin
        pl.BlockSpec((N_HEADS, h), lambda: (0, 0)),                      # hmask
        pl.BlockSpec((N_LAYERS, 1, h), lambda: (0, 0, 0)),               # ln1
        pl.BlockSpec((N_LAYERS, h, 5 * h), lambda: (0, 0, 0)),           # wqkv
        pl.BlockSpec((N_LAYERS, h, h), lambda: (0, 0, 0)),               # wo
        pl.BlockSpec((N_LAYERS, 1, h), lambda: (0, 0, 0)),               # ln2
        pl.BlockSpec((N_LAYERS, h, 2 * INTERMEDIATE), lambda: (0, 0, 0)),  # wgu
        pl.BlockSpec((N_LAYERS, INTERMEDIATE, h), lambda: (0, 0, 0)),    # wd
        pl.BlockSpec((1, h), lambda: (0, 0)),                            # lnf
        pl.BlockSpec((v, h), lambda: (0, 0)),                            # embed
        pl.BlockSpec((bs, 1), lambda: (0, 0)),                           # labels
    ]
    return pl.pallas_call(
        _gemma_forward_kernel,
        out_shape=(jax.ShapeDtypeStruct((bs, v), jnp.float32),
                   jax.ShapeDtypeStruct((1, 1), jnp.float32)),
        in_specs=in_specs,
        out_specs=(pl.BlockSpec((bs, v), lambda: (0, 0)),
                   pl.BlockSpec((1, 1), lambda: (0, 0))),
    )(x0, bias_t, cos, sin, hmask,
      params["ln1"], params["wqkv"], params["wo"], params["ln2"],
      params["wgu"], params["wd"], params["final_ln"],
      params["embed_bf16"], labels)


# ----------------------------- glue (plain JAX) ------------------------------
def _rotate_half_matrix():
    """Signed permutation M with (q @ M) == rotate_half(q) per packed head."""
    j = jnp.arange(HIDDEN)
    half = HEAD_DIM // 2
    in_first = (j % HEAD_DIM) < half
    src = jnp.where(in_first, j + half, j - half)
    sign = jnp.where(in_first, -1.0, 1.0).astype(jnp.float32)
    return jnp.zeros((HIDDEN, HIDDEN), jnp.float32).at[src, j].set(sign)


def make_rope_full(batch, seq):
    """cos/sin tiled to the packed (B*S, N_HEADS*HEAD_DIM) activation layout."""
    inv_freq = 1.0 / (ROPE_THETA ** (jnp.arange(0, HEAD_DIM, 2,
                                                dtype=jnp.float32) / HEAD_DIM))
    pos = jnp.arange(seq, dtype=jnp.float32)
    freqs = jnp.outer(pos, inv_freq)                       # (S, Dh/2)
    emb = jnp.concatenate([freqs, freqs], axis=-1)         # (S, Dh)
    cos, sin = jnp.cos(emb), jnp.sin(emb)
    return jnp.tile(cos, (batch, N_HEADS)), jnp.tile(sin, (batch, N_HEADS))


def init_params(key):
    def nrm(k, shape, scale=0.02):
        return scale * jax.random.normal(k, shape, jnp.float32)

    rot = _rotate_half_matrix()
    keys = jax.random.split(key, 1 + N_LAYERS * 7)
    embed = nrm(keys[0], (VOCAB, HIDDEN), 1.0)
    ln1, ln2, wqkv, wo, wgu, wd = [], [], [], [], [], []
    for lyr in range(N_LAYERS):
        k = keys[1 + 7 * lyr: 1 + 7 * (lyr + 1)]
        wq = nrm(k[0], (HIDDEN, HIDDEN))
        wk = nrm(k[1], (HIDDEN, HIDDEN))
        wv = nrm(k[2], (HIDDEN, HIDDEN))
        # fused [q | q_rot | k | k_rot | v] so RoPE needs no in-kernel shuffles
        wqkv.append(jnp.concatenate([wq, wq @ rot, wk, wk @ rot, wv],
                                    axis=1).astype(_BF16))          # (H, 5H)
        wo.append(nrm(k[3], (HIDDEN, HIDDEN)).astype(_BF16))
        wgu.append(jnp.concatenate([nrm(k[4], (HIDDEN, INTERMEDIATE)),
                                    nrm(k[5], (HIDDEN, INTERMEDIATE))],
                                   axis=1).astype(_BF16))           # (H, 2I)
        wd.append(nrm(k[6], (INTERMEDIATE, HIDDEN)).astype(_BF16))
        ln1.append(jnp.zeros((1, HIDDEN), jnp.float32))
        ln2.append(jnp.zeros((1, HIDDEN), jnp.float32))
    return {
        "embed": embed,                         # f32 for the token gather
        "embed_bf16": embed.astype(_BF16),      # bf16 copy for tied lm_head
        "ln1": jnp.stack(ln1), "ln2": jnp.stack(ln2),
        "wqkv": jnp.stack(wqkv), "wo": jnp.stack(wo),
        "wgu": jnp.stack(wgu), "wd": jnp.stack(wd),
        "final_ln": jnp.zeros((1, HIDDEN), jnp.float32),
    }


def gemma_forward(params, src_tok, enc_mask, label):
    B, S = src_tok.shape
    bs = B * S

    # TODO(synk): token-embedding gather stays in XLA (jnp.take); a Pallas
    # per-row DMA gather is not worth it at these sizes.
    x = jnp.take(params["embed"], src_tok, axis=0).reshape(bs, HIDDEN)
    x = x * jnp.float32(HIDDEN) ** 0.5            # Gemma sqrt(hidden) scaling

    cos, sin = make_rope_full(B, S)               # constants, folded by XLA

    # combined causal + same-batch-block + key-padding additive bias, tiled
    # across heads so the kernel does a single add on the packed score slab.
    row = jnp.arange(bs, dtype=jnp.int32)
    col = jnp.arange(bs, dtype=jnp.int32)
    allow = ((col[None, :] <= row[:, None])
             & ((row[:, None] // S) == (col[None, :] // S))
             & (enc_mask.reshape(-1)[None, :] > 0))
    bias = jnp.where(allow, 0.0, -1e30).astype(jnp.float32)   # (BS, BS)
    bias_t = jnp.tile(bias, (1, N_HEADS))                     # (BS, 4*BS)

    # constant per-head lane masks (hoisted out of the kernel)
    hmask = (jnp.arange(HIDDEN)[None, :] // HEAD_DIM
             == jnp.arange(N_HEADS)[:, None]).astype(jnp.float32)  # (4, H)

    # shifted labels: row b*S+s targets label[b, s+1]; last row per batch and
    # prompt/pad rows carry IGNORE_INDEX -> exact CrossEntropyLoss semantics.
    shifted = jnp.concatenate(
        [label[:, 1:], jnp.full((B, 1), IGNORE_INDEX, label.dtype)], axis=1
    ).reshape(bs, 1).astype(jnp.int32)

    logits2d, loss = gemma_fused_forward(x, bias_t, cos, sin, hmask,
                                         params, shifted)
    return logits2d.reshape(B, S, VOCAB), loss[0, 0]


# ----------------------------------- main ------------------------------------
if __name__ == "__main__":
    key = jax.random.PRNGKey(0)
    pkey, tkey = jax.random.split(key)
    params = init_params(pkey)

    # tokens in [2, VOCAB); first 3 "prompt" tokens ignored (user_prompt_masking);
    # one padded position in batch 1 masked out of attention and the loss.
    src_tok = jax.random.randint(tkey, (BATCH, SEQ), 2, VOCAB, dtype=jnp.int32)
    enc_mask = jnp.ones((BATCH, SEQ), jnp.int32).at[1, SEQ - 1].set(0)
    label = src_tok.at[:, :3].set(IGNORE_INDEX)
    label = label.at[1, SEQ - 1].set(IGNORE_INDEX)

    fwd = jax.jit(gemma_forward)
    logits, loss = fwd(params, src_tok, enc_mask, label)
    jax.block_until_ready((logits, loss))

    assert logits.shape == (BATCH, SEQ, VOCAB)
    assert bool(jnp.isfinite(loss))
    print("KERNEL_OK")
</pallas_src>

<mosaic_0001>
module attributes {stable_mosaic.version = 11 : i64} {
  func.func @_gemma_forward_kernel(%arg0: memref<16x128xf32, #tpu.memory_space<vmem>>, %arg1: memref<16x64xf32, #tpu.memory_space<vmem>>, %arg2: memref<16x128xf32, #tpu.memory_space<vmem>>, %arg3: memref<16x128xf32, #tpu.memory_space<vmem>>, %arg4: memref<4x128xf32, #tpu.memory_space<vmem>>, %arg5: memref<2x1x128xf32, #tpu.memory_space<vmem>>, %arg6: memref<2x128x640xbf16, #tpu.memory_space<vmem>>, %arg7: memref<2x128x128xbf16, #tpu.memory_space<vmem>>, %arg8: memref<2x1x128xf32, #tpu.memory_space<vmem>>, %arg9: memref<2x128x512xbf16, #tpu.memory_space<vmem>>, %arg10: memref<2x256x128xbf16, #tpu.memory_space<vmem>>, %arg11: memref<1x128xf32, #tpu.memory_space<vmem>>, %arg12: memref<256x128xbf16, #tpu.memory_space<vmem>>, %arg13: memref<16x1xi32, #tpu.memory_space<vmem>>, %arg14: memref<16x256xf32, #tpu.memory_space<vmem>>, %arg15: memref<1x1xf32, #tpu.memory_space<vmem>>) attributes {dimension_semantics = [], scalar_prefetch = 0 : i64, scratch_operands = 0 : i64, tpu.core_type = #tpu.core_type<tc>} {
    %c0 = arith.constant 0 : index
    %c0_0 = arith.constant 0 : index
    %0 = vector.load %arg0[%c0, %c0_0] : memref<16x128xf32, #tpu.memory_space<vmem>>, vector<16x128xf32>
    %c0_1 = arith.constant 0 : index
    %c0_2 = arith.constant 0 : index
    %1 = vector.load %arg1[%c0_1, %c0_2] : memref<16x64xf32, #tpu.memory_space<vmem>>, vector<16x64xf32>
    %c0_3 = arith.constant 0 : index
    %c0_4 = arith.constant 0 : index
    %2 = vector.load %arg2[%c0_3, %c0_4] : memref<16x128xf32, #tpu.memory_space<vmem>>, vector<16x128xf32>
    %c0_5 = arith.constant 0 : index
    %c0_6 = arith.constant 0 : index
    %3 = vector.load %arg3[%c0_5, %c0_6] : memref<16x128xf32, #tpu.memory_space<vmem>>, vector<16x128xf32>
    %c0_7 = arith.constant 0 : index
    %c0_8 = arith.constant 0 : index
    %4 = vector.load %arg4[%c0_7, %c0_8] : memref<4x128xf32, #tpu.memory_space<vmem>>, vector<4x128xf32>
    %c0_9 = arith.constant 0 : index
    %c0_10 = arith.constant 0 : index
    %c0_11 = arith.constant 0 : index
    %5 = vector.load %arg5[%c0_9, %c0_10, %c0_11] : memref<2x1x128xf32, #tpu.memory_space<vmem>>, vector<1x1x128xf32>
    %6 = vector.shape_cast %5 : vector<1x1x128xf32> to vector<1x128xf32>
    %7 = arith.mulf %0, %0 : vector<16x128xf32>
    %cst = arith.constant dense<0.000000e+00> : vector<16xf32>
    %8 = vector.multi_reduction <add>, %7, %cst [1] : vector<16x128xf32> to vector<16xf32>
    %9 = vector.shape_cast %8 : vector<16xf32> to vector<16x1xf32>
    %cst_12 = arith.constant 1.280000e+02 : f32
    %10 = vector.broadcast %cst_12 : f32 to vector<16x1xf32>
    %11 = arith.divf %9, %10 : vector<16x1xf32>
    %cst_13 = arith.constant 9.99999997E-7 : f32
    %12 = vector.broadcast %cst_13 : f32 to vector<16x1xf32>
    %13 = arith.addf %11, %12 : vector<16x1xf32>
    %14 = math.rsqrt %13 : vector<16x1xf32>
    %15 = vector.broadcast %14 : vector<16x1xf32> to vector<16x128xf32>
    %16 = arith.mulf %0, %15 : vector<16x128xf32>
    %cst_14 = arith.constant 1.000000e+00 : f32
    %17 = vector.broadcast %cst_14 : f32 to vector<1x128xf32>
    %18 = arith.addf %17, %6 : vector<1x128xf32>
    %19 = vector.broadcast %18 : vector<1x128xf32> to vector<16x128xf32>
    %20 = arith.mulf %16, %19 : vector<16x128xf32>
    %21 = arith.truncf %20 : vector<16x128xf32> to vector<16x128xbf16>
    %c0_15 = arith.constant 0 : index
    %c0_16 = arith.constant 0 : index
    %c0_17 = arith.constant 0 : index
    %22 = vector.load %arg6[%c0_15, %c0_16, %c0_17] : memref<2x128x640xbf16, #tpu.memory_space<vmem>>, vector<1x128x640xbf16>
    %23 = vector.shape_cast %22 : vector<1x128x640xbf16> to vector<128x640xbf16>
    %cst_18 = arith.constant dense<0.000000e+00> : vector<16x640xf32>
    %24 = tpu.matmul %21, %23, %cst_18 {dimension_numbers = #tpu.dot_dimension_numbers<[1], [0], [0], [1], [0, 0, 1, 1], [], []>} : vector<16x128xbf16>, vector<128x640xbf16>, vector<16x640xf32> -> vector<16x640xf32>
    %25 = vector.extract_strided_slice %24 {offsets = [0, 0], sizes = [16, 128], strides = [1, 1]} : vector<16x640xf32> to vector<16x128xf32>
    %26 = vector.extract_strided_slice %24 {offsets = [0, 128], sizes = [16, 128], strides = [1, 1]} : vector<16x640xf32> to vector<16x128xf32>
    %27 = vector.extract_strided_slice %24 {offsets = [0, 256], sizes = [16, 128], strides = [1, 1]} : vector<16x640xf32> to vector<16x128xf32>
    %28 = vector.extract_strided_slice %24 {offsets = [0, 384], sizes = [16, 128], strides = [1, 1]} : vector<16x640xf32> to vector<16x128xf32>
    %29 = vector.extract_strided_slice %24 {offsets = [0, 512], sizes = [16, 128], strides = [1, 1]} : vector<16x640xf32> to vector<16x128xf32>
    %30 = arith.mulf %25, %2 : vector<16x128xf32>
    %31 = arith.mulf %26, %3 : vector<16x128xf32>
    %32 = arith.addf %30, %31 : vector<16x128xf32>
    %33 = arith.mulf %27, %2 : vector<16x128xf32>
    %34 = arith.mulf %28, %3 : vector<16x128xf32>
    %35 = arith.addf %33, %34 : vector<16x128xf32>
    %36 = vector.extract_strided_slice %4 {offsets = [0, 0], sizes = [1, 128], strides = [1, 1]} : vector<4x128xf32> to vector<1x128xf32>
    %37 = vector.broadcast %36 : vector<1x128xf32> to vector<16x128xf32>
    %38 = arith.mulf %35, %37 : vector<16x128xf32>
    %39 = vector.extract_strided_slice %4 {offsets = [1, 0], sizes = [1, 128], strides = [1, 1]} : vector<4x128xf32> to vector<1x128xf32>
    %40 = vector.broadcast %39 : vector<1x128xf32> to vector<16x128xf32>
    %41 = arith.mulf %35, %40 : vector<16x128xf32>
    %42 = vector.extract_strided_slice %4 {offsets = [2, 0], sizes = [1, 128], strides = [1, 1]} : vector<4x128xf32> to vector<1x128xf32>
    %43 = vector.broadcast %42 : vector<1x128xf32> to vector<16x128xf32>
    %44 = arith.mulf %35, %43 : vector<16x128xf32>
    %45 = vector.extract_strided_slice %4 {offsets = [3, 0], sizes = [1, 128], strides = [1, 1]} : vector<4x128xf32> to vector<1x128xf32>
    %46 = vector.broadcast %45 : vector<1x128xf32> to vector<16x128xf32>
    %47 = arith.mulf %35, %46 : vector<16x128xf32>
    %48 = tpu.concatenate %38, %41, %44, %47 in 0 : vector<16x128xf32>, vector<16x128xf32>, vector<16x128xf32>, vector<16x128xf32> -> vector<64x128xf32>
    %49 = arith.truncf %48 : vector<64x128xf32> to vector<64x128xbf16>
    %50 = vector.extract_strided_slice %4 {offsets = [0, 0], sizes = [1, 128], strides = [1, 1]} : vector<4x128xf32> to vector<1x128xf32>
    %51 = vector.broadcast %50 : vector<1x128xf32> to vector<16x128xf32>
    %52 = arith.mulf %29, %51 : vector<16x128xf32>
    %53 = vector.extract_strided_slice %4 {offsets = [1, 0], sizes = [1, 128], strides = [1, 1]} : vector<4x128xf32> to vector<1x128xf32>
    %54 = vector.broadcast %53 : vector<1x128xf32> to vector<16x128xf32>
    %55 = arith.mulf %29, %54 : vector<16x128xf32>
    %56 = vector.extract_strided_slice %4 {offsets = [2, 0], sizes = [1, 128], strides = [1, 1]} : vector<4x128xf32> to vector<1x128xf32>
    %57 = vector.broadcast %56 : vector<1x128xf32> to vector<16x128xf32>
    %58 = arith.mulf %29, %57 : vector<16x128xf32>
    %59 = vector.extract_strided_slice %4 {offsets = [3, 0], sizes = [1, 128], strides = [1, 1]} : vector<4x128xf32> to vector<1x128xf32>
    %60 = vector.broadcast %59 : vector<1x128xf32> to vector<16x128xf32>
    %61 = arith.mulf %29, %60 : vector<16x128xf32>
    %62 = tpu.concatenate %52, %55, %58, %61 in 0 : vector<16x128xf32>, vector<16x128xf32>, vector<16x128xf32>, vector<16x128xf32> -> vector<64x128xf32>
    %63 = arith.truncf %62 : vector<64x128xf32> to vector<64x128xbf16>
    %64 = arith.truncf %32 : vector<16x128xf32> to vector<16x128xbf16>
    %cst_19 = arith.constant dense<0.000000e+00> : vector<16x64xf32>
    %65 = tpu.matmul %64, %49, %cst_19 {dimension_numbers = #tpu.dot_dimension_numbers<[1], [1], [0], [0], [0, 0, 1, 0], [], []>} : vector<16x128xbf16>, vector<64x128xbf16>, vector<16x64xf32> -> vector<16x64xf32>
    %cst_20 = arith.constant 0.176776692 : f32
    %66 = vector.broadcast %cst_20 : f32 to vector<16x64xf32>
    %67 = arith.mulf %65, %66 : vector<16x64xf32>
    %68 = arith.addf %67, %1 : vector<16x64xf32>
    %69 = vector.extract_strided_slice %68 {offsets = [0, 0], sizes = [16, 16], strides = [1, 1]} : vector<16x64xf32> to vector<16x16xf32>
    %cst_21 = arith.constant dense<0xFF800000> : vector<16xf32>
    %70 = vector.multi_reduction <maximumf>, %69, %cst_21 [1] : vector<16x16xf32> to vector<16xf32>
    %71 = vector.shape_cast %70 : vector<16xf32> to vector<16x1xf32>
    %72 = vector.broadcast %71 : vector<16x1xf32> to vector<16x16xf32>
    %73 = arith.subf %69, %72 : vector<16x16xf32>
    %74 = math.exp %73 : vector<16x16xf32>
    %cst_22 = arith.constant dense<0.000000e+00> : vector<16xf32>
    %75 = vector.multi_reduction <add>, %74, %cst_22 [1] : vector<16x16xf32> to vector<16xf32>
    %76 = vector.shape_cast %75 : vector<16xf32> to vector<16x1xf32>
    %77 = tpu.reciprocal %76 {approx = true} : vector<16x1xf32> -> vector<16x1xf32>
    %78 = vector.broadcast %77 : vector<16x1xf32> to vector<16x16xf32>
    %79 = arith.mulf %74, %78 : vector<16x16xf32>
    %80 = vector.extract_strided_slice %68 {offsets = [0, 16], sizes = [16, 16], strides = [1, 1]} : vector<16x64xf32> to vector<16x16xf32>
    %cst_23 = arith.constant dense<0xFF800000> : vector<16xf32>
    %81 = vector.multi_reduction <maximumf>, %80, %cst_23 [1] : vector<16x16xf32> to vector<16xf32>
    %82 = vector.shape_cast %81 : vector<16xf32> to vector<16x1xf32>
    %83 = vector.broadcast %82 : vector<16x1xf32> to vector<16x16xf32>
    %84 = arith.subf %80, %83 : vector<16x16xf32>
    %85 = math.exp %84 : vector<16x16xf32>
    %cst_24 = arith.constant dense<0.000000e+00> : vector<16xf32>
    %86 = vector.multi_reduction <add>, %85, %cst_24 [1] : vector<16x16xf32> to vector<16xf32>
    %87 = vector.shape_cast %86 : vector<16xf32> to vector<16x1xf32>
    %88 = tpu.reciprocal %87 {approx = true} : vector<16x1xf32> -> vector<16x1xf32>
    %89 = vector.broadcast %88 : vector<16x1xf32> to vector<16x16xf32>
    %90 = arith.mulf %85, %89 : vector<16x16xf32>
    %91 = vector.extract_strided_slice %68 {offsets = [0, 32], sizes = [16, 16], strides = [1, 1]} : vector<16x64xf32> to vector<16x16xf32>
    %cst_25 = arith.constant dense<0xFF800000> : vector<16xf32>
    %92 = vector.multi_reduction <maximumf>, %91, %cst_25 [1] : vector<16x16xf32> to vector<16xf32>
    %93 = vector.shape_cast %92 : vector<16xf32> to vector<16x1xf32>
    %94 = vector.broadcast %93 : vector<16x1xf32> to vector<16x16xf32>
    %95 = arith.subf %91, %94 : vector<16x16xf32>
    %96 = math.exp %95 : vector<16x16xf32>
    %cst_26 = arith.constant dense<0.000000e+00> : vector<16xf32>
    %97 = vector.multi_reduction <add>, %96, %cst_26 [1] : vector<16x16xf32> to vector<16xf32>
    %98 = vector.shape_cast %97 : vector<16xf32> to vector<16x1xf32>
    %99 = tpu.reciprocal %98 {approx = true} : vector<16x1xf32> -> vector<16x1xf32>
    %100 = vector.broadcast %99 : vector<16x1xf32> to vector<16x16xf32>
    %101 = arith.mulf %96, %100 : vector<16x16xf32>
    %102 = vector.extract_strided_slice %68 {offsets = [0, 48], sizes = [16, 16], strides = [1, 1]} : vector<16x64xf32> to vector<16x16xf32>
    %cst_27 = arith.constant dense<0xFF800000> : vector<16xf32>
    %103 = vector.multi_reduction <maximumf>, %102, %cst_27 [1] : vector<16x16xf32> to vector<16xf32>
    %104 = vector.shape_cast %103 : vector<16xf32> to vector<16x1xf32>
    %105 = vector.broadcast %104 : vector<16x1xf32> to vector<16x16xf32>
    %106 = arith.subf %102, %105 : vector<16x16xf32>
    %107 = math.exp %106 : vector<16x16xf32>
    %cst_28 = arith.constant dense<0.000000e+00> : vector<16xf32>
    %108 = vector.multi_reduction <add>, %107, %cst_28 [1] : vector<16x16xf32> to vector<16xf32>
    %109 = vector.shape_cast %108 : vector<16xf32> to vector<16x1xf32>
    %110 = tpu.reciprocal %109 {approx = true} : vector<16x1xf32> -> vector<16x1xf32>
    %111 = vector.broadcast %110 : vector<16x1xf32> to vector<16x16xf32>
    %112 = arith.mulf %107, %111 : vector<16x16xf32>
    %113 = tpu.concatenate %79, %90, %101, %112 in 1 : vector<16x16xf32>, vector<16x16xf32>, vector<16x16xf32>, vector<16x16xf32> -> vector<16x64xf32>
    %114 = arith.truncf %113 : vector<16x64xf32> to vector<16x64xbf16>
    %cst_29 = arith.constant dense<0.000000e+00> : vector<16x128xf32>
    %115 = tpu.matmul %114, %63, %cst_29 {dimension_numbers = #tpu.dot_dimension_numbers<[1], [0], [0], [1], [0, 0, 1, 1], [], []>} : vector<16x64xbf16>, vector<64x128xbf16>, vector<16x128xf32> -> vector<16x128xf32>
    %116 = arith.truncf %115 : vector<16x128xf32> to vector<16x128xbf16>
    %c0_30 = arith.constant 0 : index
    %c0_31 = arith.constant 0 : index
    %c0_32 = arith.constant 0 : index
    %117 = vector.load %arg7[%c0_30, %c0_31, %c0_32] : memref<2x128x128xbf16, #tpu.memory_space<vmem>>, vector<1x128x128xbf16>
    %118 = vector.shape_cast %117 : vector<1x128x128xbf16> to vector<128x128xbf16>
    %cst_33 = arith.constant dense<0.000000e+00> : vector<16x128xf32>
    %119 = tpu.matmul %116, %118, %cst_33 {dimension_numbers = #tpu.dot_dimension_numbers<[1], [0], [0], [1], [0, 0, 1, 1], [], []>} : vector<16x128xbf16>, vector<128x128xbf16>, vector<16x128xf32> -> vector<16x128xf32>
    %120 = arith.addf %0, %119 : vector<16x128xf32>
    %c0_34 = arith.constant 0 : index
    %c0_35 = arith.constant 0 : index
    %c0_36 = arith.constant 0 : index
    %121 = vector.load %arg8[%c0_34, %c0_35, %c0_36] : memref<2x1x128xf32, #tpu.memory_space<vmem>>, vector<1x1x128xf32>
    %122 = vector.shape_cast %121 : vector<1x1x128xf32> to vector<1x128xf32>
    %123 = arith.mulf %120, %120 : vector<16x128xf32>
    %cst_37 = arith.constant dense<0.000000e+00> : vector<16xf32>
    %124 = vector.multi_reduction <add>, %123, %cst_37 [1] : vector<16x128xf32> to vector<16xf32>
    %125 = vector.shape_cast %124 : vector<16xf32> to vector<16x1xf32>
    %cst_38 = arith.constant 1.280000e+02 : f32
    %126 = vector.broadcast %cst_38 : f32 to vector<16x1xf32>
    %127 = arith.divf %125, %126 : vector<16x1xf32>
    %cst_39 = arith.constant 9.99999997E-7 : f32
    %128 = vector.broadcast %cst_39 : f32 to vector<16x1xf32>
    %129 = arith.addf %127, %128 : vector<16x1xf32>
    %130 = math.rsqrt %129 : vector<16x1xf32>
    %131 = vector.broadcast %130 : vector<16x1xf32> to vector<16x128xf32>
    %132 = arith.mulf %120, %131 : vector<16x128xf32>
    %cst_40 = arith.constant 1.000000e+00 : f32
    %133 = vector.broadcast %cst_40 : f32 to vector<1x128xf32>
    %134 = arith.addf %133, %122 : vector<1x128xf32>
    %135 = vector.broadcast %134 : vector<1x128xf32> to vector<16x128xf32>
    %136 = arith.mulf %132, %135 : vector<16x128xf32>
    %137 = arith.truncf %136 : vector<16x128xf32> to vector<16x128xbf16>
    %c0_41 = arith.constant 0 : index
    %c0_42 = arith.constant 0 : index
    %c0_43 = arith.constant 0 : index
    %138 = vector.load %arg9[%c0_41, %c0_42, %c0_43] : memref<2x128x512xbf16, #tpu.memory_space<vmem>>, vector<1x128x512xbf16>
    %139 = vector.shape_cast %138 : vector<1x128x512xbf16> to vector<128x512xbf16>
    %cst_44 = arith.constant dense<0.000000e+00> : vector<16x512xf32>
    %140 = tpu.matmul %137, %139, %cst_44 {dimension_numbers = #tpu.dot_dimension_numbers<[1], [0], [0], [1], [0, 0, 1, 1], [], []>} : vector<16x128xbf16>, vector<128x512xbf16>, vector<16x512xf32> -> vector<16x512xf32>
    %141 = vector.extract_strided_slice %140 {offsets = [0, 0], sizes = [16, 256], strides = [1, 1]} : vector<16x512xf32> to vector<16x256xf32>
    %142 = vector.extract_strided_slice %140 {offsets = [0, 256], sizes = [16, 256], strides = [1, 1]} : vector<16x512xf32> to vector<16x256xf32>
    %143 = arith.mulf %141, %141 : vector<16x256xf32>
    %144 = arith.mulf %141, %143 : vector<16x256xf32>
    %cst_45 = arith.constant 4.471500e-02 : f32
    %145 = vector.broadcast %cst_45 : f32 to vector<16x256xf32>
    %146 = arith.mulf %145, %144 : vector<16x256xf32>
    %147 = arith.addf %141, %146 : vector<16x256xf32>
    %cst_46 = arith.constant 0.797884583 : f32
    %148 = vector.broadcast %cst_46 : f32 to vector<16x256xf32>
    %149 = arith.mulf %148, %147 : vector<16x256xf32>
    %150 = math.tanh %149 : vector<16x256xf32>
    %cst_47 = arith.constant 1.000000e+00 : f32
    %151 = vector.broadcast %cst_47 : f32 to vector<16x256xf32>
    %152 = arith.addf %151, %150 : vector<16x256xf32>
    %cst_48 = arith.constant 5.000000e-01 : f32
    %153 = vector.broadcast %cst_48 : f32 to vector<16x256xf32>
    %154 = arith.mulf %153, %152 : vector<16x256xf32>
    %155 = arith.mulf %141, %154 : vector<16x256xf32>
    %156 = arith.mulf %155, %142 : vector<16x256xf32>
    %157 = arith.truncf %156 : vector<16x256xf32> to vector<16x256xbf16>
    %c0_49 = arith.constant 0 : index
    %c0_50 = arith.constant 0 : index
    %c0_51 = arith.constant 0 : index
    %158 = vector.load %arg10[%c0_49, %c0_50, %c0_51] : memref<2x256x128xbf16, #tpu.memory_space<vmem>>, vector<1x256x128xbf16>
    %159 = vector.shape_cast %158 : vector<1x256x128xbf16> to vector<256x128xbf16>
    %cst_52 = arith.constant dense<0.000000e+00> : vector<16x128xf32>
    %160 = tpu.matmul %157, %159, %cst_52 {dimension_numbers = #tpu.dot_dimension_numbers<[1], [0], [0], [1], [0, 0, 1, 1], [], []>} : vector<16x256xbf16>, vector<256x128xbf16>, vector<16x128xf32> -> vector<16x128xf32>
    %161 = arith.addf %120, %160 : vector<16x128xf32>
    %c1 = arith.constant 1 : index
    %c0_53 = arith.constant 0 : index
    %c0_54 = arith.constant 0 : index
    %162 = vector.load %arg5[%c1, %c0_53, %c0_54] : memref<2x1x128xf32, #tpu.memory_space<vmem>>, vector<1x1x128xf32>
    %163 = vector.shape_cast %162 : vector<1x1x128xf32> to vector<1x128xf32>
    %164 = arith.mulf %161, %161 : vector<16x128xf32>
    %cst_55 = arith.constant dense<0.000000e+00> : vector<16xf32>
    %165 = vector.multi_reduction <add>, %164, %cst_55 [1] : vector<16x128xf32> to vector<16xf32>
    %166 = vector.shape_cast %165 : vector<16xf32> to vector<16x1xf32>
    %cst_56 = arith.constant 1.280000e+02 : f32
    %167 = vector.broadcast %cst_56 : f32 to vector<16x1xf32>
    %168 = arith.divf %166, %167 : vector<16x1xf32>
    %cst_57 = arith.constant 9.99999997E-7 : f32
    %169 = vector.broadcast %cst_57 : f32 to vector<16x1xf32>
    %170 = arith.addf %168, %169 : vector<16x1xf32>
    %171 = math.rsqrt %170 : vector<16x1xf32>
    %172 = vector.broadcast %171 : vector<16x1xf32> to vector<16x128xf32>
    %173 = arith.mulf %161, %172 : vector<16x128xf32>
    %cst_58 = arith.constant 1.000000e+00 : f32
    %174 = vector.broadcast %cst_58 : f32 to vector<1x128xf32>
    %175 = arith.addf %174, %163 : vector<1x128xf32>
    %176 = vector.broadcast %175 : vector<1x128xf32> to vector<16x128xf32>
    %177 = arith.mulf %173, %176 : vector<16x128xf32>
    %178 = arith.truncf %177 : vector<16x128xf32> to vector<16x128xbf16>
    %c1_59 = arith.constant 1 : index
    %c0_60 = arith.constant 0 : index
    %c0_61 = arith.constant 0 : index
    %179 = vector.load %arg6[%c1_59, %c0_60, %c0_61] : memref<2x128x640xbf16, #tpu.memory_space<vmem>>, vector<1x128x640xbf16>
    %180 = vector.shape_cast %179 : vector<1x128x640xbf16> to vector<128x640xbf16>
    %cst_62 = arith.constant dense<0.000000e+00> : vector<16x640xf32>
    %181 = tpu.matmul %178, %180, %cst_62 {dimension_numbers = #tpu.dot_dimension_numbers<[1], [0], [0], [1], [0, 0, 1, 1], [], []>} : vector<16x128xbf16>, vector<128x640xbf16>, vector<16x640xf32> -> vector<16x640xf32>
    %182 = vector.extract_strided_slice %181 {offsets = [0, 0], sizes = [16, 128], strides = [1, 1]} : vector<16x640xf32> to vector<16x128xf32>
    %183 = vector.extract_strided_slice %181 {offsets = [0, 128], sizes = [16, 128], strides = [1, 1]} : vector<16x640xf32> to vector<16x128xf32>
    %184 = vector.extract_strided_slice %181 {offsets = [0, 256], sizes = [16, 128], strides = [1, 1]} : vector<16x640xf32> to vector<16x128xf32>
    %185 = vector.extract_strided_slice %181 {offsets = [0, 384], sizes = [16, 128], strides = [1, 1]} : vector<16x640xf32> to vector<16x128xf32>
    %186 = vector.extract_strided_slice %181 {offsets = [0, 512], sizes = [16, 128], strides = [1, 1]} : vector<16x640xf32> to vector<16x128xf32>
    %187 = arith.mulf %182, %2 : vector<16x128xf32>
    %188 = arith.mulf %183, %3 : vector<16x128xf32>
    %189 = arith.addf %187, %188 : vector<16x128xf32>
    %190 = arith.mulf %184, %2 : vector<16x128xf32>
    %191 = arith.mulf %185, %3 : vector<16x128xf32>
    %192 = arith.addf %190, %191 : vector<16x128xf32>
    %193 = vector.extract_strided_slice %4 {offsets = [0, 0], sizes = [1, 128], strides = [1, 1]} : vector<4x128xf32> to vector<1x128xf32>
    %194 = vector.broadcast %193 : vector<1x128xf32> to vector<16x128xf32>
    %195 = arith.mulf %192, %194 : vector<16x128xf32>
    %196 = vector.extract_strided_slice %4 {offsets = [1, 0], sizes = [1, 128], strides = [1, 1]} : vector<4x128xf32> to vector<1x128xf32>
    %197 = vector.broadcast %196 : vector<1x128xf32> to vector<16x128xf32>
    %198 = arith.mulf %192, %197 : vector<16x128xf32>
    %199 = vector.extract_strided_slice %4 {offsets = [2, 0], sizes = [1, 128], strides = [1, 1]} : vector<4x128xf32> to vector<1x128xf32>
    %200 = vector.broadcast %199 : vector<1x128xf32> to vector<16x128xf32>
    %201 = arith.mulf %192, %200 : vector<16x128xf32>
    %202 = vector.extract_strided_slice %4 {offsets = [3, 0], sizes = [1, 128], strides = [1, 1]} : vector<4x128xf32> to vector<1x128xf32>
    %203 = vector.broadcast %202 : vector<1x128xf32> to vector<16x128xf32>
    %204 = arith.mulf %192, %203 : vector<16x128xf32>
    %205 = tpu.concatenate %195, %198, %201, %204 in 0 : vector<16x128xf32>, vector<16x128xf32>, vector<16x128xf32>, vector<16x128xf32> -> vector<64x128xf32>
    %206 = arith.truncf %205 : vector<64x128xf32> to vector<64x128xbf16>
    %207 = vector.extract_strided_slice %4 {offsets = [0, 0], sizes = [1, 128], strides = [1, 1]} : vector<4x128xf32> to vector<1x128xf32>
    %208 = vector.broadcast %207 : vector<1x128xf32> to vector<16x128xf32>
    %209 = arith.mulf %186, %208 : vector<16x128xf32>
    %210 = vector.extract_strided_slice %4 {offsets = [1, 0], sizes = [1, 128], strides = [1, 1]} : vector<4x128xf32> to vector<1x128xf32>
    %211 = vector.broadcast %210 : vector<1x128xf32> to vector<16x128xf32>
    %212 = arith.mulf %186, %211 : vector<16x128xf32>
    %213 = vector.extract_strided_slice %4 {offsets = [2, 0], sizes = [1, 128], strides = [1, 1]} : vector<4x128xf32> to vector<1x128xf32>
    %214 = vector.broadcast %213 : vector<1x128xf32> to vector<16x128xf32>
    %215 = arith.mulf %186, %214 : vector<16x128xf32>
    %216 = vector.extract_strided_slice %4 {offsets = [3, 0], sizes = [1, 128], strides = [1, 1]} : vector<4x128xf32> to vector<1x128xf32>
    %217 = vector.broadcast %216 : vector<1x128xf32> to vector<16x128xf32>
    %218 = arith.mulf %186, %217 : vector<16x128xf32>
    %219 = tpu.concatenate %209, %212, %215, %218 in 0 : vector<16x128xf32>, vector<16x128xf32>, vector<16x128xf32>, vector<16x128xf32> -> vector<64x128xf32>
    %220 = arith.truncf %219 : vector<64x128xf32> to vector<64x128xbf16>
    %221 = arith.truncf %189 : vector<16x128xf32> to vector<16x128xbf16>
    %cst_63 = arith.constant dense<0.000000e+00> : vector<16x64xf32>
    %222 = tpu.matmul %221, %206, %cst_63 {dimension_numbers = #tpu.dot_dimension_numbers<[1], [1], [0], [0], [0, 0, 1, 0], [], []>} : vector<16x128xbf16>, vector<64x128xbf16>, vector<16x64xf32> -> vector<16x64xf32>
    %cst_64 = arith.constant 0.176776692 : f32
    %223 = vector.broadcast %cst_64 : f32 to vector<16x64xf32>
    %224 = arith.mulf %222, %223 : vector<16x64xf32>
    %225 = arith.addf %224, %1 : vector<16x64xf32>
    %226 = vector.extract_strided_slice %225 {offsets = [0, 0], sizes = [16, 16], strides = [1, 1]} : vector<16x64xf32> to vector<16x16xf32>
    %cst_65 = arith.constant dense<0xFF800000> : vector<16xf32>
    %227 = vector.multi_reduction <maximumf>, %226, %cst_65 [1] : vector<16x16xf32> to vector<16xf32>
    %228 = vector.shape_cast %227 : vector<16xf32> to vector<16x1xf32>
    %229 = vector.broadcast %228 : vector<16x1xf32> to vector<16x16xf32>
    %230 = arith.subf %226, %229 : vector<16x16xf32>
    %231 = math.exp %230 : vector<16x16xf32>
    %cst_66 = arith.constant dense<0.000000e+00> : vector<16xf32>
    %232 = vector.multi_reduction <add>, %231, %cst_66 [1] : vector<16x16xf32> to vector<16xf32>
    %233 = vector.shape_cast %232 : vector<16xf32> to vector<16x1xf32>
    %234 = tpu.reciprocal %233 {approx = true} : vector<16x1xf32> -> vector<16x1xf32>
    %235 = vector.broadcast %234 : vector<16x1xf32> to vector<16x16xf32>
    %236 = arith.mulf %231, %235 : vector<16x16xf32>
    %237 = vector.extract_strided_slice %225 {offsets = [0, 16], sizes = [16, 16], strides = [1, 1]} : vector<16x64xf32> to vector<16x16xf32>
    %cst_67 = arith.constant dense<0xFF800000> : vector<16xf32>
    %238 = vector.multi_reduction <maximumf>, %237, %cst_67 [1] : vector<16x16xf32> to vector<16xf32>
    %239 = vector.shape_cast %238 : vector<16xf32> to vector<16x1xf32>
    %240 = vector.broadcast %239 : vector<16x1xf32> to vector<16x16xf32>
    %241 = arith.subf %237, %240 : vector<16x16xf32>
    %242 = math.exp %241 : vector<16x16xf32>
    %cst_68 = arith.constant dense<0.000000e+00> : vector<16xf32>
    %243 = vector.multi_reduction <add>, %242, %cst_68 [1] : vector<16x16xf32> to vector<16xf32>
    %244 = vector.shape_cast %243 : vector<16xf32> to vector<16x1xf32>
    %245 = tpu.reciprocal %244 {approx = true} : vector<16x1xf32> -> vector<16x1xf32>
    %246 = vector.broadcast %245 : vector<16x1xf32> to vector<16x16xf32>
    %247 = arith.mulf %242, %246 : vector<16x16xf32>
    %248 = vector.extract_strided_slice %225 {offsets = [0, 32], sizes = [16, 16], strides = [1, 1]} : vector<16x64xf32> to vector<16x16xf32>
    %cst_69 = arith.constant dense<0xFF800000> : vector<16xf32>
    %249 = vector.multi_reduction <maximumf>, %248, %cst_69 [1] : vector<16x16xf32> to vector<16xf32>
    %250 = vector.shape_cast %249 : vector<16xf32> to vector<16x1xf32>
    %251 = vector.broadcast %250 : vector<16x1xf32> to vector<16x16xf32>
    %252 = arith.subf %248, %251 : vector<16x16xf32>
    %253 = math.exp %252 : vector<16x16xf32>
    %cst_70 = arith.constant dense<0.000000e+00> : vector<16xf32>
    %254 = vector.multi_reduction <add>, %253, %cst_70 [1] : vector<16x16xf32> to vector<16xf32>
    %255 = vector.shape_cast %254 : vector<16xf32> to vector<16x1xf32>
    %256 = tpu.reciprocal %255 {approx = true} : vector<16x1xf32> -> vector<16x1xf32>
    %257 = vector.broadcast %256 : vector<16x1xf32> to vector<16x16xf32>
    %258 = arith.mulf %253, %257 : vector<16x16xf32>
    %259 = vector.extract_strided_slice %225 {offsets = [0, 48], sizes = [16, 16], strides = [1, 1]} : vector<16x64xf32> to vector<16x16xf32>
    %cst_71 = arith.constant dense<0xFF800000> : vector<16xf32>
    %260 = vector.multi_reduction <maximumf>, %259, %cst_71 [1] : vector<16x16xf32> to vector<16xf32>
    %261 = vector.shape_cast %260 : vector<16xf32> to vector<16x1xf32>
    %262 = vector.broadcast %261 : vector<16x1xf32> to vector<16x16xf32>
    %263 = arith.subf %259, %262 : vector<16x16xf32>
    %264 = math.exp %263 : vector<16x16xf32>
    %cst_72 = arith.constant dense<0.000000e+00> : vector<16xf32>
    %265 = vector.multi_reduction <add>, %264, %cst_72 [1] : vector<16x16xf32> to vector<16xf32>
    %266 = vector.shape_cast %265 : vector<16xf32> to vector<16x1xf32>
    %267 = tpu.reciprocal %266 {approx = true} : vector<16x1xf32> -> vector<16x1xf32>
    %268 = vector.broadcast %267 : vector<16x1xf32> to vector<16x16xf32>
    %269 = arith.mulf %264, %268 : vector<16x16xf32>
    %270 = tpu.concatenate %236, %247, %258, %269 in 1 : vector<16x16xf32>, vector<16x16xf32>, vector<16x16xf32>, vector<16x16xf32> -> vector<16x64xf32>
    %271 = arith.truncf %270 : vector<16x64xf32> to vector<16x64xbf16>
    %cst_73 = arith.constant dense<0.000000e+00> : vector<16x128xf32>
    %272 = tpu.matmul %271, %220, %cst_73 {dimension_numbers = #tpu.dot_dimension_numbers<[1], [0], [0], [1], [0, 0, 1, 1], [], []>} : vector<16x64xbf16>, vector<64x128xbf16>, vector<16x128xf32> -> vector<16x128xf32>
    %273 = arith.truncf %272 : vector<16x128xf32> to vector<16x128xbf16>
    %c1_74 = arith.constant 1 : index
    %c0_75 = arith.constant 0 : index
    %c0_76 = arith.constant 0 : index
    %274 = vector.load %arg7[%c1_74, %c0_75, %c0_76] : memref<2x128x128xbf16, #tpu.memory_space<vmem>>, vector<1x128x128xbf16>
    %275 = vector.shape_cast %274 : vector<1x128x128xbf16> to vector<128x128xbf16>
    %cst_77 = arith.constant dense<0.000000e+00> : vector<16x128xf32>
    %276 = tpu.matmul %273, %275, %cst_77 {dimension_numbers = #tpu.dot_dimension_numbers<[1], [0], [0], [1], [0, 0, 1, 1], [], []>} : vector<16x128xbf16>, vector<128x128xbf16>, vector<16x128xf32> -> vector<16x128xf32>
    %277 = arith.addf %161, %276 : vector<16x128xf32>
    %c1_78 = arith.constant 1 : index
    %c0_79 = arith.constant 0 : index
    %c0_80 = arith.constant 0 : index
    %278 = vector.load %arg8[%c1_78, %c0_79, %c0_80] : memref<2x1x128xf32, #tpu.memory_space<vmem>>, vector<1x1x128xf32>
    %279 = vector.shape_cast %278 : vector<1x1x128xf32> to vector<1x128xf32>
    %280 = arith.mulf %277, %277 : vector<16x128xf32>
    %cst_81 = arith.constant dense<0.000000e+00> : vector<16xf32>
    %281 = vector.multi_reduction <add>, %280, %cst_81 [1] : vector<16x128xf32> to vector<16xf32>
    %282 = vector.shape_cast %281 : vector<16xf32> to vector<16x1xf32>
    %cst_82 = arith.constant 1.280000e+02 : f32
    %283 = vector.broadcast %cst_82 : f32 to vector<16x1xf32>
    %284 = arith.divf %282, %283 : vector<16x1xf32>
    %cst_83 = arith.constant 9.99999997E-7 : f32
    %285 = vector.broadcast %cst_83 : f32 to vector<16x1xf32>
    %286 = arith.addf %284, %285 : vector<16x1xf32>
    %287 = math.rsqrt %286 : vector<16x1xf32>
    %288 = vector.broadcast %287 : vector<16x1xf32> to vector<16x128xf32>
    %289 = arith.mulf %277, %288 : vector<16x128xf32>
    %cst_84 = arith.constant 1.000000e+00 : f32
    %290 = vector.broadcast %cst_84 : f32 to vector<1x128xf32>
    %291 = arith.addf %290, %279 : vector<1x128xf32>
    %292 = vector.broadcast %291 : vector<1x128xf32> to vector<16x128xf32>
    %293 = arith.mulf %289, %292 : vector<16x128xf32>
    %294 = arith.truncf %293 : vector<16x128xf32> to vector<16x128xbf16>
    %c1_85 = arith.constant 1 : index
    %c0_86 = arith.constant 0 : index
    %c0_87 = arith.constant 0 : index
    %295 = vector.load %arg9[%c1_85, %c0_86, %c0_87] : memref<2x128x512xbf16, #tpu.memory_space<vmem>>, vector<1x128x512xbf16>
    %296 = vector.shape_cast %295 : vector<1x128x512xbf16> to vector<128x512xbf16>
    %cst_88 = arith.constant dense<0.000000e+00> : vector<16x512xf32>
    %297 = tpu.matmul %294, %296, %cst_88 {dimension_numbers = #tpu.dot_dimension_numbers<[1], [0], [0], [1], [0, 0, 1, 1], [], []>} : vector<16x128xbf16>, vector<128x512xbf16>, vector<16x512xf32> -> vector<16x512xf32>
    %298 = vector.extract_strided_slice %297 {offsets = [0, 0], sizes = [16, 256], strides = [1, 1]} : vector<16x512xf32> to vector<16x256xf32>
    %299 = vector.extract_strided_slice %297 {offsets = [0, 256], sizes = [16, 256], strides = [1, 1]} : vector<16x512xf32> to vector<16x256xf32>
    %300 = arith.mulf %298, %298 : vector<16x256xf32>
    %301 = arith.mulf %298, %300 : vector<16x256xf32>
    %cst_89 = arith.constant 4.471500e-02 : f32
    %302 = vector.broadcast %cst_89 : f32 to vector<16x256xf32>
    %303 = arith.mulf %302, %301 : vector<16x256xf32>
    %304 = arith.addf %298, %303 : vector<16x256xf32>
    %cst_90 = arith.constant 0.797884583 : f32
    %305 = vector.broadcast %cst_90 : f32 to vector<16x256xf32>
    %306 = arith.mulf %305, %304 : vector<16x256xf32>
    %307 = math.tanh %306 : vector<16x256xf32>
    %cst_91 = arith.constant 1.000000e+00 : f32
    %308 = vector.broadcast %cst_91 : f32 to vector<16x256xf32>
    %309 = arith.addf %308, %307 : vector<16x256xf32>
    %cst_92 = arith.constant 5.000000e-01 : f32
    %310 = vector.broadcast %cst_92 : f32 to vector<16x256xf32>
    %311 = arith.mulf %310, %309 : vector<16x256xf32>
    %312 = arith.mulf %298, %311 : vector<16x256xf32>
    %313 = arith.mulf %312, %299 : vector<16x256xf32>
    %314 = arith.truncf %313 : vector<16x256xf32> to vector<16x256xbf16>
    %c1_93 = arith.constant 1 : index
    %c0_94 = arith.constant 0 : index
    %c0_95 = arith.constant 0 : index
    %315 = vector.load %arg10[%c1_93, %c0_94, %c0_95] : memref<2x256x128xbf16, #tpu.memory_space<vmem>>, vector<1x256x128xbf16>
    %316 = vector.shape_cast %315 : vector<1x256x128xbf16> to vector<256x128xbf16>
    %cst_96 = arith.constant dense<0.000000e+00> : vector<16x128xf32>
    %317 = tpu.matmul %314, %316, %cst_96 {dimension_numbers = #tpu.dot_dimension_numbers<[1], [0], [0], [1], [0, 0, 1, 1], [], []>} : vector<16x256xbf16>, vector<256x128xbf16>, vector<16x128xf32> -> vector<16x128xf32>
    %318 = arith.addf %277, %317 : vector<16x128xf32>
    %c0_97 = arith.constant 0 : index
    %c0_98 = arith.constant 0 : index
    %319 = vector.load %arg11[%c0_97, %c0_98] : memref<1x128xf32, #tpu.memory_space<vmem>>, vector<1x128xf32>
    %320 = arith.mulf %318, %318 : vector<16x128xf32>
    %cst_99 = arith.constant dense<0.000000e+00> : vector<16xf32>
    %321 = vector.multi_reduction <add>, %320, %cst_99 [1] : vector<16x128xf32> to vector<16xf32>
    %322 = vector.shape_cast %321 : vector<16xf32> to vector<16x1xf32>
    %cst_100 = arith.constant 1.280000e+02 : f32
    %323 = vector.broadcast %cst_100 : f32 to vector<16x1xf32>
    %324 = arith.divf %322, %323 : vector<16x1xf32>
    %cst_101 = arith.constant 9.99999997E-7 : f32
    %325 = vector.broadcast %cst_101 : f32 to vector<16x1xf32>
    %326 = arith.addf %324, %325 : vector<16x1xf32>
    %327 = math.rsqrt %326 : vector<16x1xf32>
    %328 = vector.broadcast %327 : vector<16x1xf32> to vector<16x128xf32>
    %329 = arith.mulf %318, %328 : vector<16x128xf32>
    %cst_102 = arith.constant 1.000000e+00 : f32
    %330 = vector.broadcast %cst_102 : f32 to vector<1x128xf32>
    %331 = arith.addf %330, %319 : vector<1x128xf32>
    %332 = vector.broadcast %331 : vector<1x128xf32> to vector<16x128xf32>
    %333 = arith.mulf %329, %332 : vector<16x128xf32>
    %334 = arith.truncf %333 : vector<16x128xf32> to vector<16x128xbf16>
    %c0_103 = arith.constant 0 : index
    %c0_104 = arith.constant 0 : index
    %335 = vector.load %arg12[%c0_103, %c0_104] : memref<256x128xbf16, #tpu.memory_space<vmem>>, vector<256x128xbf16>
    %cst_105 = arith.constant dense<0.000000e+00> : vector<16x256xf32>
    %336 = tpu.matmul %334, %335, %cst_105 {dimension_numbers = #tpu.dot_dimension_numbers<[1], [1], [0], [0], [0, 0, 1, 0], [], []>} : vector<16x128xbf16>, vector<256x128xbf16>, vector<16x256xf32> -> vector<16x256xf32>
    %c0_106 = arith.constant 0 : index
    %c0_107 = arith.constant 0 : index
    %337 = vector.load %arg14[%c0_106, %c0_107] : memref<16x256xf32, #tpu.memory_space<vmem>>, vector<16x256xf32>
    tpu.vector_store %arg14[%c0_106, %c0_107], %336 {strides = array<i32>} : memref<16x256xf32, #tpu.memory_space<vmem>>, vector<16x256xf32>,
    %c0_108 = arith.constant 0 : index
    %c0_109 = arith.constant 0 : index
    %338 = vector.load %arg13[%c0_108, %c0_109] : memref<16x1xi32, #tpu.memory_space<vmem>>, vector<16x1xi32>
    %cst_110 = arith.constant dense<0xFF800000> : vector<16xf32>
    %339 = vector.multi_reduction <maximumf>, %336, %cst_110 [1] : vector<16x256xf32> to vector<16xf32>
    %340 = vector.shape_cast %339 : vector<16xf32> to vector<16x1xf32>
    %341 = vector.broadcast %340 : vector<16x1xf32> to vector<16x256xf32>
    %342 = arith.subf %336, %341 : vector<16x256xf32>
    %343 = math.exp %342 : vector<16x256xf32>
    %cst_111 = arith.constant dense<0.000000e+00> : vector<16xf32>
    %344 = vector.multi_reduction <add>, %343, %cst_111 [1] : vector<16x256xf32> to vector<16xf32>
    %345 = vector.shape_cast %344 : vector<16xf32> to vector<16x1xf32>
    %346 = math.log %345 : vector<16x1xf32>
    %347 = arith.addf %346, %340 : vector<16x1xf32>
    %348 = tpu.iota {dimensions = array<i32: 1>} : vector<16x256xi32>
    %349 = vector.broadcast %338 : vector<16x1xi32> to vector<16x256xi32>
    %350 = arith.cmpi eq, %348, %349 : vector<16x256xi32>
    %cst_112 = arith.constant 0.000000e+00 : f32
    %351 = vector.broadcast %cst_112 : f32 to vector<16x256xf32>
    %352 = arith.select %350, %336, %351 : vector<16x256xi1>, vector<16x256xf32>
    %cst_113 = arith.constant dense<0.000000e+00> : vector<16xf32>
    %353 = vector.multi_reduction <add>, %352, %cst_113 [1] : vector<16x256xf32> to vector<16xf32>
    %354 = vector.shape_cast %353 : vector<16xf32> to vector<16x1xf32>
    %c0_i32 = arith.constant 0 : i32
    %355 = vector.broadcast %c0_i32 : i32 to vector<16x1xi32>
    %356 = arith.cmpi ne, %338, %355 : vector<16x1xi32>
    %357 = arith.extui %356 : vector<16x1xi1> to vector<16x1xi32>
    %358 = arith.sitofp %357 : vector<16x1xi32> to vector<16x1xf32>
    %359 = arith.subf %347, %354 : vector<16x1xf32>
    %360 = arith.mulf %359, %358 : vector<16x1xf32>
    %cst_114 = arith.constant dense<0.000000e+00> : vector<1xf32>
    %361 = vector.multi_reduction <add>, %360, %cst_114 [0] : vector<16x1xf32> to vector<1xf32>
    %362 = vector.shape_cast %361 : vector<1xf32> to vector<1x1xf32>
    %cst_115 = arith.constant dense<0.000000e+00> : vector<1xf32>
    %363 = vector.multi_reduction <add>, %358, %cst_115 [0] : vector<16x1xf32> to vector<1xf32>
    %364 = vector.shape_cast %363 : vector<1xf32> to vector<1x1xf32>
    %cst_116 = arith.constant 1.000000e+00 : f32
    %365 = vector.broadcast %cst_116 : f32 to vector<1x1xf32>
    %366 = arith.maximumf %364, %365 : vector<1x1xf32>
    %367 = arith.divf %362, %366 : vector<1x1xf32>
    %c0_117 = arith.constant 0 : index
    %c0_118 = arith.constant 0 : index
    %368 = vector.load %arg15[%c0_117, %c0_118] : memref<1x1xf32, #tpu.memory_space<vmem>>, vector<1x1xf32>
    tpu.vector_store %arg15[%c0_117, %c0_118], %367 {strides = array<i32>} : memref<1x1xf32, #tpu.memory_space<vmem>>, vector<1x1xf32>,
    return
  }
}

</mosaic_0001>

<llo_original>
// kernel: tile.18
$region0: #{tile.18}
  #allocation0 [shape = 's32[1]{0}', space=sflag, size = 0x4, scoped, tag = 'scoped memory for tile.18']
  %s0 = inlined_call_operand.vmem [shape: f32[8,32], index: 0, kind: input, shape index: {}]
  %s1 = inlined_call_operand.vmem [shape: f32[2,8,4,32], index: 1, kind: output, shape index: {}]
  // Predicated region
  $region2: #{tile.18} parent=0 // pred_check
    _
  $region3: #{tile.18} parent=0 // pred_check_branch
    %3 = sbr.rel (0) target = $region5
  $region4: #{tile.18} parent=0 // pred_region
    _
  $region5: #{tile.18} parent=0 // pred_fallthru
    _
  %v4 = vld [vmem:[%s0] ss:$0 sm:$0xff]
  %5 = vst [vmem:[%s1] sm:$0xf] %v4
  %s6 = scalar_lea.vmem %s1, 32
  %7 = vst [vmem:[%s6] sm:$0xf] %v4
  %s8 = scalar_lea.vmem %s0, 1
  %v9 = vld [vmem:[%s8] ss:$0 sm:$0xff]
  %s10 = scalar_lea.vmem %s1, 4
  %11 = vst [vmem:[%s10] sm:$0xf] %v9
  %s12 = scalar_lea.vmem %s1, 36
  %13 = vst [vmem:[%s12] sm:$0xf] %v9
  %s14 = scalar_lea.vmem %s0, 2
  %v15 = vld [vmem:[%s14] ss:$0 sm:$0xff]
  %s16 = scalar_lea.vmem %s1, 8
  %17 = vst [vmem:[%s16] sm:$0xf] %v15
  %s18 = scalar_lea.vmem %s1, 40
  %19 = vst [vmem:[%s18] sm:$0xf] %v15
  %s20 = scalar_lea.vmem %s0, 3
  %v21 = vld [vmem:[%s20] ss:$0 sm:$0xff]
  %s22 = scalar_lea.vmem %s1, 12
  %23 = vst [vmem:[%s22] sm:$0xf] %v21
  %s24 = scalar_lea.vmem %s1, 44
  %25 = vst [vmem:[%s24] sm:$0xf] %v21
  %s26 = scalar_lea.vmem %s0, 4
  %v27 = vld [vmem:[%s26] ss:$0 sm:$0xff]
  %s28 = scalar_lea.vmem %s1, 16
  %29 = vst [vmem:[%s28] sm:$0xf] %v27
  %s30 = scalar_lea.vmem %s1, 48
  %31 = vst [vmem:[%s30] sm:$0xf] %v27
  %s32 = scalar_lea.vmem %s0, 5
  %v33 = vld [vmem:[%s32] ss:$0 sm:$0xff]
  %s34 = scalar_lea.vmem %s1, 20
  %35 = vst [vmem:[%s34] sm:$0xf] %v33
  %s36 = scalar_lea.vmem %s1, 52
  %37 = vst [vmem:[%s36] sm:$0xf] %v33
  %s38 = scalar_lea.vmem %s0, 6
  %v39 = vld [vmem:[%s38] ss:$0 sm:$0xff]
  %s40 = scalar_lea.vmem %s1, 24
  %41 = vst [vmem:[%s40] sm:$0xf] %v39
  %s42 = scalar_lea.vmem %s1, 56
  %43 = vst [vmem:[%s42] sm:$0xf] %v39
  %s44 = scalar_lea.vmem %s0, 7
  %v45 = vld [vmem:[%s44] ss:$0 sm:$0xff]
  %s46 = scalar_lea.vmem %s1, 28
  %47 = vst [vmem:[%s46] sm:$0xf] %v45
  %s48 = scalar_lea.vmem %s1, 60
  %49 = vst [vmem:[%s48] sm:$0xf] %v45

// kernel: tile.19
$region0: #{tile.19}
  %s0 = inlined_call_operand.vmem [shape: f32[2,8,4,32], index: 0, kind: input, shape index: {}]
  %s1 = inlined_call_operand.vmem [shape: f32[16,128], index: 1, kind: output, shape index: {}]
  $region1: #{tile.19} parent=0
    #allocation0 [shape = 'u8[65536]{0}', space=vmem, size = 0x10000, scoped, tag = 'scoped mem for input reshape']
    %s3 = sshllo.u32 0, 4
    %s4 = smul.addr 4, 15
    %s5 = scalar_lea.vmem %s0, %s4
    %v6 = vld [vmem:[%s5] sm:%s3]
    %s7 = scalar_lea.vmem [#allocation0], 120
    %8 = vst [vmem:[%s7] sm:%s3] %v6
    %s9 = smul.addr 4, 14
    %s10 = scalar_lea.vmem %s0, %s9
    %v11 = vld [vmem:[%s10] sm:%s3]
    %s12 = scalar_lea.vmem [#allocation0], 112
    %13 = vst [vmem:[%s12] sm:%s3] %v11
    %s14 = smul.addr 4, 13
    %s15 = scalar_lea.vmem %s0, %s14
    %v16 = vld [vmem:[%s15] sm:%s3]
    %s17 = scalar_lea.vmem [#allocation0], 104
    %18 = vst [vmem:[%s17] sm:%s3] %v16
    %s19 = smul.addr 4, 12
    %s20 = scalar_lea.vmem %s0, %s19
    %v21 = vld [vmem:[%s20] sm:%s3]
    %s22 = scalar_lea.vmem [#allocation0], 96
    %23 = vst [vmem:[%s22] sm:%s3] %v21
    %s24 = smul.addr 4, 11
    %s25 = scalar_lea.vmem %s0, %s24
    %v26 = vld [vmem:[%s25] sm:%s3]
    %s27 = scalar_lea.vmem [#allocation0], 88
    %28 = vst [vmem:[%s27] sm:%s3] %v26
    %s29 = smul.addr 4, 10
    %s30 = scalar_lea.vmem %s0, %s29
    %v31 = vld [vmem:[%s30] sm:%s3]
    %s32 = scalar_lea.vmem [#allocation0], 80
    %33 = vst [vmem:[%s32] sm:%s3] %v31
    %s34 = smul.addr 4, 9
    %s35 = scalar_lea.vmem %s0, %s34
    %v36 = vld [vmem:[%s35] sm:%s3]
    %s37 = scalar_lea.vmem [#allocation0], 72
    %38 = vst [vmem:[%s37] sm:%s3] %v36
    %s39 = smul.addr 4, 8
    %s40 = scalar_lea.vmem %s0, %s39
    %v41 = vld [vmem:[%s40] sm:%s3]
    %s42 = scalar_lea.vmem [#allocation0], 64
    %43 = vst [vmem:[%s42] sm:%s3] %v41
    %s44 = smul.addr 4, 7
    %s45 = scalar_lea.vmem %s0, %s44
    %v46 = vld [vmem:[%s45] sm:%s3]
    %s47 = scalar_lea.vmem [#allocation0], 56
    %48 = vst [vmem:[%s47] sm:%s3] %v46
    %s49 = smul.addr 4, 6
    %s50 = scalar_lea.vmem %s0, %s49
    %v51 = vld [vmem:[%s50] sm:%s3]
    %s52 = scalar_lea.vmem [#allocation0], 48
    %53 = vst [vmem:[%s52] sm:%s3] %v51
    %s54 = smul.addr 4, 5
    %s55 = scalar_lea.vmem %s0, %s54
    %v56 = vld [vmem:[%s55] sm:%s3]
    %s57 = scalar_lea.vmem [#allocation0], 40
    %58 = vst [vmem:[%s57] sm:%s3] %v56
    %s59 = smul.addr 4, 4
    %s60 = scalar_lea.vmem %s0, %s59
    %v61 = vld [vmem:[%s60] sm:%s3]
    %s62 = scalar_lea.vmem [#allocation0], 32
    %63 = vst [vmem:[%s62] sm:%s3] %v61
    %s64 = smul.addr 4, 3
    %s65 = scalar_lea.vmem %s0, %s64
    %v66 = vld [vmem:[%s65] sm:%s3]
    %s67 = scalar_lea.vmem [#allocation0], 24
    %68 = vst [vmem:[%s67] sm:%s3] %v66
    %s69 = smul.addr 4, 2
    %s70 = scalar_lea.vmem %s0, %s69
    %v71 = vld [vmem:[%s70] sm:%s3]
    %s72 = scalar_lea.vmem [#allocation0], 16
    %73 = vst [vmem:[%s72] sm:%s3] %v71
    %s74 = scalar_lea.vmem %s0, 4
    %v75 = vld [vmem:[%s74] sm:%s3]
    %s76 = scalar_lea.vmem [#allocation0], 8
    %77 = vst [vmem:[%s76] sm:%s3] %v75
    %v78 = vld [vmem:[%s0] sm:%s3]
    %79 = vst [vmem:[#allocation0] sm:%s3] %v78
    %v80 = vld [vmem:[#allocation0] ss:$8 sm:$0xf]
    %v81 = vld [vmem:[#allocation0] ss:$8 sm:$0xf0]
    %vm82 = vcmask 1047556
    %v83 = vsel %vm82, %v81, %v80
    %vm84 = vcmask 261120
    %85 = vst.msk [vmem:[%s1] sm:$0xff] %vm84, %v83
    %s86 = scalar_lea.vmem [#allocation0], 64
    %v87 = vld [vmem:[%s86] ss:$8 sm:$0xf]
    %s88 = scalar_lea.vmem [#allocation0], 64
    %v89 = vld [vmem:[%s88] ss:$8 sm:$0xf0]
    %vm90 = vcmask 1047556
    %v91 = vsel %vm90, %v89, %v87
    %vm92 = vcmask 261120
    %s93 = scalar_lea.vmem %s1, 8
    %94 = vst.msk [vmem:[%s93] sm:$0xff] %vm92, %v91
    %s95 = scalar_lea.vmem [#allocation0], 3
    %v96 = vld [vmem:[%s95] ss:$8 sm:$0xf]
    %s97 = scalar_lea.vmem [#allocation0], 3
    %v98 = vld [vmem:[%s97] ss:$8 sm:$0xf0]
    %vm99 = vcmask 1047556
    %v100 = vsel %vm99, %v98, %v96
    %101 = vrot.lane.b32.xlu0 %v100, 96
    %v102 = vpop.permute.xlu0 %101
    %vm103 = vcmask 1048320
    %104 = vst.msk [vmem:[%s1] sm:$0xff] %vm103, %v102
    %s105 = scalar_lea.vmem [#allocation0], 67
    %v106 = vld [vmem:[%s105] ss:$8 sm:$0xf]
    %s107 = scalar_lea.vmem [#allocation0], 67
    %v108 = vld [vmem:[%s107] ss:$8 sm:$0xf0]
    %vm109 = vcmask 1047556
    %v110 = vsel %vm109, %v108, %v106
    %111 = vrot.lane.b32.xlu0 %v110, 96
    %v112 = vpop.permute.xlu0 %111
    %vm113 = vcmask 1048320
    %s114 = scalar_lea.vmem %s1, 8
    %115 = vst.msk [vmem:[%s114] sm:$0xff] %vm113, %v112
    %s116 = scalar_lea.vmem [#allocation0], 2
    %v117 = vld [vmem:[%s116] ss:$8 sm:$0xf]
    %s118 = scalar_lea.vmem [#allocation0], 2
    %v119 = vld [vmem:[%s118] ss:$8 sm:$0xf0]
    %vm120 = vcmask 1047556
    %v121 = vsel %vm120, %v119, %v117
    %122 = vrot.lane.b32.xlu0 %v121, 64
    %v123 = vpop.permute.xlu0 %122
    %vm124 = vcmask 785920
    %125 = vst.msk [vmem:[%s1] sm:$0xff] %vm124, %v123
    %s126 = scalar_lea.vmem [#allocation0], 66
    %v127 = vld [vmem:[%s126] ss:$8 sm:$0xf]
    %s128 = scalar_lea.vmem [#allocation0], 66
    %v129 = vld [vmem:[%s128] ss:$8 sm:$0xf0]
    %vm130 = vcmask 1047556
    %v131 = vsel %vm130, %v129, %v127
    %132 = vrot.lane.b32.xlu0 %v131, 64
    %v133 = vpop.permute.xlu0 %132
    %vm134 = vcmask 785920
    %s135 = scalar_lea.vmem %s1, 8
    %136 = vst.msk [vmem:[%s135] sm:$0xff] %vm134, %v133
    %s137 = scalar_lea.vmem [#allocation0], 1
    %v138 = vld [vmem:[%s137] ss:$8 sm:$0xf]
    %s139 = scalar_lea.vmem [#allocation0], 1
    %v140 = vld [vmem:[%s139] ss:$8 sm:$0xf0]
    %vm141 = vcmask 1047556
    %v142 = vsel %vm141, %v140, %v138
    %143 = vrot.lane.b32.xlu0 %v142, 32
    %v144 = vpop.permute.xlu0 %143
    %vm145 = vcmask 523520
    %146 = vst.msk [vmem:[%s1] sm:$0xff] %vm145, %v144
    %s147 = scalar_lea.vmem [#allocation0], 65
    %v148 = vld [vmem:[%s147] ss:$8 sm:$0xf]
    %s149 = scalar_lea.vmem [#allocation0], 65
    %v150 = vld [vmem:[%s149] ss:$8 sm:$0xf0]
    %vm151 = vcmask 1047556
    %v152 = vsel %vm151, %v150, %v148
    %153 = vrot.lane.b32.xlu0 %v152, 32
    %v154 = vpop.permute.xlu0 %153
    %vm155 = vcmask 523520
    %s156 = scalar_lea.vmem %s1, 8
    %157 = vst.msk [vmem:[%s156] sm:$0xff] %vm155, %v154

// kernel: tile.29
$region0: #{tile.29}
  %s0 = inlined_call_operand.vmem [shape: f32[16,4,16], index: 0, kind: input, shape index: {}]
  %s1 = inlined_call_operand.vmem [shape: f32[16,64], index: 1, kind: output, shape index: {}]
  $region1: #{tile.29} parent=0
    #allocation0 [shape = 'u8[65536]{0}', space=vmem, size = 0x10000, scoped, tag = 'scoped mem for input reshape']
    %s3 = sshllo.u32 0, 4
    %s4 = smul.addr 4, 15
    %s5 = scalar_lea.vmem %s0, %s4
    %v6 = vld [vmem:[%s5] sm:%s3]
    %s7 = scalar_lea.vmem [#allocation0], 120
    %8 = vst [vmem:[%s7] sm:%s3] %v6
    %s9 = smul.addr 4, 14
    %s10 = scalar_lea.vmem %s0, %s9
    %v11 = vld [vmem:[%s10] sm:%s3]
    %s12 = scalar_lea.vmem [#allocation0], 112
    %13 = vst [vmem:[%s12] sm:%s3] %v11
    %s14 = smul.addr 4, 13
    %s15 = scalar_lea.vmem %s0, %s14
    %v16 = vld [vmem:[%s15] sm:%s3]
    %s17 = scalar_lea.vmem [#allocation0], 104
    %18 = vst [vmem:[%s17] sm:%s3] %v16
    %s19 = smul.addr 4, 12
    %s20 = scalar_lea.vmem %s0, %s19
    %v21 = vld [vmem:[%s20] sm:%s3]
    %s22 = scalar_lea.vmem [#allocation0], 96
    %23 = vst [vmem:[%s22] sm:%s3] %v21
    %s24 = smul.addr 4, 11
    %s25 = scalar_lea.vmem %s0, %s24
    %v26 = vld [vmem:[%s25] sm:%s3]
    %s27 = scalar_lea.vmem [#allocation0], 88
    %28 = vst [vmem:[%s27] sm:%s3] %v26
    %s29 = smul.addr 4, 10
    %s30 = scalar_lea.vmem %s0, %s29
    %v31 = vld [vmem:[%s30] sm:%s3]
    %s32 = scalar_lea.vmem [#allocation0], 80
    %33 = vst [vmem:[%s32] sm:%s3] %v31
    %s34 = smul.addr 4, 9
    %s35 = scalar_lea.vmem %s0, %s34
    %v36 = vld [vmem:[%s35] sm:%s3]
    %s37 = scalar_lea.vmem [#allocation0], 72
    %38 = vst [vmem:[%s37] sm:%s3] %v36
    %s39 = smul.addr 4, 8
    %s40 = scalar_lea.vmem %s0, %s39
    %v41 = vld [vmem:[%s40] sm:%s3]
    %s42 = scalar_lea.vmem [#allocation0], 64
    %43 = vst [vmem:[%s42] sm:%s3] %v41
    %s44 = smul.addr 4, 7
    %s45 = scalar_lea.vmem %s0, %s44
    %v46 = vld [vmem:[%s45] sm:%s3]
    %s47 = scalar_lea.vmem [#allocation0], 56
    %48 = vst [vmem:[%s47] sm:%s3] %v46
    %s49 = smul.addr 4, 6
    %s50 = scalar_lea.vmem %s0, %s49
    %v51 = vld [vmem:[%s50] sm:%s3]
    %s52 = scalar_lea.vmem [#allocation0], 48
    %53 = vst [vmem:[%s52] sm:%s3] %v51
    %s54 = smul.addr 4, 5
    %s55 = scalar_lea.vmem %s0, %s54
    %v56 = vld [vmem:[%s55] sm:%s3]
    %s57 = scalar_lea.vmem [#allocation0], 40
    %58 = vst [vmem:[%s57] sm:%s3] %v56
    %s59 = smul.addr 4, 4
    %s60 = scalar_lea.vmem %s0, %s59
    %v61 = vld [vmem:[%s60] sm:%s3]
    %s62 = scalar_lea.vmem [#allocation0], 32
    %63 = vst [vmem:[%s62] sm:%s3] %v61
    %s64 = smul.addr 4, 3
    %s65 = scalar_lea.vmem %s0, %s64
    %v66 = vld [vmem:[%s65] sm:%s3]
    %s67 = scalar_lea.vmem [#allocation0], 24
    %68 = vst [vmem:[%s67] sm:%s3] %v66
    %s69 = smul.addr 4, 2
    %s70 = scalar_lea.vmem %s0, %s69
    %v71 = vld [vmem:[%s70] sm:%s3]
    %s72 = scalar_lea.vmem [#allocation0], 16
    %73 = vst [vmem:[%s72] sm:%s3] %v71
    %s74 = scalar_lea.vmem %s0, 4
    %v75 = vld [vmem:[%s74] sm:%s3]
    %s76 = scalar_lea.vmem [#allocation0], 8
    %77 = vst [vmem:[%s76] sm:%s3] %v75
    %v78 = vld [vmem:[%s0] sm:%s3]
    %79 = vst [vmem:[#allocation0] sm:%s3] %v78
    %v80 = vld [vmem:[#allocation0] ss:$8 sm:$0xf]
    %v81 = vld [vmem:[#allocation0] ss:$8 sm:$0xf0]
    %vm82 = vcmask 1047556
    %v83 = vsel %vm82, %v81, %v80
    %vm84 = vcmask 130048
    %85 = vst.msk [vmem:[%s1] sm:$0xff] %vm84, %v83
    %s86 = scalar_lea.vmem [#allocation0], 64
    %v87 = vld [vmem:[%s86] ss:$8 sm:$0xf]
    %s88 = scalar_lea.vmem [#allocation0], 64
    %v89 = vld [vmem:[%s88] ss:$8 sm:$0xf0]
    %vm90 = vcmask 1047556
    %v91 = vsel %vm90, %v89, %v87
    %vm92 = vcmask 130048
    %s93 = scalar_lea.vmem %s1, 8
    %94 = vst.msk [vmem:[%s93] sm:$0xff] %vm92, %v91
    %s95 = scalar_lea.vmem [#allocation0], 3
    %v96 = vld [vmem:[%s95] ss:$8 sm:$0xf]
    %s97 = scalar_lea.vmem [#allocation0], 3
    %v98 = vld [vmem:[%s97] ss:$8 sm:$0xf0]
    %vm99 = vcmask 1047556
    %v100 = vsel %vm99, %v98, %v96
    %101 = vrot.lane.b32.xlu0 %v100, 48
    %v102 = vpop.permute.xlu0 %101
    %vm103 = vcmask 523648
    %104 = vst.msk [vmem:[%s1] sm:$0xff] %vm103, %v102
    %s105 = scalar_lea.vmem [#allocation0], 67
    %v106 = vld [vmem:[%s105] ss:$8 sm:$0xf]
    %s107 = scalar_lea.vmem [#allocation0], 67
    %v108 = vld [vmem:[%s107] ss:$8 sm:$0xf0]
    %vm109 = vcmask 1047556
    %v110 = vsel %vm109, %v108, %v106
    %111 = vrot.lane.b32.xlu0 %v110, 48
    %v112 = vpop.permute.xlu0 %111
    %vm113 = vcmask 523648
    %s114 = scalar_lea.vmem %s1, 8
    %115 = vst.msk [vmem:[%s114] sm:$0xff] %vm113, %v112
    %s116 = scalar_lea.vmem [#allocation0], 2
    %v117 = vld [vmem:[%s116] ss:$8 sm:$0xf]
    %s118 = scalar_lea.vmem [#allocation0], 2
    %v119 = vld [vmem:[%s118] ss:$8 sm:$0xf0]
    %vm120 = vcmask 1047556
    %v121 = vsel %vm120, %v119, %v117
    %122 = vrot.lane.b32.xlu0 %v121, 32
    %v123 = vpop.permute.xlu0 %122
    %vm124 = vcmask 392448
    %125 = vst.msk [vmem:[%s1] sm:$0xff] %vm124, %v123
    %s126 = scalar_lea.vmem [#allocation0], 66
    %v127 = vld [vmem:[%s126] ss:$8 sm:$0xf]
    %s128 = scalar_lea.vmem [#allocation0], 66
    %v129 = vld [vmem:[%s128] ss:$8 sm:$0xf0]
    %vm130 = vcmask 1047556
    %v131 = vsel %vm130, %v129, %v127
    %132 = vrot.lane.b32.xlu0 %v131, 32
    %v133 = vpop.permute.xlu0 %132
    %vm134 = vcmask 392448
    %s135 = scalar_lea.vmem %s1, 8
    %136 = vst.msk [vmem:[%s135] sm:$0xff] %vm134, %v133
    %s137 = scalar_lea.vmem [#allocation0], 1
    %v138 = vld [vmem:[%s137] ss:$8 sm:$0xf]
    %s139 = scalar_lea.vmem [#allocation0], 1
    %v140 = vld [vmem:[%s139] ss:$8 sm:$0xf0]
    %vm141 = vcmask 1047556
    %v142 = vsel %vm141, %v140, %v138
    %143 = vrot.lane.b32.xlu0 %v142, 16
    %v144 = vpop.permute.xlu0 %143
    %vm145 = vcmask 261248
    %146 = vst.msk [vmem:[%s1] sm:$0xff] %vm145, %v144
    %s147 = scalar_lea.vmem [#allocation0], 65
    %v148 = vld [vmem:[%s147] ss:$8 sm:$0xf]
    %s149 = scalar_lea.vmem [#allocation0], 65
    %v150 = vld [vmem:[%s149] ss:$8 sm:$0xf0]
    %vm151 = vcmask 1047556
    %v152 = vsel %vm151, %v150, %v148
    %153 = vrot.lane.b32.xlu0 %v152, 16
    %v154 = vpop.permute.xlu0 %153
    %vm155 = vcmask 261248
    %s156 = scalar_lea.vmem %s1, 8
    %157 = vst.msk [vmem:[%s156] sm:$0xff] %vm155, %v154

// kernel: gemma_forward.1
$region0: #{gemma_forward.1}
  #allocation0 [shape = 'u32[]', space=smem, size = 0x4, offset = 0x4, fixed_abs, tag = 'smem constant byte address 0x4 - core index']
  #allocation1 [shape = 'u32[144,128]{1,0:T(1,128)}', space=vmem, size = 0x12000, scoped, tag = 'internal scratch']
  %s0 = inlined_call_operand.vmem [shape: f32[16,128], index: 0, kind: input, shape index: {}]
  %s1 = inlined_call_operand.vmem [shape: f32[16,64], index: 1, kind: input, shape index: {}]
  %s2 = inlined_call_operand.vmem [shape: f32[16,128], index: 2, kind: input, shape index: {}]
  %s3 = inlined_call_operand.vmem [shape: f32[16,128], index: 3, kind: input, shape index: {}]
  %s4 = inlined_call_operand.vmem [shape: f32[4,128], index: 4, kind: input, shape index: {}]
  %s5 = inlined_call_operand.vmem [shape: f32[2,1,128], index: 5, kind: input, shape index: {}]
  %s6 = inlined_call_operand.vmem [shape: bf16[2,128,640], index: 6, kind: input, shape index: {}]
  %s7 = inlined_call_operand.vmem [shape: bf16[2,128,128], index: 7, kind: input, shape index: {}]
  %s8 = inlined_call_operand.vmem [shape: f32[2,1,128], index: 8, kind: input, shape index: {}]
  %s9 = inlined_call_operand.hbm [shape: bf16[2,128,512], index: 9, kind: input, shape index: {}]
  %s10 = inlined_call_operand.hbm [shape: bf16[2,256,128], index: 10, kind: input, shape index: {}]
  %s11 = inlined_call_operand.vmem [shape: f32[1,128], index: 11, kind: input, shape index: {}]
  %s12 = inlined_call_operand.hbm [shape: bf16[256,128], index: 12, kind: input, shape index: {}]
  %s13 = inlined_call_operand.vmem [shape: s32[16,1], index: 13, kind: input, shape index: {}]
  %s14 = inlined_call_operand.hbm [shape: f32[16,256], index: 14, kind: output, shape index: {0}]
  %s15 = inlined_call_operand.hbm [shape: f32[1,1], index: 15, kind: output, shape index: {1}]
  %16 = xla_tuple %s14, %s15
  %s17 = sld [smem:[#allocation0]]
  $region86: #{gemma_forward.1} parent=0
    _
  %s19 = ssub.s32 1, %s17
  %s20 = scalar_select 0, %s19, %s17
  $region1: #{gemma_forward.1} parent=0
    #allocation2 [shape = 'u8[262144]{0}', space=vmem, size = 0x40000, scoped, tag = 'input window, operand 9, single buffered']
    #allocation3 [shape = 's32[1]{0}', space=sflag, size = 0x4, scoped, tag = 'scoped memory for gemma_forward.1']
    #allocation4 [shape = 's32[1]{0}', space=sflag, size = 0x4, scoped, tag = 'scoped memory for gemma_forward.1']
    #allocation5 [shape = 'u8[131072]{0}', space=vmem, size = 0x20000, scoped, tag = 'input window, operand 10, single buffered']
    #allocation6 [shape = 's32[1]{0}', space=sflag, size = 0x4, scoped, tag = 'scoped memory for gemma_forward.1']
    #allocation7 [shape = 'u8[65536]{0}', space=vmem, size = 0x10000, scoped, tag = 'input window, operand 12, single buffered']
    #allocation8 [shape = 'u8[16384]{0}', space=vmem, size = 0x4000, scoped, tag = 'output window, operand 0, single buffered']
    #allocation9 [shape = 'u8[512]{0}', space=vmem, size = 0x400, scoped, tag = 'output window, operand 1, single buffered']
    #allocation10 [shape = 's32[1]{0}', space=sflag, size = 0x4, scoped, tag = 'scoped memory for gemma_forward.1']
    %21 = vsyncpa [#allocation3], 0
    %22 = vsyncpa [#allocation6], 0
    %23 = vsyncpa [#allocation4], 0
    %24 = vsyncpa [#allocation10], 0
    // Predicated region
    $region2: #{gemma_forward.1} parent=1 // pred_check
      _
    $region3: #{gemma_forward.1} parent=1 // pred_check_branch
      %26 = sbr.rel (0) target = $region5
    $region4: #{gemma_forward.1} parent=1 // pred_region
      _
    $region5: #{gemma_forward.1} parent=1 // pred_fallthru
      _
    // Predicated region
    $region6: #{gemma_forward.1} parent=1 // pred_check
      _
    $region7: #{gemma_forward.1} parent=1 // pred_check_branch
      %28 = sbr.rel (0) target = $region9
    $region8: #{gemma_forward.1} parent=1 // pred_region
      _
    $region9: #{gemma_forward.1} parent=1 // pred_fallthru
      _
    // Predicated region
    $region10: #{gemma_forward.1} parent=1 // pred_check
      _
    $region11: #{gemma_forward.1} parent=1 // pred_check_branch
      %30 = sbr.rel (0) target = $region13
    $region12: #{gemma_forward.1} parent=1 // pred_region
      _
    $region13: #{gemma_forward.1} parent=1 // pred_fallthru
      _
    // Predicated region
    $region14: #{gemma_forward.1} parent=1 // pred_check
      _
    $region15: #{gemma_forward.1} parent=1 // pred_check_branch
      %32 = sbr.rel (0) target = $region17
    $region16: #{gemma_forward.1} parent=1 // pred_region
      _
    $region17: #{gemma_forward.1} parent=1 // pred_fallthru
      _
    // Predicated region
    $region18: #{gemma_forward.1} parent=1 // pred_check
      _
    $region19: #{gemma_forward.1} parent=1 // pred_check_branch
      %34 = sbr.rel (0) target = $region21
    $region20: #{gemma_forward.1} parent=1 // pred_region
      _
    $region21: #{gemma_forward.1} parent=1 // pred_fallthru
      _
    // Predicated region
    $region22: #{gemma_forward.1} parent=1 // pred_check
      _
    $region23: #{gemma_forward.1} parent=1 // pred_check_branch
      %36 = sbr.rel (0) target = $region25
    $region24: #{gemma_forward.1} parent=1 // pred_region
      _
    $region25: #{gemma_forward.1} parent=1 // pred_fallthru
      _
    // Predicated region
    $region26: #{gemma_forward.1} parent=1 // pred_check
      _
    $region27: #{gemma_forward.1} parent=1 // pred_check_branch
      %38 = sbr.rel (0) target = $region29
    $region28: #{gemma_forward.1} parent=1 // pred_region
      _
    $region29: #{gemma_forward.1} parent=1 // pred_fallthru
      _
    // Predicated region
    $region30: #{gemma_forward.1} parent=1 // pred_check
      _
    $region31: #{gemma_forward.1} parent=1 // pred_check_branch
      %40 = sbr.rel (0) target = $region33
    $region32: #{gemma_forward.1} parent=1 // pred_region
      _
    $region33: #{gemma_forward.1} parent=1 // pred_fallthru
      _
    // Predicated region
    $region34: #{gemma_forward.1} parent=1 // pred_check
      _
    $region35: #{gemma_forward.1} parent=1 // pred_check_branch
      %42 = sbr.rel (0) target = $region37
    $region36: #{gemma_forward.1} parent=1 // pred_region
      _
    $region37: #{gemma_forward.1} parent=1 // pred_fallthru
      _
    // Predicated region
    $region38: #{gemma_forward.1} parent=1 // pred_check
      _
    $region39: #{gemma_forward.1} parent=1 // pred_check_branch
      %44 = sbr.rel (0) target = $region41
    $region40: #{gemma_forward.1} parent=1 // pred_region
      %s46 = ssub.s32 8192, 8192
      %47 = vsyncadd [#allocation3], %s46
      %s48 = sshll.u32 [#allocation2], 4
      %s49 = int_to_ptr.vmem [resolvable:$true] %s48
      %54 = dma.hbm_to_vmem [thread:$0]  %s9, 8192, %s49, [#allocation3], 256, 256, 16
    $region41: #{gemma_forward.1} parent=1 // pred_fallthru
      _
    // Predicated region
    $region42: #{gemma_forward.1} parent=1 // pred_check
      _
    $region43: #{gemma_forward.1} parent=1 // pred_check_branch
      %56 = sbr.rel (0) target = $region45
    $region44: #{gemma_forward.1} parent=1 // pred_region
      %s58 = ssub.s32 4096, 4096
      %59 = vsyncadd [#allocation6], %s58
      %s60 = sshll.u32 [#allocation5], 4
      %s61 = int_to_ptr.vmem [resolvable:$true] %s60
      %66 = dma.hbm_to_vmem [thread:$0]  %s10, 4096, %s61, [#allocation6], 64, 64, 4
    $region45: #{gemma_forward.1} parent=1 // pred_fallthru
      _
    // Predicated region
    $region46: #{gemma_forward.1} parent=1 // pred_check
      _
    $region47: #{gemma_forward.1} parent=1 // pred_check_branch
      %68 = sbr.rel (0) target = $region49
    $region48: #{gemma_forward.1} parent=1 // pred_region
      _
    $region49: #{gemma_forward.1} parent=1 // pred_fallthru
      _
    // Predicated region
    $region50: #{gemma_forward.1} parent=1 // pred_check
      _
    $region51: #{gemma_forward.1} parent=1 // pred_check_branch
      %70 = sbr.rel (0) target = $region53
    $region52: #{gemma_forward.1} parent=1 // pred_region
      %s72 = ssub.s32 2048, 2048
      %73 = vsyncadd [#allocation6], %s72
      %s74 = sshll.u32 [#allocation7], 4
      %s75 = int_to_ptr.vmem [resolvable:$true] %s74
      %80 = dma.hbm_to_vmem [thread:$0]  %s12, 2048, %s75, [#allocation6], 64, 64, 4
    $region53: #{gemma_forward.1} parent=1 // pred_fallthru
      _
    // Predicated region
    $region54: #{gemma_forward.1} parent=1 // pred_check
      _
    $region55: #{gemma_forward.1} parent=1 // pred_check_branch
      %82 = sbr.rel (0) target = $region57
    $region56: #{gemma_forward.1} parent=1 // pred_region
      _
    $region57: #{gemma_forward.1} parent=1 // pred_fallthru
      _
    // Predicated region
    $region58: #{gemma_forward.1} parent=1 // pred_check
      _
    $region59: #{gemma_forward.1} parent=1 // pred_check_branch
      %84 = sbr.rel (0) target = $region61
    $region60: #{gemma_forward.1} parent=1 // pred_region
      %85 = dma.done [#allocation3], 8192
    $region61: #{gemma_forward.1} parent=1 // pred_fallthru
      _
    // Predicated region
    $region62: #{gemma_forward.1} parent=1 // pred_check
      _
    $region63: #{gemma_forward.1} parent=1 // pred_check_branch
      %87 = sbr.rel (0) target = $region65
    $region64: #{gemma_forward.1} parent=1 // pred_region
      %88 = dma.done [#allocation6], 4096
    $region65: #{gemma_forward.1} parent=1 // pred_fallthru
      _
    // Predicated region
    $region66: #{gemma_forward.1} parent=1 // pred_check
      _
    $region67: #{gemma_forward.1} parent=1 // pred_check_branch
      %90 = sbr.rel (0) target = $region69
    $region68: #{gemma_forward.1} parent=1 // pred_region
      %91 = dma.done [#allocation6], 2048
    $region69: #{gemma_forward.1} parent=1 // pred_fallthru
      _
    %v93 = vld [vmem:[%s0] sm:$0xff]
    %v94 = vld [vmem:[%s0 + $0x8] sm:$0xff]
    %v95 = vld [vmem:[%s1] sm:$0xff]
    %v96 = vld [vmem:[%s1 + $0x8] sm:$0xff]
    %v97 = vld [vmem:[%s2] sm:$0xff]
    %v98 = vld [vmem:[%s2 + $0x8] sm:$0xff]
    %v99 = vld [vmem:[%s3] sm:$0xff]
    %v100 = vld [vmem:[%s3 + $0x8] sm:$0xff]
    %v101 = vld [vmem:[%s4] sm:$0xf]
    %v102 = vld [vmem:[%s5] sm:$0x1]
    %v103 = vmul.f32 %v93, %v93
    %v104 = vmul.f32 %v94, %v94
    %105 = vadd.xlane.f32.xlu0 %v103
    %v106 = vpop.xlane.xlu0 %105
    %107 = vadd.xlane.f32.xlu0 %v104
    %v108 = vpop.xlane.xlu0 %107
    %v109 = vrcp.pop 128.0
    %v110 = vmul.f32 %v106, %v109
    %v111 = vmul.f32 %v108, %v109
    %v112 = vadd.f32 %v110, 1e-06
    %v113 = vadd.f32 %v111, 1e-06
    %v114 = vrsqrt.pop %v112
    %v115 = vrsqrt.pop %v113
    %v116 = vmul.f32 %v93, %v114
    %v117 = vmul.f32 %v94, %v115
    %v118 = vadd.f32 %v102, 1.0
    %v120 = vlaneseq
    %v121 = vshrl.u32 %v120, 7
    %v122 = vsub.s32 0, %v121
    %v123 = vrot.slane %v118, %v122
    %v125 = vmul.f32 %v116, %v123
    %v126 = vmul.f32 %v117, %v123
    %v127 = vpack.c.bf16 %v126, %v125
    %v128 = vld [vmem:[%s6] sm:$0xff]
    %v129 = vld [vmem:[%s6 + $0x8] sm:$0xff]
    %v130 = vld [vmem:[%s6 + $0x10] sm:$0xf]
    %v131 = vld [vmem:[%s6 + $0x14] sm:$0xff]
    %v132 = vld [vmem:[%s6 + $0x1c] sm:$0xff]
    %v133 = vld [vmem:[%s6 + $0x24] sm:$0xf]
    %v134 = vld [vmem:[%s6 + $0x28] sm:$0xff]
    %v135 = vld [vmem:[%s6 + $0x30] sm:$0xff]
    %v136 = vld [vmem:[%s6 + $0x38] sm:$0xf]
    %v137 = vld [vmem:[%s6 + $0x3c] sm:$0xff]
    %v138 = vld [vmem:[%s6 + $0x44] sm:$0xff]
    %v139 = vld [vmem:[%s6 + $0x4c] sm:$0xf]
    %v140 = vld [vmem:[%s6 + $0x50] sm:$0xff]
    %v141 = vld [vmem:[%s6 + $0x58] sm:$0xff]
    %v142 = vld [vmem:[%s6 + $0x60] sm:$0xf]
    %v143 = vld [vmem:[%s6 + $0x64] sm:$0xff]
    %v144 = vld [vmem:[%s6 + $0x6c] sm:$0xff]
    %v145 = vld [vmem:[%s6 + $0x74] sm:$0xf]
    %v146 = vld [vmem:[%s6 + $0x78] sm:$0xff]
    %v147 = vld [vmem:[%s6 + $0x80] sm:$0xff]
    %v148 = vld [vmem:[%s6 + $0x88] sm:$0xf]
    %v149 = vld [vmem:[%s6 + $0x8c] sm:$0xff]
    %v150 = vld [vmem:[%s6 + $0x94] sm:$0xff]
    %v151 = vld [vmem:[%s6 + $0x9c] sm:$0xf]
    %v152 = vld [vmem:[%s6 + $0xa0] sm:$0xff]
    %v153 = vld [vmem:[%s6 + $0xa8] sm:$0xff]
    %v154 = vld [vmem:[%s6 + $0xb0] sm:$0xf]
    %v155 = vld [vmem:[%s6 + $0xb4] sm:$0xff]
    %v156 = vld [vmem:[%s6 + $0xbc] sm:$0xff]
    %v157 = vld [vmem:[%s6 + $0xc4] sm:$0xf]
    %v158 = vld [vmem:[%s6 + $0xc8] sm:$0xff]
    %v159 = vld [vmem:[%s6 + $0xd0] sm:$0xff]
    %v160 = vld [vmem:[%s6 + $0xd8] sm:$0xf]
    %v161 = vld [vmem:[%s6 + $0xdc] sm:$0xff]
    %v162 = vld [vmem:[%s6 + $0xe4] sm:$0xff]
    %v163 = vld [vmem:[%s6 + $0xec] sm:$0xf]
    %v164 = vld [vmem:[%s6 + $0xf0] sm:$0xff]
    %v165 = vld [vmem:[%s6 + $0xf8] sm:$0xff]
    %v166 = vld [vmem:[%s6 + $0x100] sm:$0xf]
    %v167 = vld [vmem:[%s6 + $0x104] sm:$0xff]
    %v168 = vld [vmem:[%s6 + $0x10c] sm:$0xff]
    %v169 = vld [vmem:[%s6 + $0x114] sm:$0xf]
    %v170 = vld [vmem:[%s6 + $0x118] sm:$0xff]
    %v171 = vld [vmem:[%s6 + $0x120] sm:$0xff]
    %v172 = vld [vmem:[%s6 + $0x128] sm:$0xf]
    %v173 = vld [vmem:[%s6 + $0x12c] sm:$0xff]
    %v174 = vld [vmem:[%s6 + $0x134] sm:$0xff]
    %v175 = vld [vmem:[%s6 + $0x13c] sm:$0xf]
    %v224 = vunpack.c.l.b16 %v128
    %v225 = vunpack.c.h.b16 %v128
    %v226 = vunpack.c.l.b16 %v129
    %v227 = vunpack.c.h.b16 %v129
    %v228 = vunpack.c.l.b16 %v130
    %v229 = vunpack.c.l.b16 %v131
    %v230 = vunpack.c.h.b16 %v131
    %v231 = vunpack.c.l.b16 %v132
    %v232 = vunpack.c.h.b16 %v132
    %v233 = vunpack.c.l.b16 %v133
    %v234 = vunpack.c.l.b16 %v134
    %v235 = vunpack.c.h.b16 %v134
    %v236 = vunpack.c.l.b16 %v135
    %v237 = vunpack.c.h.b16 %v135
    %v238 = vunpack.c.l.b16 %v136
    %v239 = vunpack.c.l.b16 %v137
    %v240 = vunpack.c.h.b16 %v137
    %v241 = vunpack.c.l.b16 %v138
    %v242 = vunpack.c.h.b16 %v138
    %v243 = vunpack.c.l.b16 %v139
    %v244 = vunpack.c.l.b16 %v140
    %v245 = vunpack.c.h.b16 %v140
    %v246 = vunpack.c.l.b16 %v141
    %v247 = vunpack.c.h.b16 %v141
    %v248 = vunpack.c.l.b16 %v142
    %v249 = vunpack.c.l.b16 %v143
    %v250 = vunpack.c.h.b16 %v143
    %v251 = vunpack.c.l.b16 %v144
    %v252 = vunpack.c.h.b16 %v144
    %v253 = vunpack.c.l.b16 %v145
    %v254 = vunpack.c.l.b16 %v146
    %v255 = vunpack.c.h.b16 %v146
    %v256 = vunpack.c.l.b16 %v147
    %v257 = vunpack.c.h.b16 %v147
    %v258 = vunpack.c.l.b16 %v148
    %v259 = vunpack.c.l.b16 %v149
    %v260 = vunpack.c.h.b16 %v149
    %v261 = vunpack.c.l.b16 %v150
    %v262 = vunpack.c.h.b16 %v150
    %v263 = vunpack.c.l.b16 %v151
    %v264 = vunpack.c.l.b16 %v152
    %v265 = vunpack.c.h.b16 %v152
    %v266 = vunpack.c.l.b16 %v153
    %v267 = vunpack.c.h.b16 %v153
    %v268 = vunpack.c.l.b16 %v154
    %v269 = vunpack.c.l.b16 %v155
    %v270 = vunpack.c.h.b16 %v155
    %v271 = vunpack.c.l.b16 %v156
    %v272 = vunpack.c.h.b16 %v156
    %v273 = vunpack.c.l.b16 %v157
    %v274 = vunpack.c.l.b16 %v158
    %v275 = vunpack.c.h.b16 %v158
    %v276 = vunpack.c.l.b16 %v159
    %v277 = vunpack.c.h.b16 %v159
    %v278 = vunpack.c.l.b16 %v160
    %v279 = vunpack.c.l.b16 %v161
    %v280 = vunpack.c.h.b16 %v161
    %v281 = vunpack.c.l.b16 %v162
    %v282 = vunpack.c.h.b16 %v162
    %v283 = vunpack.c.l.b16 %v163
    %v284 = vunpack.c.l.b16 %v164
    %v285 = vunpack.c.h.b16 %v164
    %v286 = vunpack.c.l.b16 %v165
    %v287 = vunpack.c.h.b16 %v165
    %v288 = vunpack.c.l.b16 %v166
    %v289 = vunpack.c.l.b16 %v167
    %v290 = vunpack.c.h.b16 %v167
    %v291 = vunpack.c.l.b16 %v168
    %v292 = vunpack.c.h.b16 %v168
    %v293 = vunpack.c.l.b16 %v169
    %v294 = vunpack.c.l.b16 %v170
    %v295 = vunpack.c.h.b16 %v170
    %v296 = vunpack.c.l.b16 %v171
    %v297 = vunpack.c.h.b16 %v171
    %v298 = vunpack.c.l.b16 %v172
    %v299 = vunpack.c.l.b16 %v173
    %v300 = vunpack.c.h.b16 %v173
    %v301 = vunpack.c.l.b16 %v174
    %v302 = vunpack.c.h.b16 %v174
    %v303 = vunpack.c.l.b16 %v175
    %v304 = vpack.c.b16 %v229, %v224
    %v305 = vpack.c.b16 %v230, %v225
    %v306 = vpack.c.b16 %v231, %v226
    %v307 = vpack.c.b16 %v232, %v227
    %v308 = vpack.c.b16 %v233, %v228
    %v309 = vpack.c.b16 %v239, %v234
    %v310 = vpack.c.b16 %v240, %v235
    %v311 = vpack.c.b16 %v241, %v236
    %v312 = vpack.c.b16 %v242, %v237
    %v313 = vpack.c.b16 %v243, %v238
    %v314 = vpack.c.b16 %v249, %v244
    %v315 = vpack.c.b16 %v250, %v245
    %v316 = vpack.c.b16 %v251, %v246
    %v317 = vpack.c.b16 %v252, %v247
    %v318 = vpack.c.b16 %v253, %v248
    %v319 = vpack.c.b16 %v259, %v254
    %v320 = vpack.c.b16 %v260, %v255
    %v321 = vpack.c.b16 %v261, %v256
    %v322 = vpack.c.b16 %v262, %v257
    %v323 = vpack.c.b16 %v263, %v258
    %v324 = vpack.c.b16 %v269, %v264
    %v325 = vpack.c.b16 %v270, %v265
    %v326 = vpack.c.b16 %v271, %v266
    %v327 = vpack.c.b16 %v272, %v267
    %v328 = vpack.c.b16 %v273, %v268
    %v329 = vpack.c.b16 %v279, %v274
    %v330 = vpack.c.b16 %v280, %v275
    %v331 = vpack.c.b16 %v281, %v276
    %v332 = vpack.c.b16 %v282, %v277
    %v333 = vpack.c.b16 %v283, %v278
    %v334 = vpack.c.b16 %v289, %v284
    %v335 = vpack.c.b16 %v290, %v285
    %v336 = vpack.c.b16 %v291, %v286
    %v337 = vpack.c.b16 %v292, %v287
    %v338 = vpack.c.b16 %v293, %v288
    %v339 = vpack.c.b16 %v299, %v294
    %v340 = vpack.c.b16 %v300, %v295
    %v341 = vpack.c.b16 %v301, %v296
    %v342 = vpack.c.b16 %v302, %v297
    %v343 = vpack.c.b16 %v303, %v298
    %384 = vmatprep.subr.bf16.mxu0 %v305
    %385 = vmatpush1.bf16.msra.mxu0 %v304
    %386 = vmatprep.subr.bf16.mxu0 %v310
    %387 = vmatpush1.bf16.msra.mxu0 %v309
    %388 = vmatprep.subr.bf16.mxu0 %v315
    %389 = vmatpush1.bf16.msra.mxu0 %v314
    %390 = vmatprep.subr.bf16.mxu0 %v320
    %391 = vmatpush1.bf16.msra.mxu0 %v319
    %392 = vmatprep.subr.bf16.mxu0 %v325
    %393 = vmatpush1.bf16.msra.mxu0 %v324
    %394 = vmatprep.subr.bf16.mxu0 %v330
    %395 = vmatpush1.bf16.msra.mxu0 %v329
    %396 = vmatprep.subr.bf16.mxu0 %v335
    %397 = vmatpush1.bf16.msra.mxu0 %v334
    %398 = vmatprep.subr.bf16.mxu0 %v340
    %399 = vmatpush1.bf16.msra.mxu0 %v339
    %400 = vmatprep.subr.bf16.mxu0 0
    %401 = vmatpush1.bf16.msra.mxu0 0
    %402 = vmatprep.subr.bf16.mxu0 0
    %403 = vmatpush1.bf16.msra.mxu0 0
    %404 = vmatprep.subr.bf16.mxu0 0
    %405 = vmatpush1.bf16.msra.mxu0 0
    %406 = vmatprep.subr.bf16.mxu0 0
    %407 = vmatpush1.bf16.msra.mxu0 0
    %408 = vmatprep.subr.bf16.mxu0 0
    %409 = vmatpush1.bf16.msra.mxu0 0
    %410 = vmatprep.subr.bf16.mxu0 0
    %411 = vmatpush1.bf16.msra.mxu0 0
    %412 = vmatprep.subr.bf16.mxu0 0
    %413 = vmatpush1.bf16.msra.mxu0 0
    %414 = vmatprep.subr.bf16.mxu0 0
    %415 = vmatpush1.bf16.msra.mxu0 0
    %416 = vmatprep.mubr.bf16.mxu0 0
    %417 = vmatmul.mubr.bf16.gmra.mrb[0].mxu0 %v127
    %v418 = vpop.f32.mrb[0].mxu0
    %v419 = vadd.f32 0.0, %v418
    %v420 = vpop.f32.mrb[0].mxu0
    %v421 = vadd.f32 0.0, %v420
    %v422 = vpop.f32.mrb[0].mxu0
    %v423 = vadd.f32 0.0, %v422
    %v424 = vpop.f32.mrb[0].mxu0
    %v425 = vadd.f32 0.0, %v424
    %426 = vdwg.mxu0
    %427 = vmatprep.subr.bf16.mxu0 %v307
    %428 = vmatpush1.bf16.msra.mxu0 %v306
    %429 = vmatprep.subr.bf16.mxu0 %v312
    %430 = vmatpush1.bf16.msra.mxu0 %v311
    %431 = vmatprep.subr.bf16.mxu0 %v317
    %432 = vmatpush1.bf16.msra.mxu0 %v316
    %433 = vmatprep.subr.bf16.mxu0 %v322
    %434 = vmatpush1.bf16.msra.mxu0 %v321
    %435 = vmatprep.subr.bf16.mxu0 %v327
    %436 = vmatpush1.bf16.msra.mxu0 %v326
    %437 = vmatprep.subr.bf16.mxu0 %v332
    %438 = vmatpush1.bf16.msra.mxu0 %v331
    %439 = vmatprep.subr.bf16.mxu0 %v337
    %440 = vmatpush1.bf16.msra.mxu0 %v336
    %441 = vmatprep.subr.bf16.mxu0 %v342
    %442 = vmatpush1.bf16.msra.mxu0 %v341
    %443 = vmatprep.subr.bf16.mxu0 0
    %444 = vmatpush1.bf16.msra.mxu0 0
    %445 = vmatprep.subr.bf16.mxu0 0
    %446 = vmatpush1.bf16.msra.mxu0 0
    %447 = vmatprep.subr.bf16.mxu0 0
    %448 = vmatpush1.bf16.msra.mxu0 0
    %449 = vmatprep.subr.bf16.mxu0 0
    %450 = vmatpush1.bf16.msra.mxu0 0
    %451 = vmatprep.subr.bf16.mxu0 0
    %452 = vmatpush1.bf16.msra.mxu0 0
    %453 = vmatprep.subr.bf16.mxu0 0
    %454 = vmatpush1.bf16.msra.mxu0 0
    %455 = vmatprep.subr.bf16.mxu0 0
    %456 = vmatpush1.bf16.msra.mxu0 0
    %457 = vmatprep.subr.bf16.mxu0 0
    %458 = vmatpush1.bf16.msra.mxu0 0
    %459 = vmatprep.mubr.bf16.mxu0 0
    %460 = vmatmul.mubr.bf16.gmra.mrb[0].mxu0 %v127
    %v461 = vpop.f32.mrb[0].mxu0
    %v462 = vadd.f32 0.0, %v461
    %v463 = vpop.f32.mrb[0].mxu0
    %v464 = vadd.f32 0.0, %v463
    %v465 = vpop.f32.mrb[0].mxu0
    %v466 = vadd.f32 0.0, %v465
    %v467 = vpop.f32.mrb[0].mxu0
    %v468 = vadd.f32 0.0, %v467
    %469 = vdwg.mxu0
    %470 = vmatprep.subr.bf16.mxu0 0
    %471 = vmatpush1.bf16.msra.mxu0 %v308
    %472 = vmatprep.subr.bf16.mxu0 0
    %473 = vmatpush1.bf16.msra.mxu0 %v313
    %474 = vmatprep.subr.bf16.mxu0 0
    %475 = vmatpush1.bf16.msra.mxu0 %v318
    %476 = vmatprep.subr.bf16.mxu0 0
    %477 = vmatpush1.bf16.msra.mxu0 %v323
    %478 = vmatprep.subr.bf16.mxu0 0
    %479 = vmatpush1.bf16.msra.mxu0 %v328
    %480 = vmatprep.subr.bf16.mxu0 0
    %481 = vmatpush1.bf16.msra.mxu0 %v333
    %482 = vmatprep.subr.bf16.mxu0 0
    %483 = vmatpush1.bf16.msra.mxu0 %v338
    %484 = vmatprep.subr.bf16.mxu0 0
    %485 = vmatpush1.bf16.msra.mxu0 %v343
    %486 = vmatprep.subr.bf16.mxu0 0
    %487 = vmatpush1.bf16.msra.mxu0 0
    %488 = vmatprep.subr.bf16.mxu0 0
    %489 = vmatpush1.bf16.msra.mxu0 0
    %490 = vmatprep.subr.bf16.mxu0 0
    %491 = vmatpush1.bf16.msra.mxu0 0
    %492 = vmatprep.subr.bf16.mxu0 0
    %493 = vmatpush1.bf16.msra.mxu0 0
    %494 = vmatprep.subr.bf16.mxu0 0
    %495 = vmatpush1.bf16.msra.mxu0 0
    %496 = vmatprep.subr.bf16.mxu0 0
    %497 = vmatpush1.bf16.msra.mxu0 0
    %498 = vmatprep.subr.bf16.mxu0 0
    %499 = vmatpush1.bf16.msra.mxu0 0
    %500 = vmatprep.subr.bf16.mxu0 0
    %501 = vmatpush1.bf16.msra.mxu0 0
    %502 = vmatprep.mubr.bf16.mxu0 0
    %503 = vmatmul.mubr.bf16.gmra.mrb[0].mxu0 %v127
    %v504 = vpop.f32.mrb[0].mxu0
    %v505 = vadd.f32 0.0, %v504
    %v506 = vpop.f32.mrb[0].mxu0
    %v507 = vpop.f32.mrb[0].mxu0
    %v508 = vadd.f32 0.0, %v507
    %v509 = vpop.f32.mrb[0].mxu0
    %510 = vdwg.mxu0
    %v511 = vmul.f32 %v419, %v97
    %v512 = vmul.f32 %v423, %v98
    %v513 = vmul.f32 %v421, %v99
    %v514 = vmul.f32 %v425, %v100
    %v515 = vadd.f32 %v511, %v513
    %v516 = vadd.f32 %v512, %v514
    %v517 = vmul.f32 %v462, %v97
    %v518 = vmul.f32 %v466, %v98
    %v519 = vmul.f32 %v464, %v99
    %v520 = vmul.f32 %v468, %v100
    %v521 = vadd.f32 %v517, %v519
    %v522 = vadd.f32 %v518, %v520
    %v523 = vlaneseq
    %v524 = vshrl.u32 %v523, 7
    %v525 = vsub.s32 0, %v524
    %v526 = vrot.slane %v101, %v525
    %v527 = vmul.f32 %v521, %v526
    %v528 = vmul.f32 %v522, %v526
    %v529 = vlaneseq
    %v530 = vshrl.u32 %v529, 7
    %v531 = vsub.s32 1, %v530
    %v532 = vrot.slane %v101, %v531
    %v533 = vmul.f32 %v521, %v532
    %v534 = vmul.f32 %v522, %v532
    %v535 = vlaneseq
    %v536 = vshrl.u32 %v535, 7
    %v537 = vsub.s32 2, %v536
    %v538 = vrot.slane %v101, %v537
    %v539 = vmul.f32 %v521, %v538
    %v540 = vmul.f32 %v522, %v538
    %v541 = vlaneseq
    %v542 = vshrl.u32 %v541, 7
    %v543 = vsub.s32 3, %v542
    %v544 = vrot.slane %v101, %v543
    %v545 = vmul.f32 %v521, %v544
    %v546 = vmul.f32 %v522, %v544
    %v547 = vpack.c.bf16 %v528, %v527
    %v548 = vpack.c.bf16 %v534, %v533
    %v549 = vpack.c.bf16 %v540, %v539
    %v550 = vpack.c.bf16 %v546, %v545
    %v551 = vmul.f32 %v505, %v526
    %v552 = vmul.f32 %v508, %v526
    %v553 = vmul.f32 %v505, %v532
    %v554 = vmul.f32 %v508, %v532
    %v555 = vmul.f32 %v505, %v538
    %v556 = vmul.f32 %v508, %v538
    %v557 = vmul.f32 %v505, %v544
    %v558 = vmul.f32 %v508, %v544
    %v559 = vpack.c.bf16 %v552, %v551
    %v560 = vpack.c.bf16 %v554, %v553
    %v561 = vpack.c.bf16 %v556, %v555
    %v562 = vpack.c.bf16 %v558, %v557
    %v563 = vpack.c.bf16 %v516, %v515
    %564 = vmatprep.subr.bf16.mxu0 0
    %565 = vmatpush1.bf16.xpose.msra.mxu0 %v547
    %566 = vmatprep.subr.bf16.mxu0 0
    %567 = vmatpush1.bf16.xpose.msra.mxu0 %v548
    %568 = vmatprep.subr.bf16.mxu0 0
    %569 = vmatpush1.bf16.xpose.msra.mxu0 %v549
    %570 = vmatprep.subr.bf16.mxu0 0
    %571 = vmatpush1.bf16.xpose.msra.mxu0 %v550
    %572 = vmatprep.subr.bf16.mxu0 0
    %573 = vmatpush1.bf16.xpose.msra.mxu0 0
    %574 = vmatprep.subr.bf16.mxu0 0
    %575 = vmatpush1.bf16.xpose.msra.mxu0 0
    %576 = vmatprep.subr.bf16.mxu0 0
    %577 = vmatpush1.bf16.xpose.msra.mxu0 0
    %578 = vmatprep.subr.bf16.mxu0 0
    %579 = vmatpush1.bf16.xpose.msra.mxu0 0
    %580 = vmatprep.subr.bf16.mxu0 0
    %581 = vmatpush1.bf16.xpose.msra.mxu0 0
    %582 = vmatprep.subr.bf16.mxu0 0
    %583 = vmatpush1.bf16.xpose.msra.mxu0 0
    %584 = vmatprep.subr.bf16.mxu0 0
    %585 = vmatpush1.bf16.xpose.msra.mxu0 0
    %586 = vmatprep.subr.bf16.mxu0 0
    %587 = vmatpush1.bf16.xpose.msra.mxu0 0
    %588 = vmatprep.subr.bf16.mxu0 0
    %589 = vmatpush1.bf16.xpose.msra.mxu0 0
    %590 = vmatprep.subr.bf16.mxu0 0
    %591 = vmatpush1.bf16.xpose.msra.mxu0 0
    %592 = vmatprep.subr.bf16.mxu0 0
    %593 = vmatpush1.bf16.xpose.msra.mxu0 0
    %594 = vmatprep.subr.bf16.mxu0 0
    %595 = vmatpush1.bf16.xpose.msra.mxu0 0
    %596 = vmatprep.mubr.bf16.mxu0 0
    %597 = vmatmul.mubr.bf16.gmra.mrb[0].mxu0 %v563
    %v598 = vpop.f32.mrb[0].mxu0
    %v599 = vadd.f32 0.0, %v598
    %v600 = vpop.f32.mrb[0].mxu0
    %v601 = vpop.f32.mrb[0].mxu0
    %v602 = vadd.f32 0.0, %v601
    %v603 = vpop.f32.mrb[0].mxu0
    %604 = vdwg.mxu0
    %v605 = vmul.f32 %v599, 0.17677669
    %v606 = vmul.f32 %v602, 0.17677669
    %v607 = vadd.f32 %v605, %v95
    %v608 = vadd.f32 %v606, %v96
    %vm609 = vcmask 130048
    %v610 = vsel %vm609, %v607, -inf
    %611 = vmax.xlane.f32.xlu0 %v610
    %v612 = vpop.xlane.xlu0 %611
    %v613 = vsel %vm609, %v608, -inf
    %614 = vmax.xlane.f32.xlu0 %v613
    %v615 = vpop.xlane.xlu0 %614
    %v616 = vsub.f32 %v607, %v612
    %v617 = vsub.f32 %v608, %v615
    %v618 = vmul.f32 %v616, 1.442695
    %v619 = vpow.pop %v618
    %v620 = vmul.f32 %v617, 1.442695
    %v621 = vpow.pop %v620
    %v622 = vsel %vm609, %v619, 0.0
    %623 = vadd.xlane.f32.xlu0 %v622
    %v624 = vpop.xlane.xlu0 %623
    %v625 = vsel %vm609, %v621, 0.0
    %626 = vadd.xlane.f32.xlu0 %v625
    %v627 = vpop.xlane.xlu0 %626
    %v628 = vrcp.pop %v624
    %v629 = vrcp.pop %v627
    %v630 = vmul.f32 %v619, %v628
    %v631 = vmul.f32 %v621, %v629
    %vm632 = vcmask 261248
    %v633 = vsel %vm632, %v607, -inf
    %634 = vmax.xlane.f32.xlu0 %v633
    %v635 = vpop.xlane.xlu0 %634
    %v636 = vsel %vm632, %v608, -inf
    %637 = vmax.xlane.f32.xlu0 %v636
    %v638 = vpop.xlane.xlu0 %637
    %v639 = vsub.f32 %v607, %v635
    %v640 = vsub.f32 %v608, %v638
    %v641 = vmul.f32 %v639, 1.442695
    %v642 = vpow.pop %v641
    %v643 = vmul.f32 %v640, 1.442695
    %v644 = vpow.pop %v643
    %647 = vrot.lane.b32.xlu0 %v642, 112
    %v648 = vpop.permute.xlu0 %647
    %649 = vrot.lane.b32.xlu0 %v644, 112
    %v650 = vpop.permute.xlu0 %649
    %v653 = vsel %vm609, %v648, 0.0
    %654 = vadd.xlane.f32.xlu0 %v653
    %v655 = vpop.xlane.xlu0 %654
    %v656 = vsel %vm609, %v650, 0.0
    %657 = vadd.xlane.f32.xlu0 %v656
    %v658 = vpop.xlane.xlu0 %657
    %v659 = vrcp.pop %v655
    %v660 = vrcp.pop %v658
    %v661 = vmul.f32 %v642, %v659
    %v662 = vmul.f32 %v644, %v660
    %vm663 = vcmask 392448
    %v664 = vsel %vm663, %v607, -inf
    %665 = vmax.xlane.f32.xlu0 %v664
    %v666 = vpop.xlane.xlu0 %665
    %v667 = vsel %vm663, %v608, -inf
    %668 = vmax.xlane.f32.xlu0 %v667
    %v669 = vpop.xlane.xlu0 %668
    %v670 = vsub.f32 %v607, %v666
    %v671 = vsub.f32 %v608, %v669
    %v672 = vmul.f32 %v670, 1.442695
    %v673 = vpow.pop %v672
    %v674 = vmul.f32 %v671, 1.442695
    %v675 = vpow.pop %v674
    %678 = vrot.lane.b32.xlu0 %v673, 96
    %v679 = vpop.permute.xlu0 %678
    %680 = vrot.lane.b32.xlu0 %v675, 96
    %v681 = vpop.permute.xlu0 %680
    %v684 = vsel %vm609, %v679, 0.0
    %685 = vadd.xlane.f32.xlu0 %v684
    %v686 = vpop.xlane.xlu0 %685
    %v687 = vsel %vm609, %v681, 0.0
    %688 = vadd.xlane.f32.xlu0 %v687
    %v689 = vpop.xlane.xlu0 %688
    %v690 = vrcp.pop %v686
    %v691 = vrcp.pop %v689
    %v692 = vmul.f32 %v673, %v690
    %v693 = vmul.f32 %v675, %v691
    %vm694 = vcmask 523648
    %v695 = vsel %vm694, %v607, -inf
    %696 = vmax.xlane.f32.xlu0 %v695
    %v697 = vpop.xlane.xlu0 %696
    %v698 = vsel %vm694, %v608, -inf
    %699 = vmax.xlane.f32.xlu0 %v698
    %v700 = vpop.xlane.xlu0 %699
    %v701 = vsub.f32 %v607, %v697
    %v702 = vsub.f32 %v608, %v700
    %v703 = vmul.f32 %v701, 1.442695
    %v704 = vpow.pop %v703
    %v705 = vmul.f32 %v702, 1.442695
    %v706 = vpow.pop %v705
    %709 = vrot.lane.b32.xlu0 %v704, 80
    %v710 = vpop.permute.xlu0 %709
    %711 = vrot.lane.b32.xlu0 %v706, 80
    %v712 = vpop.permute.xlu0 %711
    %v715 = vsel %vm609, %v710, 0.0
    %716 = vadd.xlane.f32.xlu0 %v715
    %v717 = vpop.xlane.xlu0 %716
    %v718 = vsel %vm609, %v712, 0.0
    %719 = vadd.xlane.f32.xlu0 %v718
    %v720 = vpop.xlane.xlu0 %719
    %v721 = vrcp.pop %v717
    %v722 = vrcp.pop %v720
    %v723 = vmul.f32 %v704, %v721
    %v724 = vmul.f32 %v706, %v722
    %v725 = vsel %vm609, %v630, %v661
    %v726 = vsel %vm609, %v631, %v662
    %vm727 = vcmask 261120
    %v728 = vsel %vm727, %v725, %v692
    %v729 = vsel %vm727, %v726, %v693
    %vm730 = vcmask 392192
    %v731 = vsel %vm730, %v728, %v723
    %v732 = vsel %vm730, %v729, %v724
    %v733 = vpack.c.bf16 %v732, %v731
    %vm734 = vcmask 523264
    %v736 = vsel %vm734, %v733, 0
    %738 = vmatprep.subr.bf16.mxu0 0
    %739 = vmatpush1.bf16.msra.mxu0 %v559
    %740 = vmatprep.subr.bf16.mxu0 0
    %741 = vmatpush1.bf16.msra.mxu0 %v560
    %742 = vmatprep.subr.bf16.mxu0 0
    %743 = vmatpush1.bf16.msra.mxu0 %v561
    %744 = vmatprep.subr.bf16.mxu0 0
    %745 = vmatpush1.bf16.msra.mxu0 %v562
    %746 = vmatprep.subr.bf16.mxu0 0
    %747 = vmatpush1.bf16.msra.mxu0 0
    %748 = vmatprep.subr.bf16.mxu0 0
    %749 = vmatpush1.bf16.msra.mxu0 0
    %750 = vmatprep.subr.bf16.mxu0 0
    %751 = vmatpush1.bf16.msra.mxu0 0
    %752 = vmatprep.subr.bf16.mxu0 0
    %753 = vmatpush1.bf16.msra.mxu0 0
    %754 = vmatprep.subr.bf16.mxu0 0
    %755 = vmatpush1.bf16.msra.mxu0 0
    %756 = vmatprep.subr.bf16.mxu0 0
    %757 = vmatpush1.bf16.msra.mxu0 0
    %758 = vmatprep.subr.bf16.mxu0 0
    %759 = vmatpush1.bf16.msra.mxu0 0
    %760 = vmatprep.subr.bf16.mxu0 0
    %761 = vmatpush1.bf16.msra.mxu0 0
    %762 = vmatprep.subr.bf16.mxu0 0
    %763 = vmatpush1.bf16.msra.mxu0 0
    %764 = vmatprep.subr.bf16.mxu0 0
    %765 = vmatpush1.bf16.msra.mxu0 0
    %766 = vmatprep.subr.bf16.mxu0 0
    %767 = vmatpush1.bf16.msra.mxu0 0
    %768 = vmatprep.subr.bf16.mxu0 0
    %769 = vmatpush1.bf16.msra.mxu0 0
    %770 = vmatprep.mubr.bf16.mxu0 0
    %771 = vmatmul.mubr.bf16.gmra.mrb[0].mxu0 %v736
    %v772 = vpop.f32.mrb[0].mxu0
    %v773 = vadd.f32 0.0, %v772
    %v774 = vpop.f32.mrb[0].mxu0
    %v775 = vpop.f32.mrb[0].mxu0
    %v776 = vadd.f32 0.0, %v775
    %v777 = vpop.f32.mrb[0].mxu0
    %778 = vdwg.mxu0
    %v779 = vpack.c.bf16 %v776, %v773
    %v780 = vld [vmem:[%s7] sm:$0xf]
    %v781 = vld [vmem:[%s7 + $0x4] sm:$0xf]
    %v782 = vld [vmem:[%s7 + $0x8] sm:$0xf]
    %v783 = vld [vmem:[%s7 + $0xc] sm:$0xf]
    %v784 = vld [vmem:[%s7 + $0x10] sm:$0xf]
    %v785 = vld [vmem:[%s7 + $0x14] sm:$0xf]
    %v786 = vld [vmem:[%s7 + $0x18] sm:$0xf]
    %v787 = vld [vmem:[%s7 + $0x1c] sm:$0xf]
    %v788 = vld [vmem:[%s7 + $0x20] sm:$0xf]
    %v789 = vld [vmem:[%s7 + $0x24] sm:$0xf]
    %v790 = vld [vmem:[%s7 + $0x28] sm:$0xf]
    %v791 = vld [vmem:[%s7 + $0x2c] sm:$0xf]
    %v792 = vld [vmem:[%s7 + $0x30] sm:$0xf]
    %v793 = vld [vmem:[%s7 + $0x34] sm:$0xf]
    %v794 = vld [vmem:[%s7 + $0x38] sm:$0xf]
    %v795 = vld [vmem:[%s7 + $0x3c] sm:$0xf]
    %v812 = vunpack.c.l.b16 %v780
    %v813 = vunpack.c.l.b16 %v781
    %v814 = vunpack.c.l.b16 %v782
    %v815 = vunpack.c.l.b16 %v783
    %v816 = vunpack.c.l.b16 %v784
    %v817 = vunpack.c.l.b16 %v785
    %v818 = vunpack.c.l.b16 %v786
    %v819 = vunpack.c.l.b16 %v787
    %v820 = vunpack.c.l.b16 %v788
    %v821 = vunpack.c.l.b16 %v789
    %v822 = vunpack.c.l.b16 %v790
    %v823 = vunpack.c.l.b16 %v791
    %v824 = vunpack.c.l.b16 %v792
    %v825 = vunpack.c.l.b16 %v793
    %v826 = vunpack.c.l.b16 %v794
    %v827 = vunpack.c.l.b16 %v795
    %v828 = vpack.c.b16 %v813, %v812
    %v829 = vpack.c.b16 %v815, %v814
    %v830 = vpack.c.b16 %v817, %v816
    %v831 = vpack.c.b16 %v819, %v818
    %v832 = vpack.c.b16 %v821, %v820
    %v833 = vpack.c.b16 %v823, %v822
    %v834 = vpack.c.b16 %v825, %v824
    %v835 = vpack.c.b16 %v827, %v826
    %844 = vmatprep.subr.bf16.mxu0 0
    %845 = vmatpush1.bf16.msra.mxu0 %v828
    %846 = vmatprep.subr.bf16.mxu0 0
    %847 = vmatpush1.bf16.msra.mxu0 %v829
    %848 = vmatprep.subr.bf16.mxu0 0
    %849 = vmatpush1.bf16.msra.mxu0 %v830
    %850 = vmatprep.subr.bf16.mxu0 0
    %851 = vmatpush1.bf16.msra.mxu0 %v831
    %852 = vmatprep.subr.bf16.mxu0 0
    %853 = vmatpush1.bf16.msra.mxu0 %v832
    %854 = vmatprep.subr.bf16.mxu0 0
    %855 = vmatpush1.bf16.msra.mxu0 %v833
    %856 = vmatprep.subr.bf16.mxu0 0
    %857 = vmatpush1.bf16.msra.mxu0 %v834
    %858 = vmatprep.subr.bf16.mxu0 0
    %859 = vmatpush1.bf16.msra.mxu0 %v835
    %860 = vmatprep.subr.bf16.mxu0 0
    %861 = vmatpush1.bf16.msra.mxu0 0
    %862 = vmatprep.subr.bf16.mxu0 0
    %863 = vmatpush1.bf16.msra.mxu0 0
    %864 = vmatprep.subr.bf16.mxu0 0
    %865 = vmatpush1.bf16.msra.mxu0 0
    %866 = vmatprep.subr.bf16.mxu0 0
    %867 = vmatpush1.bf16.msra.mxu0 0
    %868 = vmatprep.subr.bf16.mxu0 0
    %869 = vmatpush1.bf16.msra.mxu0 0
    %870 = vmatprep.subr.bf16.mxu0 0
    %871 = vmatpush1.bf16.msra.mxu0 0
    %872 = vmatprep.subr.bf16.mxu0 0
    %873 = vmatpush1.bf16.msra.mxu0 0
    %874 = vmatprep.subr.bf16.mxu0 0
    %875 = vmatpush1.bf16.msra.mxu0 0
    %876 = vmatprep.mubr.bf16.mxu0 0
    %877 = vmatmul.mubr.bf16.gmra.mrb[0].mxu0 %v779
    %v878 = vpop.f32.mrb[0].mxu0
    %v879 = vadd.f32 0.0, %v878
    %v880 = vpop.f32.mrb[0].mxu0
    %v881 = vpop.f32.mrb[0].mxu0
    %v882 = vadd.f32 0.0, %v881
    %v883 = vpop.f32.mrb[0].mxu0
    %884 = vdwg.mxu0
    %v885 = vadd.f32 %v93, %v879
    %v886 = vadd.f32 %v94, %v882
    %v887 = vld [vmem:[%s8] sm:$0x1]
    %v888 = vmul.f32 %v885, %v885
    %v889 = vmul.f32 %v886, %v886
    %890 = vadd.xlane.f32.xlu0 %v888
    %v891 = vpop.xlane.xlu0 %890
    %892 = vadd.xlane.f32.xlu0 %v889
    %v893 = vpop.xlane.xlu0 %892
    %v894 = vmul.f32 %v891, %v109
    %v895 = vmul.f32 %v893, %v109
    %v896 = vadd.f32 %v894, 1e-06
    %v897 = vadd.f32 %v895, 1e-06
    %v898 = vrsqrt.pop %v896
    %v899 = vrsqrt.pop %v897
    %v900 = vmul.f32 %v885, %v898
    %v901 = vmul.f32 %v886, %v899
    %v902 = vadd.f32 %v887, 1.0
    %v904 = vlaneseq
    %v905 = vshrl.u32 %v904, 7
    %v906 = vsub.s32 0, %v905
    %v907 = vrot.slane %v902, %v906
    %v909 = vmul.f32 %v900, %v907
    %v910 = vmul.f32 %v901, %v907
    %v911 = vpack.c.bf16 %v910, %v909
    %v912 = vld [vmem:[#allocation2] sm:$0xff]
    %v913 = vld [vmem:[#allocation2 + $0x8] sm:$0xff]
    %v914 = vld [vmem:[#allocation2 + $0x10] sm:$0xff]
    %v915 = vld [vmem:[#allocation2 + $0x18] sm:$0xff]
    %v916 = vld [vmem:[#allocation2 + $0x20] sm:$0xff]
    %v917 = vld [vmem:[#allocation2 + $0x28] sm:$0xff]
    %v918 = vld [vmem:[#allocation2 + $0x30] sm:$0xff]
    %v919 = vld [vmem:[#allocation2 + $0x38] sm:$0xff]
    %v920 = vld [vmem:[#allocation2 + $0x40] sm:$0xff]
    %v921 = vld [vmem:[#allocation2 + $0x48] sm:$0xff]
    %v922 = vld [vmem:[#allocation2 + $0x50] sm:$0xff]
    %v923 = vld [vmem:[#allocation2 + $0x58] sm:$0xff]
    %v924 = vld [vmem:[#allocation2 + $0x60] sm:$0xff]
    %v925 = vld [vmem:[#allocation2 + $0x68] sm:$0xff]
    %v926 = vld [vmem:[#allocation2 + $0x70] sm:$0xff]
    %v927 = vld [vmem:[#allocation2 + $0x78] sm:$0xff]
    %v928 = vld [vmem:[#allocation2 + $0x80] sm:$0xff]
    %v929 = vld [vmem:[#allocation2 + $0x88] sm:$0xff]
    %v930 = vld [vmem:[#allocation2 + $0x90] sm:$0xff]
    %v931 = vld [vmem:[#allocation2 + $0x98] sm:$0xff]
    %v932 = vld [vmem:[#allocation2 + $0xa0] sm:$0xff]
    %v933 = vld [vmem:[#allocation2 + $0xa8] sm:$0xff]
    %v934 = vld [vmem:[#allocation2 + $0xb0] sm:$0xff]
    %v935 = vld [vmem:[#allocation2 + $0xb8] sm:$0xff]
    %v936 = vld [vmem:[#allocation2 + $0xc0] sm:$0xff]
    %v937 = vld [vmem:[#allocation2 + $0xc8] sm:$0xff]
    %v938 = vld [vmem:[#allocation2 + $0xd0] sm:$0xff]
    %v939 = vld [vmem:[#allocation2 + $0xd8] sm:$0xff]
    %v940 = vld [vmem:[#allocation2 + $0xe0] sm:$0xff]
    %v941 = vld [vmem:[#allocation2 + $0xe8] sm:$0xff]
    %v942 = vld [vmem:[#allocation2 + $0xf0] sm:$0xff]
    %v943 = vld [vmem:[#allocation2 + $0xf8] sm:$0xff]
    %v976 = vunpack.c.l.b16 %v912
    %v977 = vunpack.c.h.b16 %v912
    %v978 = vunpack.c.l.b16 %v913
    %v979 = vunpack.c.h.b16 %v913
    %v980 = vunpack.c.l.b16 %v914
    %v981 = vunpack.c.h.b16 %v914
    %v982 = vunpack.c.l.b16 %v915
    %v983 = vunpack.c.h.b16 %v915
    %v984 = vunpack.c.l.b16 %v916
    %v985 = vunpack.c.h.b16 %v916
    %v986 = vunpack.c.l.b16 %v917
    %v987 = vunpack.c.h.b16 %v917
    %v988 = vunpack.c.l.b16 %v918
    %v989 = vunpack.c.h.b16 %v918
    %v990 = vunpack.c.l.b16 %v919
    %v991 = vunpack.c.h.b16 %v919
    %v992 = vunpack.c.l.b16 %v920
    %v993 = vunpack.c.h.b16 %v920
    %v994 = vunpack.c.l.b16 %v921
    %v995 = vunpack.c.h.b16 %v921
    %v996 = vunpack.c.l.b16 %v922
    %v997 = vunpack.c.h.b16 %v922
    %v998 = vunpack.c.l.b16 %v923
    %v999 = vunpack.c.h.b16 %v923
    %v1000 = vunpack.c.l.b16 %v924
    %v1001 = vunpack.c.h.b16 %v924
    %v1002 = vunpack.c.l.b16 %v925
    %v1003 = vunpack.c.h.b16 %v925
    %v1004 = vunpack.c.l.b16 %v926
    %v1005 = vunpack.c.h.b16 %v926
    %v1006 = vunpack.c.l.b16 %v927
    %v1007 = vunpack.c.h.b16 %v927
    %v1008 = vunpack.c.l.b16 %v928
    %v1009 = vunpack.c.h.b16 %v928
    %v1010 = vunpack.c.l.b16 %v929
    %v1011 = vunpack.c.h.b16 %v929
    %v1012 = vunpack.c.l.b16 %v930
    %v1013 = vunpack.c.h.b16 %v930
    %v1014 = vunpack.c.l.b16 %v931
    %v1015 = vunpack.c.h.b16 %v931
    %v1016 = vunpack.c.l.b16 %v932
    %v1017 = vunpack.c.h.b16 %v932
    %v1018 = vunpack.c.l.b16 %v933
    %v1019 = vunpack.c.h.b16 %v933
    %v1020 = vunpack.c.l.b16 %v934
    %v1021 = vunpack.c.h.b16 %v934
    %v1022 = vunpack.c.l.b16 %v935
    %v1023 = vunpack.c.h.b16 %v935
    %v1024 = vunpack.c.l.b16 %v936
    %v1025 = vunpack.c.h.b16 %v936
    %v1026 = vunpack.c.l.b16 %v937
    %v1027 = vunpack.c.h.b16 %v937
    %v1028 = vunpack.c.l.b16 %v938
    %v1029 = vunpack.c.h.b16 %v938
    %v1030 = vunpack.c.l.b16 %v939
    %v1031 = vunpack.c.h.b16 %v939
    %v1032 = vunpack.c.l.b16 %v940
    %v1033 = vunpack.c.h.b16 %v940
    %v1034 = vunpack.c.l.b16 %v941
    %v1035 = vunpack.c.h.b16 %v941
    %v1036 = vunpack.c.l.b16 %v942
    %v1037 = vunpack.c.h.b16 %v942
    %v1038 = vunpack.c.l.b16 %v943
    %v1039 = vunpack.c.h.b16 %v943
    %v1040 = vpack.c.b16 %v980, %v976
    %v1041 = vpack.c.b16 %v981, %v977
    %v1042 = vpack.c.b16 %v982, %v978
    %v1043 = vpack.c.b16 %v983, %v979
    %v1044 = vpack.c.b16 %v988, %v984
    %v1045 = vpack.c.b16 %v989, %v985
    %v1046 = vpack.c.b16 %v990, %v986
    %v1047 = vpack.c.b16 %v991, %v987
    %v1048 = vpack.c.b16 %v996, %v992
    %v1049 = vpack.c.b16 %v997, %v993
    %v1050 = vpack.c.b16 %v998, %v994
    %v1051 = vpack.c.b16 %v999, %v995
    %v1052 = vpack.c.b16 %v1004, %v1000
    %v1053 = vpack.c.b16 %v1005, %v1001
    %v1054 = vpack.c.b16 %v1006, %v1002
    %v1055 = vpack.c.b16 %v1007, %v1003
    %v1056 = vpack.c.b16 %v1012, %v1008
    %v1057 = vpack.c.b16 %v1013, %v1009
    %v1058 = vpack.c.b16 %v1014, %v1010
    %v1059 = vpack.c.b16 %v1015, %v1011
    %v1060 = vpack.c.b16 %v1020, %v1016
    %v1061 = vpack.c.b16 %v1021, %v1017
    %v1062 = vpack.c.b16 %v1022, %v1018
    %v1063 = vpack.c.b16 %v1023, %v1019
    %v1064 = vpack.c.b16 %v1028, %v1024
    %v1065 = vpack.c.b16 %v1029, %v1025
    %v1066 = vpack.c.b16 %v1030, %v1026
    %v1067 = vpack.c.b16 %v1031, %v1027
    %v1068 = vpack.c.b16 %v1036, %v1032
    %v1069 = vpack.c.b16 %v1037, %v1033
    %v1070 = vpack.c.b16 %v1038, %v1034
    %v1071 = vpack.c.b16 %v1039, %v1035
    %1104 = vmatprep.subr.bf16.mxu0 %v1041
    %1105 = vmatpush1.bf16.msra.mxu0 %v1040
    %1106 = vmatprep.subr.bf16.mxu0 %v1045
    %1107 = vmatpush1.bf16.msra.mxu0 %v1044
    %1108 = vmatprep.subr.bf16.mxu0 %v1049
    %1109 = vmatpush1.bf16.msra.mxu0 %v1048
    %1110 = vmatprep.subr.bf16.mxu0 %v1053
    %1111 = vmatpush1.bf16.msra.mxu0 %v1052
    %1112 = vmatprep.subr.bf16.mxu0 %v1057
    %1113 = vmatpush1.bf16.msra.mxu0 %v1056
    %1114 = vmatprep.subr.bf16.mxu0 %v1061
    %1115 = vmatpush1.bf16.msra.mxu0 %v1060
    %1116 = vmatprep.subr.bf16.mxu0 %v1065
    %1117 = vmatpush1.bf16.msra.mxu0 %v1064
    %1118 = vmatprep.subr.bf16.mxu0 %v1069
    %1119 = vmatpush1.bf16.msra.mxu0 %v1068
    %1120 = vmatprep.subr.bf16.mxu0 0
    %1121 = vmatpush1.bf16.msra.mxu0 0
    %1122 = vmatprep.subr.bf16.mxu0 0
    %1123 = vmatpush1.bf16.msra.mxu0 0
    %1124 = vmatprep.subr.bf16.mxu0 0
    %1125 = vmatpush1.bf16.msra.mxu0 0
    %1126 = vmatprep.subr.bf16.mxu0 0
    %1127 = vmatpush1.bf16.msra.mxu0 0
    %1128 = vmatprep.subr.bf16.mxu0 0
    %1129 = vmatpush1.bf16.msra.mxu0 0
    %1130 = vmatprep.subr.bf16.mxu0 0
    %1131 = vmatpush1.bf16.msra.mxu0 0
    %1132 = vmatprep.subr.bf16.mxu0 0
    %1133 = vmatpush1.bf16.msra.mxu0 0
    %1134 = vmatprep.subr.bf16.mxu0 0
    %1135 = vmatpush1.bf16.msra.mxu0 0
    %1136 = vmatprep.mubr.bf16.mxu0 0
    %1137 = vmatmul.mubr.bf16.gmra.mrb[0].mxu0 %v911
    %v1138 = vpop.f32.mrb[0].mxu0
    %v1139 = vadd.f32 0.0, %v1138
    %v1140 = vpop.f32.mrb[0].mxu0
    %v1141 = vadd.f32 0.0, %v1140
    %v1142 = vpop.f32.mrb[0].mxu0
    %v1143 = vadd.f32 0.0, %v1142
    %v1144 = vpop.f32.mrb[0].mxu0
    %v1145 = vadd.f32 0.0, %v1144
    %1146 = vdwg.mxu0
    %1147 = vmatprep.subr.bf16.mxu0 %v1043
    %1148 = vmatpush1.bf16.msra.mxu0 %v1042
    %1149 = vmatprep.subr.bf16.mxu0 %v1047
    %1150 = vmatpush1.bf16.msra.mxu0 %v1046
    %1151 = vmatprep.subr.bf16.mxu0 %v1051
    %1152 = vmatpush1.bf16.msra.mxu0 %v1050
    %1153 = vmatprep.subr.bf16.mxu0 %v1055
    %1154 = vmatpush1.bf16.msra.mxu0 %v1054
    %1155 = vmatprep.subr.bf16.mxu0 %v1059
    %1156 = vmatpush1.bf16.msra.mxu0 %v1058
    %1157 = vmatprep.subr.bf16.mxu0 %v1063
    %1158 = vmatpush1.bf16.msra.mxu0 %v1062
    %1159 = vmatprep.subr.bf16.mxu0 %v1067
    %1160 = vmatpush1.bf16.msra.mxu0 %v1066
    %1161 = vmatprep.subr.bf16.mxu0 %v1071
    %1162 = vmatpush1.bf16.msra.mxu0 %v1070
    %1163 = vmatprep.subr.bf16.mxu0 0
    %1164 = vmatpush1.bf16.msra.mxu0 0
    %1165 = vmatprep.subr.bf16.mxu0 0
    %1166 = vmatpush1.bf16.msra.mxu0 0
    %1167 = vmatprep.subr.bf16.mxu0 0
    %1168 = vmatpush1.bf16.msra.mxu0 0
    %1169 = vmatprep.subr.bf16.mxu0 0
    %1170 = vmatpush1.bf16.msra.mxu0 0
    %1171 = vmatprep.subr.bf16.mxu0 0
    %1172 = vmatpush1.bf16.msra.mxu0 0
    %1173 = vmatprep.subr.bf16.mxu0 0
    %1174 = vmatpush1.bf16.msra.mxu0 0
    %1175 = vmatprep.subr.bf16.mxu0 0
    %1176 = vmatpush1.bf16.msra.mxu0 0
    %1177 = vmatprep.subr.bf16.mxu0 0
    %1178 = vmatpush1.bf16.msra.mxu0 0
    %1179 = vmatprep.mubr.bf16.mxu0 0
    %1180 = vmatmul.mubr.bf16.gmra.mrb[0].mxu0 %v911
    %v1181 = vpop.f32.mrb[0].mxu0
    %v1182 = vadd.f32 0.0, %v1181
    %v1183 = vpop.f32.mrb[0].mxu0
    %v1184 = vadd.f32 0.0, %v1183
    %v1185 = vpop.f32.mrb[0].mxu0
    %v1186 = vadd.f32 0.0, %v1185
    %v1187 = vpop.f32.mrb[0].mxu0
    %v1188 = vadd.f32 0.0, %v1187
    %1189 = vdwg.mxu0
    %v1190 = vmul.f32 %v1139, %v1139
    %v1191 = vmul.f32 %v1141, %v1141
    %v1192 = vmul.f32 %v1143, %v1143
    %v1193 = vmul.f32 %v1145, %v1145
    %v1194 = vmul.f32 %v1139, %v1190
    %v1195 = vmul.f32 %v1141, %v1191
    %v1196 = vmul.f32 %v1143, %v1192
    %v1197 = vmul.f32 %v1145, %v1193
    %v1198 = vmul.f32 %v1194, 0.044715
    %v1199 = vmul.f32 %v1195, 0.044715
    %v1200 = vmul.f32 %v1196, 0.044715
    %v1201 = vmul.f32 %v1197, 0.044715
    %v1202 = vadd.f32 %v1139, %v1198
    %v1203 = vadd.f32 %v1141, %v1199
    %v1204 = vadd.f32 %v1143, %v1200
    %v1205 = vadd.f32 %v1145, %v1201
    %v1206 = vmul.f32 %v1202, 0.7978846
    %v1207 = vmul.f32 %v1203, 0.7978846
    %v1208 = vmul.f32 %v1204, 0.7978846
    %v1209 = vmul.f32 %v1205, 0.7978846
    %v1210 = vtanh.pop %v1206
    %v1211 = vtanh.pop %v1207
    %v1212 = vtanh.pop %v1208
    %v1213 = vtanh.pop %v1209
    %v1214 = vadd.f32 %v1210, 1.0
    %v1215 = vadd.f32 %v1211, 1.0
    %v1216 = vadd.f32 %v1212, 1.0
    %v1217 = vadd.f32 %v1213, 1.0
    %v1218 = vmul.f32 %v1214, 0.5
    %v1219 = vmul.f32 %v1215, 0.5
    %v1220 = vmul.f32 %v1216, 0.5
    %v1221 = vmul.f32 %v1217, 0.5
    %v1222 = vmul.f32 %v1139, %v1218
    %v1223 = vmul.f32 %v1141, %v1219
    %v1224 = vmul.f32 %v1143, %v1220
    %v1225 = vmul.f32 %v1145, %v1221
    %v1226 = vmul.f32 %v1222, %v1182
    %v1227 = vmul.f32 %v1223, %v1184
    %v1228 = vmul.f32 %v1224, %v1186
    %v1229 = vmul.f32 %v1225, %v1188
    %v1230 = vpack.c.bf16 %v1228, %v1226
    %v1231 = vpack.c.bf16 %v1229, %v1227
    %v1232 = vld [vmem:[#allocation5] sm:$0xf]
    %v1233 = vld [vmem:[#allocation5 + $0x4] sm:$0xf]
    %v1234 = vld [vmem:[#allocation5 + $0x8] sm:$0xf]
    %v1235 = vld [vmem:[#allocation5 + $0xc] sm:$0xf]
    %v1236 = vld [vmem:[#allocation5 + $0x10] sm:$0xf]
    %v1237 = vld [vmem:[#allocation5 + $0x14] sm:$0xf]
    %v1238 = vld [vmem:[#allocation5 + $0x18] sm:$0xf]
    %v1239 = vld [vmem:[#allocation5 + $0x1c] sm:$0xf]
    %v1240 = vld [vmem:[#allocation5 + $0x20] sm:$0xf]
    %v1241 = vld [vmem:[#allocation5 + $0x24] sm:$0xf]
    %v1242 = vld [vmem:[#allocation5 + $0x28] sm:$0xf]
    %v1243 = vld [vmem:[#allocation5 + $0x2c] sm:$0xf]
    %v1244 = vld [vmem:[#allocation5 + $0x30] sm:$0xf]
    %v1245 = vld [vmem:[#allocation5 + $0x34] sm:$0xf]
    %v1246 = vld [vmem:[#allocation5 + $0x38] sm:$0xf]
    %v1247 = vld [vmem:[#allocation5 + $0x3c] sm:$0xf]
    %v1248 = vld [vmem:[#allocation5 + $0x40] sm:$0xf]
    %v1249 = vld [vmem:[#allocation5 + $0x44] sm:$0xf]
    %v1250 = vld [vmem:[#allocation5 + $0x48] sm:$0xf]
    %v1251 = vld [vmem:[#allocation5 + $0x4c] sm:$0xf]
    %v1252 = vld [vmem:[#allocation5 + $0x50] sm:$0xf]
    %v1253 = vld [vmem:[#allocation5 + $0x54] sm:$0xf]
    %v1254 = vld [vmem:[#allocation5 + $0x58] sm:$0xf]
    %v1255 = vld [vmem:[#allocation5 + $0x5c] sm:$0xf]
    %v1256 = vld [vmem:[#allocation5 + $0x60] sm:$0xf]
    %v1257 = vld [vmem:[#allocation5 + $0x64] sm:$0xf]
    %v1258 = vld [vmem:[#allocation5 + $0x68] sm:$0xf]
    %v1259 = vld [vmem:[#allocation5 + $0x6c] sm:$0xf]
    %v1260 = vld [vmem:[#allocation5 + $0x70] sm:$0xf]
    %v1261 = vld [vmem:[#allocation5 + $0x74] sm:$0xf]
    %v1262 = vld [vmem:[#allocation5 + $0x78] sm:$0xf]
    %v1263 = vld [vmem:[#allocation5 + $0x7c] sm:$0xf]
    %v1296 = vunpack.c.l.b16 %v1232
    %v1297 = vunpack.c.l.b16 %v1233
    %v1298 = vunpack.c.l.b16 %v1234
    %v1299 = vunpack.c.l.b16 %v1235
    %v1300 = vunpack.c.l.b16 %v1236
    %v1301 = vunpack.c.l.b16 %v1237
    %v1302 = vunpack.c.l.b16 %v1238
    %v1303 = vunpack.c.l.b16 %v1239
    %v1304 = vunpack.c.l.b16 %v1240
    %v1305 = vunpack.c.l.b16 %v1241
    %v1306 = vunpack.c.l.b16 %v1242
    %v1307 = vunpack.c.l.b16 %v1243
    %v1308 = vunpack.c.l.b16 %v1244
    %v1309 = vunpack.c.l.b16 %v1245
    %v1310 = vunpack.c.l.b16 %v1246
    %v1311 = vunpack.c.l.b16 %v1247
    %v1312 = vunpack.c.l.b16 %v1248
    %v1313 = vunpack.c.l.b16 %v1249
    %v1314 = vunpack.c.l.b16 %v1250
    %v1315 = vunpack.c.l.b16 %v1251
    %v1316 = vunpack.c.l.b16 %v1252
    %v1317 = vunpack.c.l.b16 %v1253
    %v1318 = vunpack.c.l.b16 %v1254
    %v1319 = vunpack.c.l.b16 %v1255
    %v1320 = vunpack.c.l.b16 %v1256
    %v1321 = vunpack.c.l.b16 %v1257
    %v1322 = vunpack.c.l.b16 %v1258
    %v1323 = vunpack.c.l.b16 %v1259
    %v1324 = vunpack.c.l.b16 %v1260
    %v1325 = vunpack.c.l.b16 %v1261
    %v1326 = vunpack.c.l.b16 %v1262
    %v1327 = vunpack.c.l.b16 %v1263
    %v1328 = vpack.c.b16 %v1297, %v1296
    %v1329 = vpack.c.b16 %v1299, %v1298
    %v1330 = vpack.c.b16 %v1301, %v1300
    %v1331 = vpack.c.b16 %v1303, %v1302
    %v1332 = vpack.c.b16 %v1305, %v1304
    %v1333 = vpack.c.b16 %v1307, %v1306
    %v1334 = vpack.c.b16 %v1309, %v1308
    %v1335 = vpack.c.b16 %v1311, %v1310
    %v1336 = vpack.c.b16 %v1313, %v1312
    %v1337 = vpack.c.b16 %v1315, %v1314
    %v1338 = vpack.c.b16 %v1317, %v1316
    %v1339 = vpack.c.b16 %v1319, %v1318
    %v1340 = vpack.c.b16 %v1321, %v1320
    %v1341 = vpack.c.b16 %v1323, %v1322
    %v1342 = vpack.c.b16 %v1325, %v1324
    %v1343 = vpack.c.b16 %v1327, %v1326
    %1360 = vmatprep.subr.bf16.mxu0 0
    %1361 = vmatpush1.bf16.msra.mxu0 %v1328
    %1362 = vmatprep.subr.bf16.mxu0 0
    %1363 = vmatpush1.bf16.msra.mxu0 %v1329
    %1364 = vmatprep.subr.bf16.mxu0 0
    %1365 = vmatpush1.bf16.msra.mxu0 %v1330
    %1366 = vmatprep.subr.bf16.mxu0 0
    %1367 = vmatpush1.bf16.msra.mxu0 %v1331
    %1368 = vmatprep.subr.bf16.mxu0 0
    %1369 = vmatpush1.bf16.msra.mxu0 %v1332
    %1370 = vmatprep.subr.bf16.mxu0 0
    %1371 = vmatpush1.bf16.msra.mxu0 %v1333
    %1372 = vmatprep.subr.bf16.mxu0 0
    %1373 = vmatpush1.bf16.msra.mxu0 %v1334
    %1374 = vmatprep.subr.bf16.mxu0 0
    %1375 = vmatpush1.bf16.msra.mxu0 %v1335
    %1376 = vmatprep.subr.bf16.mxu0 0
    %1377 = vmatpush1.bf16.msra.mxu0 %v1336
    %1378 = vmatprep.subr.bf16.mxu0 0
    %1379 = vmatpush1.bf16.msra.mxu0 %v1337
    %1380 = vmatprep.subr.bf16.mxu0 0
    %1381 = vmatpush1.bf16.msra.mxu0 %v1338
    %1382 = vmatprep.subr.bf16.mxu0 0
    %1383 = vmatpush1.bf16.msra.mxu0 %v1339
    %1384 = vmatprep.subr.bf16.mxu0 0
    %1385 = vmatpush1.bf16.msra.mxu0 %v1340
    %1386 = vmatprep.subr.bf16.mxu0 0
    %1387 = vmatpush1.bf16.msra.mxu0 %v1341
    %1388 = vmatprep.subr.bf16.mxu0 0
    %1389 = vmatpush1.bf16.msra.mxu0 %v1342
    %1390 = vmatprep.subr.bf16.mxu0 0
    %1391 = vmatpush1.bf16.msra.mxu0 %v1343
    %1392 = vmatprep.mubr.bf16.mxu0 %v1231
    %1393 = vmatmul.mubr.bf16.gmra.mrb[0].mxu0 %v1230
    %v1394 = vpop.f32.mrb[0].mxu0
    %v1395 = vadd.f32 0.0, %v1394
    %v1396 = vpop.f32.mrb[0].mxu0
    %v1397 = vpop.f32.mrb[0].mxu0
    %v1398 = vadd.f32 0.0, %v1397
    %v1399 = vpop.f32.mrb[0].mxu0
    %1400 = vdwg.mxu0
    %v1401 = vadd.f32 %v885, %v1395
    %v1402 = vadd.f32 %v886, %v1398
    %s1403 = scalar_lea.vmem %s5, 1
    %v1404 = vld [vmem:[%s1403] sm:$0x1]
    %v1405 = vmul.f32 %v1401, %v1401
    %v1406 = vmul.f32 %v1402, %v1402
    %1407 = vadd.xlane.f32.xlu0 %v1405
    %v1408 = vpop.xlane.xlu0 %1407
    %1409 = vadd.xlane.f32.xlu0 %v1406
    %v1410 = vpop.xlane.xlu0 %1409
    %v1411 = vmul.f32 %v1408, %v109
    %v1412 = vmul.f32 %v1410, %v109
    %v1413 = vadd.f32 %v1411, 1e-06
    %v1414 = vadd.f32 %v1412, 1e-06
    %v1415 = vrsqrt.pop %v1413
    %v1416 = vrsqrt.pop %v1414
    %v1417 = vmul.f32 %v1401, %v1415
    %v1418 = vmul.f32 %v1402, %v1416
    %v1419 = vadd.f32 %v1404, 1.0
    %v1421 = vlaneseq
    %v1422 = vshrl.u32 %v1421, 7
    %v1423 = vsub.s32 0, %v1422
    %v1424 = vrot.slane %v1419, %v1423
    %v1426 = vmul.f32 %v1417, %v1424
    %v1427 = vmul.f32 %v1418, %v1424
    %v1428 = vpack.c.bf16 %v1427, %v1426
    %s1429 = scalar_lea.vmem %s6, 320
    %v1430 = vld [vmem:[%s1429] sm:$0xff]
    %v1431 = vld [vmem:[%s1429 + $0x8] sm:$0xff]
    %v1432 = vld [vmem:[%s1429 + $0x10] sm:$0xf]
    %v1433 = vld [vmem:[%s1429 + $0x14] sm:$0xff]
    %v1434 = vld [vmem:[%s1429 + $0x1c] sm:$0xff]
    %v1435 = vld [vmem:[%s1429 + $0x24] sm:$0xf]
    %v1436 = vld [vmem:[%s1429 + $0x28] sm:$0xff]
    %v1437 = vld [vmem:[%s1429 + $0x30] sm:$0xff]
    %v1438 = vld [vmem:[%s1429 + $0x38] sm:$0xf]
    %v1439 = vld [vmem:[%s1429 + $0x3c] sm:$0xff]
    %v1440 = vld [vmem:[%s1429 + $0x44] sm:$0xff]
    %v1441 = vld [vmem:[%s1429 + $0x4c] sm:$0xf]
    %v1442 = vld [vmem:[%s1429 + $0x50] sm:$0xff]
    %v1443 = vld [vmem:[%s1429 + $0x58] sm:$0xff]
    %v1444 = vld [vmem:[%s1429 + $0x60] sm:$0xf]
    %v1445 = vld [vmem:[%s1429 + $0x64] sm:$0xff]
    %v1446 = vld [vmem:[%s1429 + $0x6c] sm:$0xff]
    %v1447 = vld [vmem:[%s1429 + $0x74] sm:$0xf]
    %v1448 = vld [vmem:[%s1429 + $0x78] sm:$0xff]
    %v1449 = vld [vmem:[%s1429 + $0x80] sm:$0xff]
    %v1450 = vld [vmem:[%s1429 + $0x88] sm:$0xf]
    %v1451 = vld [vmem:[%s1429 + $0x8c] sm:$0xff]
    %v1452 = vld [vmem:[%s1429 + $0x94] sm:$0xff]
    %v1453 = vld [vmem:[%s1429 + $0x9c] sm:$0xf]
    %v1454 = vld [vmem:[%s1429 + $0xa0] sm:$0xff]
    %v1455 = vld [vmem:[%s1429 + $0xa8] sm:$0xff]
    %v1456 = vld [vmem:[%s1429 + $0xb0] sm:$0xf]
    %v1457 = vld [vmem:[%s1429 + $0xb4] sm:$0xff]
    %v1458 = vld [vmem:[%s1429 + $0xbc] sm:$0xff]
    %v1459 = vld [vmem:[%s1429 + $0xc4] sm:$0xf]
    %v1460 = vld [vmem:[%s1429 + $0xc8] sm:$0xff]
    %v1461 = vld [vmem:[%s1429 + $0xd0] sm:$0xff]
    %v1462 = vld [vmem:[%s1429 + $0xd8] sm:$0xf]
    %v1463 = vld [vmem:[%s1429 + $0xdc] sm:$0xff]
    %v1464 = vld [vmem:[%s1429 + $0xe4] sm:$0xff]
    %v1465 = vld [vmem:[%s1429 + $0xec] sm:$0xf]
    %v1466 = vld [vmem:[%s1429 + $0xf0] sm:$0xff]
    %v1467 = vld [vmem:[%s1429 + $0xf8] sm:$0xff]
    %v1468 = vld [vmem:[%s1429 + $0x100] sm:$0xf]
    %v1469 = vld [vmem:[%s1429 + $0x104] sm:$0xff]
    %v1470 = vld [vmem:[%s1429 + $0x10c] sm:$0xff]
    %v1471 = vld [vmem:[%s1429 + $0x114] sm:$0xf]
    %v1472 = vld [vmem:[%s1429 + $0x118] sm:$0xff]
    %v1473 = vld [vmem:[%s1429 + $0x120] sm:$0xff]
    %v1474 = vld [vmem:[%s1429 + $0x128] sm:$0xf]
    %v1475 = vld [vmem:[%s1429 + $0x12c] sm:$0xff]
    %v1476 = vld [vmem:[%s1429 + $0x134] sm:$0xff]
    %v1477 = vld [vmem:[%s1429 + $0x13c] sm:$0xf]
    %v1526 = vunpack.c.l.b16 %v1430
    %v1527 = vunpack.c.h.b16 %v1430
    %v1528 = vunpack.c.l.b16 %v1431
    %v1529 = vunpack.c.h.b16 %v1431
    %v1530 = vunpack.c.l.b16 %v1432
    %v1531 = vunpack.c.l.b16 %v1433
    %v1532 = vunpack.c.h.b16 %v1433
    %v1533 = vunpack.c.l.b16 %v1434
    %v1534 = vunpack.c.h.b16 %v1434
    %v1535 = vunpack.c.l.b16 %v1435
    %v1536 = vunpack.c.l.b16 %v1436
    %v1537 = vunpack.c.h.b16 %v1436
    %v1538 = vunpack.c.l.b16 %v1437
    %v1539 = vunpack.c.h.b16 %v1437
    %v1540 = vunpack.c.l.b16 %v1438
    %v1541 = vunpack.c.l.b16 %v1439
    %v1542 = vunpack.c.h.b16 %v1439
    %v1543 = vunpack.c.l.b16 %v1440
    %v1544 = vunpack.c.h.b16 %v1440
    %v1545 = vunpack.c.l.b16 %v1441
    %v1546 = vunpack.c.l.b16 %v1442
    %v1547 = vunpack.c.h.b16 %v1442
    %v1548 = vunpack.c.l.b16 %v1443
    %v1549 = vunpack.c.h.b16 %v1443
    %v1550 = vunpack.c.l.b16 %v1444
    %v1551 = vunpack.c.l.b16 %v1445
    %v1552 = vunpack.c.h.b16 %v1445
    %v1553 = vunpack.c.l.b16 %v1446
    %v1554 = vunpack.c.h.b16 %v1446
    %v1555 = vunpack.c.l.b16 %v1447
    %v1556 = vunpack.c.l.b16 %v1448
    %v1557 = vunpack.c.h.b16 %v1448
    %v1558 = vunpack.c.l.b16 %v1449
    %v1559 = vunpack.c.h.b16 %v1449
    %v1560 = vunpack.c.l.b16 %v1450
    %v1561 = vunpack.c.l.b16 %v1451
    %v1562 = vunpack.c.h.b16 %v1451
    %v1563 = vunpack.c.l.b16 %v1452
    %v1564 = vunpack.c.h.b16 %v1452
    %v1565 = vunpack.c.l.b16 %v1453
    %v1566 = vunpack.c.l.b16 %v1454
    %v1567 = vunpack.c.h.b16 %v1454
    %v1568 = vunpack.c.l.b16 %v1455
    %v1569 = vunpack.c.h.b16 %v1455
    %v1570 = vunpack.c.l.b16 %v1456
    %v1571 = vunpack.c.l.b16 %v1457
    %v1572 = vunpack.c.h.b16 %v1457
    %v1573 = vunpack.c.l.b16 %v1458
    %v1574 = vunpack.c.h.b16 %v1458
    %v1575 = vunpack.c.l.b16 %v1459
    %v1576 = vunpack.c.l.b16 %v1460
    %v1577 = vunpack.c.h.b16 %v1460
    %v1578 = vunpack.c.l.b16 %v1461
    %v1579 = vunpack.c.h.b16 %v1461
    %v1580 = vunpack.c.l.b16 %v1462
    %v1581 = vunpack.c.l.b16 %v1463
    %v1582 = vunpack.c.h.b16 %v1463
    %v1583 = vunpack.c.l.b16 %v1464
    %v1584 = vunpack.c.h.b16 %v1464
    %v1585 = vunpack.c.l.b16 %v1465
    %v1586 = vunpack.c.l.b16 %v1466
    %v1587 = vunpack.c.h.b16 %v1466
    %v1588 = vunpack.c.l.b16 %v1467
    %v1589 = vunpack.c.h.b16 %v1467
    %v1590 = vunpack.c.l.b16 %v1468
    %v1591 = vunpack.c.l.b16 %v1469
    %v1592 = vunpack.c.h.b16 %v1469
    %v1593 = vunpack.c.l.b16 %v1470
    %v1594 = vunpack.c.h.b16 %v1470
    %v1595 = vunpack.c.l.b16 %v1471
    %v1596 = vunpack.c.l.b16 %v1472
    %v1597 = vunpack.c.h.b16 %v1472
    %v1598 = vunpack.c.l.b16 %v1473
    %v1599 = vunpack.c.h.b16 %v1473
    %v1600 = vunpack.c.l.b16 %v1474
    %v1601 = vunpack.c.l.b16 %v1475
    %v1602 = vunpack.c.h.b16 %v1475
    %v1603 = vunpack.c.l.b16 %v1476
    %v1604 = vunpack.c.h.b16 %v1476
    %v1605 = vunpack.c.l.b16 %v1477
    %v1606 = vpack.c.b16 %v1531, %v1526
    %v1607 = vpack.c.b16 %v1532, %v1527
    %v1608 = vpack.c.b16 %v1533, %v1528
    %v1609 = vpack.c.b16 %v1534, %v1529
    %v1610 = vpack.c.b16 %v1535, %v1530
    %v1611 = vpack.c.b16 %v1541, %v1536
    %v1612 = vpack.c.b16 %v1542, %v1537
    %v1613 = vpack.c.b16 %v1543, %v1538
    %v1614 = vpack.c.b16 %v1544, %v1539
    %v1615 = vpack.c.b16 %v1545, %v1540
    %v1616 = vpack.c.b16 %v1551, %v1546
    %v1617 = vpack.c.b16 %v1552, %v1547
    %v1618 = vpack.c.b16 %v1553, %v1548
    %v1619 = vpack.c.b16 %v1554, %v1549
    %v1620 = vpack.c.b16 %v1555, %v1550
    %v1621 = vpack.c.b16 %v1561, %v1556
    %v1622 = vpack.c.b16 %v1562, %v1557
    %v1623 = vpack.c.b16 %v1563, %v1558
    %v1624 = vpack.c.b16 %v1564, %v1559
    %v1625 = vpack.c.b16 %v1565, %v1560
    %v1626 = vpack.c.b16 %v1571, %v1566
    %v1627 = vpack.c.b16 %v1572, %v1567
    %v1628 = vpack.c.b16 %v1573, %v1568
    %v1629 = vpack.c.b16 %v1574, %v1569
    %v1630 = vpack.c.b16 %v1575, %v1570
    %v1631 = vpack.c.b16 %v1581, %v1576
    %v1632 = vpack.c.b16 %v1582, %v1577
    %v1633 = vpack.c.b16 %v1583, %v1578
    %v1634 = vpack.c.b16 %v1584, %v1579
    %v1635 = vpack.c.b16 %v1585, %v1580
    %v1636 = vpack.c.b16 %v1591, %v1586
    %v1637 = vpack.c.b16 %v1592, %v1587
    %v1638 = vpack.c.b16 %v1593, %v1588
    %v1639 = vpack.c.b16 %v1594, %v1589
    %v1640 = vpack.c.b16 %v1595, %v1590
    %v1641 = vpack.c.b16 %v1601, %v1596
    %v1642 = vpack.c.b16 %v1602, %v1597
    %v1643 = vpack.c.b16 %v1603, %v1598
    %v1644 = vpack.c.b16 %v1604, %v1599
    %v1645 = vpack.c.b16 %v1605, %v1600
    %1686 = vmatprep.subr.bf16.mxu0 %v1607
    %1687 = vmatpush1.bf16.msra.mxu0 %v1606
    %1688 = vmatprep.subr.bf16.mxu0 %v1612
    %1689 = vmatpush1.bf16.msra.mxu0 %v1611
    %1690 = vmatprep.subr.bf16.mxu0 %v1617
    %1691 = vmatpush1.bf16.msra.mxu0 %v1616
    %1692 = vmatprep.subr.bf16.mxu0 %v1622
    %1693 = vmatpush1.bf16.msra.mxu0 %v1621
    %1694 = vmatprep.subr.bf16.mxu0 %v1627
    %1695 = vmatpush1.bf16.msra.mxu0 %v1626
    %1696 = vmatprep.subr.bf16.mxu0 %v1632
    %1697 = vmatpush1.bf16.msra.mxu0 %v1631
    %1698 = vmatprep.subr.bf16.mxu0 %v1637
    %1699 = vmatpush1.bf16.msra.mxu0 %v1636
    %1700 = vmatprep.subr.bf16.mxu0 %v1642
    %1701 = vmatpush1.bf16.msra.mxu0 %v1641
    %1702 = vmatprep.subr.bf16.mxu0 0
    %1703 = vmatpush1.bf16.msra.mxu0 0
    %1704 = vmatprep.subr.bf16.mxu0 0
    %1705 = vmatpush1.bf16.msra.mxu0 0
    %1706 = vmatprep.subr.bf16.mxu0 0
    %1707 = vmatpush1.bf16.msra.mxu0 0
    %1708 = vmatprep.subr.bf16.mxu0 0
    %1709 = vmatpush1.bf16.msra.mxu0 0
    %1710 = vmatprep.subr.bf16.mxu0 0
    %1711 = vmatpush1.bf16.msra.mxu0 0
    %1712 = vmatprep.subr.bf16.mxu0 0
    %1713 = vmatpush1.bf16.msra.mxu0 0
    %1714 = vmatprep.subr.bf16.mxu0 0
    %1715 = vmatpush1.bf16.msra.mxu0 0
    %1716 = vmatprep.subr.bf16.mxu0 0
    %1717 = vmatpush1.bf16.msra.mxu0 0
    %1718 = vmatprep.mubr.bf16.mxu0 0
    %1719 = vmatmul.mubr.bf16.gmra.mrb[0].mxu0 %v1428
    %v1720 = vpop.f32.mrb[0].mxu0
    %v1721 = vadd.f32 0.0, %v1720
    %v1722 = vpop.f32.mrb[0].mxu0
    %v1723 = vadd.f32 0.0, %v1722
    %v1724 = vpop.f32.mrb[0].mxu0
    %v1725 = vadd.f32 0.0, %v1724
    %v1726 = vpop.f32.mrb[0].mxu0
    %v1727 = vadd.f32 0.0, %v1726
    %1728 = vdwg.mxu0
    %1729 = vmatprep.subr.bf16.mxu0 %v1609
    %1730 = vmatpush1.bf16.msra.mxu0 %v1608
    %1731 = vmatprep.subr.bf16.mxu0 %v1614
    %1732 = vmatpush1.bf16.msra.mxu0 %v1613
    %1733 = vmatprep.subr.bf16.mxu0 %v1619
    %1734 = vmatpush1.bf16.msra.mxu0 %v1618
    %1735 = vmatprep.subr.bf16.mxu0 %v1624
    %1736 = vmatpush1.bf16.msra.mxu0 %v1623
    %1737 = vmatprep.subr.bf16.mxu0 %v1629
    %1738 = vmatpush1.bf16.msra.mxu0 %v1628
    %1739 = vmatprep.subr.bf16.mxu0 %v1634
    %1740 = vmatpush1.bf16.msra.mxu0 %v1633
    %1741 = vmatprep.subr.bf16.mxu0 %v1639
    %1742 = vmatpush1.bf16.msra.mxu0 %v1638
    %1743 = vmatprep.subr.bf16.mxu0 %v1644
    %1744 = vmatpush1.bf16.msra.mxu0 %v1643
    %1745 = vmatprep.subr.bf16.mxu0 0
    %1746 = vmatpush1.bf16.msra.mxu0 0
    %1747 = vmatprep.subr.bf16.mxu0 0
    %1748 = vmatpush1.bf16.msra.mxu0 0
    %1749 = vmatprep.subr.bf16.mxu0 0
    %1750 = vmatpush1.bf16.msra.mxu0 0
    %1751 = vmatprep.subr.bf16.mxu0 0
    %1752 = vmatpush1.bf16.msra.mxu0 0
    %1753 = vmatprep.subr.bf16.mxu0 0
    %1754 = vmatpush1.bf16.msra.mxu0 0
    %1755 = vmatprep.subr.bf16.mxu0 0
    %1756 = vmatpush1.bf16.msra.mxu0 0
    %1757 = vmatprep.subr.bf16.mxu0 0
    %1758 = vmatpush1.bf16.msra.mxu0 0
    %1759 = vmatprep.subr.bf16.mxu0 0
    %1760 = vmatpush1.bf16.msra.mxu0 0
    %1761 = vmatprep.mubr.bf16.mxu0 0
    %1762 = vmatmul.mubr.bf16.gmra.mrb[0].mxu0 %v1428
    %v1763 = vpop.f32.mrb[0].mxu0
    %v1764 = vadd.f32 0.0, %v1763
    %v1765 = vpop.f32.mrb[0].mxu0
    %v1766 = vadd.f32 0.0, %v1765
    %v1767 = vpop.f32.mrb[0].mxu0
    %v1768 = vadd.f32 0.0, %v1767
    %v1769 = vpop.f32.mrb[0].mxu0
    %v1770 = vadd.f32 0.0, %v1769
    %1771 = vdwg.mxu0
    %1772 = vmatprep.subr.bf16.mxu0 0
    %1773 = vmatpush1.bf16.msra.mxu0 %v1610
    %1774 = vmatprep.subr.bf16.mxu0 0
    %1775 = vmatpush1.bf16.msra.mxu0 %v1615
    %1776 = vmatprep.subr.bf16.mxu0 0
    %1777 = vmatpush1.bf16.msra.mxu0 %v1620
    %1778 = vmatprep.subr.bf16.mxu0 0
    %1779 = vmatpush1.bf16.msra.mxu0 %v1625
    %1780 = vmatprep.subr.bf16.mxu0 0
    %1781 = vmatpush1.bf16.msra.mxu0 %v1630
    %1782 = vmatprep.subr.bf16.mxu0 0
    %1783 = vmatpush1.bf16.msra.mxu0 %v1635
    %1784 = vmatprep.subr.bf16.mxu0 0
    %1785 = vmatpush1.bf16.msra.mxu0 %v1640
    %1786 = vmatprep.subr.bf16.mxu0 0
    %1787 = vmatpush1.bf16.msra.mxu0 %v1645
    %1788 = vmatprep.subr.bf16.mxu0 0
    %1789 = vmatpush1.bf16.msra.mxu0 0
    %1790 = vmatprep.subr.bf16.mxu0 0
    %1791 = vmatpush1.bf16.msra.mxu0 0
    %1792 = vmatprep.subr.bf16.mxu0 0
    %1793 = vmatpush1.bf16.msra.mxu0 0
    %1794 = vmatprep.subr.bf16.mxu0 0
    %1795 = vmatpush1.bf16.msra.mxu0 0
    %1796 = vmatprep.subr.bf16.mxu0 0
    %1797 = vmatpush1.bf16.msra.mxu0 0
    %1798 = vmatprep.subr.bf16.mxu0 0
    %1799 = vmatpush1.bf16.msra.mxu0 0
    %1800 = vmatprep.subr.bf16.mxu0 0
    %1801 = vmatpush1.bf16.msra.mxu0 0
    %1802 = vmatprep.subr.bf16.mxu0 0
    %1803 = vmatpush1.bf16.msra.mxu0 0
    %1804 = vmatprep.mubr.bf16.mxu0 0
    %1805 = vmatmul.mubr.bf16.gmra.mrb[0].mxu0 %v1428
    %v1806 = vpop.f32.mrb[0].mxu0
    %v1807 = vadd.f32 0.0, %v1806
    %v1808 = vpop.f32.mrb[0].mxu0
    %v1809 = vpop.f32.mrb[0].mxu0
    %v1810 = vadd.f32 0.0, %v1809
    %v1811 = vpop.f32.mrb[0].mxu0
    %1812 = vdwg.mxu0
    %v1813 = vmul.f32 %v1721, %v97
    %v1814 = vmul.f32 %v1725, %v98
    %v1815 = vmul.f32 %v1723, %v99
    %v1816 = vmul.f32 %v1727, %v100
    %v1817 = vadd.f32 %v1813, %v1815
    %v1818 = vadd.f32 %v1814, %v1816
    %v1819 = vmul.f32 %v1764, %v97
    %v1820 = vmul.f32 %v1768, %v98
    %v1821 = vmul.f32 %v1766, %v99
    %v1822 = vmul.f32 %v1770, %v100
    %v1823 = vadd.f32 %v1819, %v1821
    %v1824 = vadd.f32 %v1820, %v1822
    %v1825 = vmul.f32 %v1823, %v526
    %v1826 = vmul.f32 %v1824, %v526
    %v1827 = vmul.f32 %v1823, %v532
    %v1828 = vmul.f32 %v1824, %v532
    %v1829 = vmul.f32 %v1823, %v538
    %v1830 = vmul.f32 %v1824, %v538
    %v1831 = vmul.f32 %v1823, %v544
    %v1832 = vmul.f32 %v1824, %v544
    %v1833 = vpack.c.bf16 %v1826, %v1825
    %v1834 = vpack.c.bf16 %v1828, %v1827
    %v1835 = vpack.c.bf16 %v1830, %v1829
    %v1836 = vpack.c.bf16 %v1832, %v1831
    %v1837 = vmul.f32 %v1807, %v526
    %v1838 = vmul.f32 %v1810, %v526
    %v1839 = vmul.f32 %v1807, %v532
    %v1840 = vmul.f32 %v1810, %v532
    %v1841 = vmul.f32 %v1807, %v538
    %v1842 = vmul.f32 %v1810, %v538
    %v1843 = vmul.f32 %v1807, %v544
    %v1844 = vmul.f32 %v1810, %v544
    %v1845 = vpack.c.bf16 %v1838, %v1837
    %v1846 = vpack.c.bf16 %v1840, %v1839
    %v1847 = vpack.c.bf16 %v1842, %v1841
    %v1848 = vpack.c.bf16 %v1844, %v1843
    %v1849 = vpack.c.bf16 %v1818, %v1817
    %1850 = vmatprep.subr.bf16.mxu0 0
    %1851 = vmatpush1.bf16.xpose.msra.mxu0 %v1833
    %1852 = vmatprep.subr.bf16.mxu0 0
    %1853 = vmatpush1.bf16.xpose.msra.mxu0 %v1834
    %1854 = vmatprep.subr.bf16.mxu0 0
    %1855 = vmatpush1.bf16.xpose.msra.mxu0 %v1835
    %1856 = vmatprep.subr.bf16.mxu0 0
    %1857 = vmatpush1.bf16.xpose.msra.mxu0 %v1836
    %1858 = vmatprep.subr.bf16.mxu0 0
    %1859 = vmatpush1.bf16.xpose.msra.mxu0 0
    %1860 = vmatprep.subr.bf16.mxu0 0
    %1861 = vmatpush1.bf16.xpose.msra.mxu0 0
    %1862 = vmatprep.subr.bf16.mxu0 0
    %1863 = vmatpush1.bf16.xpose.msra.mxu0 0
    %1864 = vmatprep.subr.bf16.mxu0 0
    %1865 = vmatpush1.bf16.xpose.msra.mxu0 0
    %1866 = vmatprep.subr.bf16.mxu0 0
    %1867 = vmatpush1.bf16.xpose.msra.mxu0 0
    %1868 = vmatprep.subr.bf16.mxu0 0
    %1869 = vmatpush1.bf16.xpose.msra.mxu0 0
    %1870 = vmatprep.subr.bf16.mxu0 0
    %1871 = vmatpush1.bf16.xpose.msra.mxu0 0
    %1872 = vmatprep.subr.bf16.mxu0 0
    %1873 = vmatpush1.bf16.xpose.msra.mxu0 0
    %1874 = vmatprep.subr.bf16.mxu0 0
    %1875 = vmatpush1.bf16.xpose.msra.mxu0 0
    %1876 = vmatprep.subr.bf16.mxu0 0
    %1877 = vmatpush1.bf16.xpose.msra.mxu0 0
    %1878 = vmatprep.subr.bf16.mxu0 0
    %1879 = vmatpush1.bf16.xpose.msra.mxu0 0
    %1880 = vmatprep.subr.bf16.mxu0 0
    %1881 = vmatpush1.bf16.xpose.msra.mxu0 0
    %1882 = vmatprep.mubr.bf16.mxu0 0
    %1883 = vmatmul.mubr.bf16.gmra.mrb[0].mxu0 %v1849
    %v1884 = vpop.f32.mrb[0].mxu0
    %v1885 = vadd.f32 0.0, %v1884
    %v1886 = vpop.f32.mrb[0].mxu0
    %v1887 = vpop.f32.mrb[0].mxu0
    %v1888 = vadd.f32 0.0, %v1887
    %v1889 = vpop.f32.mrb[0].mxu0
    %1890 = vdwg.mxu0
    %v1891 = vmul.f32 %v1885, 0.17677669
    %v1892 = vmul.f32 %v1888, 0.17677669
    %v1893 = vadd.f32 %v1891, %v95
    %v1894 = vadd.f32 %v1892, %v96
    %v1895 = vsel %vm609, %v1893, -inf
    %1896 = vmax.xlane.f32.xlu0 %v1895
    %v1897 = vpop.xlane.xlu0 %1896
    %v1898 = vsel %vm609, %v1894, -inf
    %1899 = vmax.xlane.f32.xlu0 %v1898
    %v1900 = vpop.xlane.xlu0 %1899
    %v1901 = vsub.f32 %v1893, %v1897
    %v1902 = vsub.f32 %v1894, %v1900
    %v1903 = vmul.f32 %v1901, 1.442695
    %v1904 = vpow.pop %v1903
    %v1905 = vmul.f32 %v1902, 1.442695
    %v1906 = vpow.pop %v1905
    %v1907 = vsel %vm609, %v1904, 0.0
    %1908 = vadd.xlane.f32.xlu0 %v1907
    %v1909 = vpop.xlane.xlu0 %1908
    %v1910 = vsel %vm609, %v1906, 0.0
    %1911 = vadd.xlane.f32.xlu0 %v1910
    %v1912 = vpop.xlane.xlu0 %1911
    %v1913 = vrcp.pop %v1909
    %v1914 = vrcp.pop %v1912
    %v1915 = vmul.f32 %v1904, %v1913
    %v1916 = vmul.f32 %v1906, %v1914
    %v1917 = vsel %vm632, %v1893, -inf
    %1918 = vmax.xlane.f32.xlu0 %v1917
    %v1919 = vpop.xlane.xlu0 %1918
    %v1920 = vsel %vm632, %v1894, -inf
    %1921 = vmax.xlane.f32.xlu0 %v1920
    %v1922 = vpop.xlane.xlu0 %1921
    %v1923 = vsub.f32 %v1893, %v1919
    %v1924 = vsub.f32 %v1894, %v1922
    %v1925 = vmul.f32 %v1923, 1.442695
    %v1926 = vpow.pop %v1925
    %v1927 = vmul.f32 %v1924, 1.442695
    %v1928 = vpow.pop %v1927
    %1931 = vrot.lane.b32.xlu0 %v1926, 112
    %v1932 = vpop.permute.xlu0 %1931
    %1933 = vrot.lane.b32.xlu0 %v1928, 112
    %v1934 = vpop.permute.xlu0 %1933
    %v1937 = vsel %vm609, %v1932, 0.0
    %1938 = vadd.xlane.f32.xlu0 %v1937
    %v1939 = vpop.xlane.xlu0 %1938
    %v1940 = vsel %vm609, %v1934, 0.0
    %1941 = vadd.xlane.f32.xlu0 %v1940
    %v1942 = vpop.xlane.xlu0 %1941
    %v1943 = vrcp.pop %v1939
    %v1944 = vrcp.pop %v1942
    %v1945 = vmul.f32 %v1926, %v1943
    %v1946 = vmul.f32 %v1928, %v1944
    %v1947 = vsel %vm663, %v1893, -inf
    %1948 = vmax.xlane.f32.xlu0 %v1947
    %v1949 = vpop.xlane.xlu0 %1948
    %v1950 = vsel %vm663, %v1894, -inf
    %1951 = vmax.xlane.f32.xlu0 %v1950
    %v1952 = vpop.xlane.xlu0 %1951
    %v1953 = vsub.f32 %v1893, %v1949
    %v1954 = vsub.f32 %v1894, %v1952
    %v1955 = vmul.f32 %v1953, 1.442695
    %v1956 = vpow.pop %v1955
    %v1957 = vmul.f32 %v1954, 1.442695
    %v1958 = vpow.pop %v1957
    %1961 = vrot.lane.b32.xlu0 %v1956, 96
    %v1962 = vpop.permute.xlu0 %1961
    %1963 = vrot.lane.b32.xlu0 %v1958, 96
    %v1964 = vpop.permute.xlu0 %1963
    %v1967 = vsel %vm609, %v1962, 0.0
    %1968 = vadd.xlane.f32.xlu0 %v1967
    %v1969 = vpop.xlane.xlu0 %1968
    %v1970 = vsel %vm609, %v1964, 0.0
    %1971 = vadd.xlane.f32.xlu0 %v1970
    %v1972 = vpop.xlane.xlu0 %1971
    %v1973 = vrcp.pop %v1969
    %v1974 = vrcp.pop %v1972
    %v1975 = vmul.f32 %v1956, %v1973
    %v1976 = vmul.f32 %v1958, %v1974
    %v1977 = vsel %vm694, %v1893, -inf
    %1978 = vmax.xlane.f32.xlu0 %v1977
    %v1979 = vpop.xlane.xlu0 %1978
    %v1980 = vsel %vm694, %v1894, -inf
    %1981 = vmax.xlane.f32.xlu0 %v1980
    %v1982 = vpop.xlane.xlu0 %1981
    %v1983 = vsub.f32 %v1893, %v1979
    %v1984 = vsub.f32 %v1894, %v1982
    %v1985 = vmul.f32 %v1983, 1.442695
    %v1986 = vpow.pop %v1985
    %v1987 = vmul.f32 %v1984, 1.442695
    %v1988 = vpow.pop %v1987
    %1991 = vrot.lane.b32.xlu0 %v1986, 80
    %v1992 = vpop.permute.xlu0 %1991
    %1993 = vrot.lane.b32.xlu0 %v1988, 80
    %v1994 = vpop.permute.xlu0 %1993
    %v1997 = vsel %vm609, %v1992, 0.0
    %1998 = vadd.xlane.f32.xlu0 %v1997
    %v1999 = vpop.xlane.xlu0 %1998
    %v2000 = vsel %vm609, %v1994, 0.0
    %2001 = vadd.xlane.f32.xlu0 %v2000
    %v2002 = vpop.xlane.xlu0 %2001
    %v2003 = vrcp.pop %v1999
    %v2004 = vrcp.pop %v2002
    %v2005 = vmul.f32 %v1986, %v2003
    %v2006 = vmul.f32 %v1988, %v2004
    %v2007 = vsel %vm609, %v1915, %v1945
    %v2008 = vsel %vm609, %v1916, %v1946
    %v2009 = vsel %vm727, %v2007, %v1975
    %v2010 = vsel %vm727, %v2008, %v1976
    %v2011 = vsel %vm730, %v2009, %v2005
    %v2012 = vsel %vm730, %v2010, %v2006
    %v2013 = vpack.c.bf16 %v2012, %v2011
    %v2015 = vsel %vm734, %v2013, 0
    %2017 = vmatprep.subr.bf16.mxu0 0
    %2018 = vmatpush1.bf16.msra.mxu0 %v1845
    %2019 = vmatprep.subr.bf16.mxu0 0
    %2020 = vmatpush1.bf16.msra.mxu0 %v1846
    %2021 = vmatprep.subr.bf16.mxu0 0
    %2022 = vmatpush1.bf16.msra.mxu0 %v1847
    %2023 = vmatprep.subr.bf16.mxu0 0
    %2024 = vmatpush1.bf16.msra.mxu0 %v1848
    %2025 = vmatprep.subr.bf16.mxu0 0
    %2026 = vmatpush1.bf16.msra.mxu0 0
    %2027 = vmatprep.subr.bf16.mxu0 0
    %2028 = vmatpush1.bf16.msra.mxu0 0
    %2029 = vmatprep.subr.bf16.mxu0 0
    %2030 = vmatpush1.bf16.msra.mxu0 0
    %2031 = vmatprep.subr.bf16.mxu0 0
    %2032 = vmatpush1.bf16.msra.mxu0 0
    %2033 = vmatprep.subr.bf16.mxu0 0
    %2034 = vmatpush1.bf16.msra.mxu0 0
    %2035 = vmatprep.subr.bf16.mxu0 0
    %2036 = vmatpush1.bf16.msra.mxu0 0
    %2037 = vmatprep.subr.bf16.mxu0 0
    %2038 = vmatpush1.bf16.msra.mxu0 0
    %2039 = vmatprep.subr.bf16.mxu0 0
    %2040 = vmatpush1.bf16.msra.mxu0 0
    %2041 = vmatprep.subr.bf16.mxu0 0
    %2042 = vmatpush1.bf16.msra.mxu0 0
    %2043 = vmatprep.subr.bf16.mxu0 0
    %2044 = vmatpush1.bf16.msra.mxu0 0
    %2045 = vmatprep.subr.bf16.mxu0 0
    %2046 = vmatpush1.bf16.msra.mxu0 0
    %2047 = vmatprep.subr.bf16.mxu0 0
    %2048 = vmatpush1.bf16.msra.mxu0 0
    %2049 = vmatprep.mubr.bf16.mxu0 0
    %2050 = vmatmul.mubr.bf16.gmra.mrb[0].mxu0 %v2015
    %v2051 = vpop.f32.mrb[0].mxu0
    %v2052 = vadd.f32 0.0, %v2051
    %v2053 = vpop.f32.mrb[0].mxu0
    %v2054 = vpop.f32.mrb[0].mxu0
    %v2055 = vadd.f32 0.0, %v2054
    %v2056 = vpop.f32.mrb[0].mxu0
    %2057 = vdwg.mxu0
    %v2058 = vpack.c.bf16 %v2055, %v2052
    %s2059 = scalar_lea.vmem %s7, 64
    %v2060 = vld [vmem:[%s2059] sm:$0xf]
    %v2061 = vld [vmem:[%s2059 + $0x4] sm:$0xf]
    %v2062 = vld [vmem:[%s2059 + $0x8] sm:$0xf]
    %v2063 = vld [vmem:[%s2059 + $0xc] sm:$0xf]
    %v2064 = vld [vmem:[%s2059 + $0x10] sm:$0xf]
    %v2065 = vld [vmem:[%s2059 + $0x14] sm:$0xf]
    %v2066 = vld [vmem:[%s2059 + $0x18] sm:$0xf]
    %v2067 = vld [vmem:[%s2059 + $0x1c] sm:$0xf]
    %v2068 = vld [vmem:[%s2059 + $0x20] sm:$0xf]
    %v2069 = vld [vmem:[%s2059 + $0x24] sm:$0xf]
    %v2070 = vld [vmem:[%s2059 + $0x28] sm:$0xf]
    %v2071 = vld [vmem:[%s2059 + $0x2c] sm:$0xf]
    %v2072 = vld [vmem:[%s2059 + $0x30] sm:$0xf]
    %v2073 = vld [vmem:[%s2059 + $0x34] sm:$0xf]
    %v2074 = vld [vmem:[%s2059 + $0x38] sm:$0xf]
    %v2075 = vld [vmem:[%s2059 + $0x3c] sm:$0xf]
    %v2092 = vunpack.c.l.b16 %v2060
    %v2093 = vunpack.c.l.b16 %v2061
    %v2094 = vunpack.c.l.b16 %v2062
    %v2095 = vunpack.c.l.b16 %v2063
    %v2096 = vunpack.c.l.b16 %v2064
    %v2097 = vunpack.c.l.b16 %v2065
    %v2098 = vunpack.c.l.b16 %v2066
    %v2099 = vunpack.c.l.b16 %v2067
    %v2100 = vunpack.c.l.b16 %v2068
    %v2101 = vunpack.c.l.b16 %v2069
    %v2102 = vunpack.c.l.b16 %v2070
    %v2103 = vunpack.c.l.b16 %v2071
    %v2104 = vunpack.c.l.b16 %v2072
    %v2105 = vunpack.c.l.b16 %v2073
    %v2106 = vunpack.c.l.b16 %v2074
    %v2107 = vunpack.c.l.b16 %v2075
    %v2108 = vpack.c.b16 %v2093, %v2092
    %v2109 = vpack.c.b16 %v2095, %v2094
    %v2110 = vpack.c.b16 %v2097, %v2096
    %v2111 = vpack.c.b16 %v2099, %v2098
    %v2112 = vpack.c.b16 %v2101, %v2100
    %v2113 = vpack.c.b16 %v2103, %v2102
    %v2114 = vpack.c.b16 %v2105, %v2104
    %v2115 = vpack.c.b16 %v2107, %v2106
    %2124 = vmatprep.subr.bf16.mxu0 0
    %2125 = vmatpush1.bf16.msra.mxu0 %v2108
    %2126 = vmatprep.subr.bf16.mxu0 0
    %2127 = vmatpush1.bf16.msra.mxu0 %v2109
    %2128 = vmatprep.subr.bf16.mxu0 0
    %2129 = vmatpush1.bf16.msra.mxu0 %v2110
    %2130 = vmatprep.subr.bf16.mxu0 0
    %2131 = vmatpush1.bf16.msra.mxu0 %v2111
    %2132 = vmatprep.subr.bf16.mxu0 0
    %2133 = vmatpush1.bf16.msra.mxu0 %v2112
    %2134 = vmatprep.subr.bf16.mxu0 0
    %2135 = vmatpush1.bf16.msra.mxu0 %v2113
    %2136 = vmatprep.subr.bf16.mxu0 0
    %2137 = vmatpush1.bf16.msra.mxu0 %v2114
    %2138 = vmatprep.subr.bf16.mxu0 0
    %2139 = vmatpush1.bf16.msra.mxu0 %v2115
    %2140 = vmatprep.subr.bf16.mxu0 0
    %2141 = vmatpush1.bf16.msra.mxu0 0
    %2142 = vmatprep.subr.bf16.mxu0 0
    %2143 = vmatpush1.bf16.msra.mxu0 0
    %2144 = vmatprep.subr.bf16.mxu0 0
    %2145 = vmatpush1.bf16.msra.mxu0 0
    %2146 = vmatprep.subr.bf16.mxu0 0
    %2147 = vmatpush1.bf16.msra.mxu0 0
    %2148 = vmatprep.subr.bf16.mxu0 0
    %2149 = vmatpush1.bf16.msra.mxu0 0
    %2150 = vmatprep.subr.bf16.mxu0 0
    %2151 = vmatpush1.bf16.msra.mxu0 0
    %2152 = vmatprep.subr.bf16.mxu0 0
    %2153 = vmatpush1.bf16.msra.mxu0 0
    %2154 = vmatprep.subr.bf16.mxu0 0
    %2155 = vmatpush1.bf16.msra.mxu0 0
    %2156 = vmatprep.mubr.bf16.mxu0 0
    %2157 = vmatmul.mubr.bf16.gmra.mrb[0].mxu0 %v2058
    %v2158 = vpop.f32.mrb[0].mxu0
    %v2159 = vadd.f32 0.0, %v2158
    %v2160 = vpop.f32.mrb[0].mxu0
    %v2161 = vpop.f32.mrb[0].mxu0
    %v2162 = vadd.f32 0.0, %v2161
    %v2163 = vpop.f32.mrb[0].mxu0
    %2164 = vdwg.mxu0
    %v2165 = vadd.f32 %v1401, %v2159
    %v2166 = vadd.f32 %v1402, %v2162
    %s2167 = scalar_lea.vmem %s8, 1
    %v2168 = vld [vmem:[%s2167] sm:$0x1]
    %v2169 = vmul.f32 %v2165, %v2165
    %v2170 = vmul.f32 %v2166, %v2166
    %2171 = vadd.xlane.f32.xlu0 %v2169
    %v2172 = vpop.xlane.xlu0 %2171
    %2173 = vadd.xlane.f32.xlu0 %v2170
    %v2174 = vpop.xlane.xlu0 %2173
    %v2175 = vmul.f32 %v2172, %v109
    %v2176 = vmul.f32 %v2174, %v109
    %v2177 = vadd.f32 %v2175, 1e-06
    %v2178 = vadd.f32 %v2176, 1e-06
    %v2179 = vrsqrt.pop %v2177
    %v2180 = vrsqrt.pop %v2178
    %v2181 = vmul.f32 %v2165, %v2179
    %v2182 = vmul.f32 %v2166, %v2180
    %v2183 = vadd.f32 %v2168, 1.0
    %v2185 = vlaneseq
    %v2186 = vshrl.u32 %v2185, 7
    %v2187 = vsub.s32 0, %v2186
    %v2188 = vrot.slane %v2183, %v2187
    %v2190 = vmul.f32 %v2181, %v2188
    %v2191 = vmul.f32 %v2182, %v2188
    %v2192 = vpack.c.bf16 %v2191, %v2190
    %s2193 = scalar_lea.vmem [#allocation2], 256
    %v2194 = vld [vmem:[%s2193] sm:$0xff]
    %v2195 = vld [vmem:[%s2193 + $0x8] sm:$0xff]
    %v2196 = vld [vmem:[%s2193 + $0x10] sm:$0xff]
    %v2197 = vld [vmem:[%s2193 + $0x18] sm:$0xff]
    %v2198 = vld [vmem:[%s2193 + $0x20] sm:$0xff]
    %v2199 = vld [vmem:[%s2193 + $0x28] sm:$0xff]
    %v2200 = vld [vmem:[%s2193 + $0x30] sm:$0xff]
    %v2201 = vld [vmem:[%s2193 + $0x38] sm:$0xff]
    %v2202 = vld [vmem:[%s2193 + $0x40] sm:$0xff]
    %v2203 = vld [vmem:[%s2193 + $0x48] sm:$0xff]
    %v2204 = vld [vmem:[%s2193 + $0x50] sm:$0xff]
    %v2205 = vld [vmem:[%s2193 + $0x58] sm:$0xff]
    %v2206 = vld [vmem:[%s2193 + $0x60] sm:$0xff]
    %v2207 = vld [vmem:[%s2193 + $0x68] sm:$0xff]
    %v2208 = vld [vmem:[%s2193 + $0x70] sm:$0xff]
    %v2209 = vld [vmem:[%s2193 + $0x78] sm:$0xff]
    %v2210 = vld [vmem:[%s2193 + $0x80] sm:$0xff]
    %v2211 = vld [vmem:[%s2193 + $0x88] sm:$0xff]
    %v2212 = vld [vmem:[%s2193 + $0x90] sm:$0xff]
    %v2213 = vld [vmem:[%s2193 + $0x98] sm:$0xff]
    %v2214 = vld [vmem:[%s2193 + $0xa0] sm:$0xff]
    %v2215 = vld [vmem:[%s2193 + $0xa8] sm:$0xff]
    %v2216 = vld [vmem:[%s2193 + $0xb0] sm:$0xff]
    %v2217 = vld [vmem:[%s2193 + $0xb8] sm:$0xff]
    %v2218 = vld [vmem:[%s2193 + $0xc0] sm:$0xff]
    %v2219 = vld [vmem:[%s2193 + $0xc8] sm:$0xff]
    %v2220 = vld [vmem:[%s2193 + $0xd0] sm:$0xff]
    %v2221 = vld [vmem:[%s2193 + $0xd8] sm:$0xff]
    %v2222 = vld [vmem:[%s2193 + $0xe0] sm:$0xff]
    %v2223 = vld [vmem:[%s2193 + $0xe8] sm:$0xff]
    %v2224 = vld [vmem:[%s2193 + $0xf0] sm:$0xff]
    %v2225 = vld [vmem:[%s2193 + $0xf8] sm:$0xff]
    %v2258 = vunpack.c.l.b16 %v2194
    %v2259 = vunpack.c.h.b16 %v2194
    %v2260 = vunpack.c.l.b16 %v2195
    %v2261 = vunpack.c.h.b16 %v2195
    %v2262 = vunpack.c.l.b16 %v2196
    %v2263 = vunpack.c.h.b16 %v2196
    %v2264 = vunpack.c.l.b16 %v2197
    %v2265 = vunpack.c.h.b16 %v2197
    %v2266 = vunpack.c.l.b16 %v2198
    %v2267 = vunpack.c.h.b16 %v2198
    %v2268 = vunpack.c.l.b16 %v2199
    %v2269 = vunpack.c.h.b16 %v2199
    %v2270 = vunpack.c.l.b16 %v2200
    %v2271 = vunpack.c.h.b16 %v2200
    %v2272 = vunpack.c.l.b16 %v2201
    %v2273 = vunpack.c.h.b16 %v2201
    %v2274 = vunpack.c.l.b16 %v2202
    %v2275 = vunpack.c.h.b16 %v2202
    %v2276 = vunpack.c.l.b16 %v2203
    %v2277 = vunpack.c.h.b16 %v2203
    %v2278 = vunpack.c.l.b16 %v2204
    %v2279 = vunpack.c.h.b16 %v2204
    %v2280 = vunpack.c.l.b16 %v2205
    %v2281 = vunpack.c.h.b16 %v2205
    %v2282 = vunpack.c.l.b16 %v2206
    %v2283 = vunpack.c.h.b16 %v2206
    %v2284 = vunpack.c.l.b16 %v2207
    %v2285 = vunpack.c.h.b16 %v2207
    %v2286 = vunpack.c.l.b16 %v2208
    %v2287 = vunpack.c.h.b16 %v2208
    %v2288 = vunpack.c.l.b16 %v2209
    %v2289 = vunpack.c.h.b16 %v2209
    %v2290 = vunpack.c.l.b16 %v2210
    %v2291 = vunpack.c.h.b16 %v2210
    %v2292 = vunpack.c.l.b16 %v2211
    %v2293 = vunpack.c.h.b16 %v2211
    %v2294 = vunpack.c.l.b16 %v2212
    %v2295 = vunpack.c.h.b16 %v2212
    %v2296 = vunpack.c.l.b16 %v2213
    %v2297 = vunpack.c.h.b16 %v2213
    %v2298 = vunpack.c.l.b16 %v2214
    %v2299 = vunpack.c.h.b16 %v2214
    %v2300 = vunpack.c.l.b16 %v2215
    %v2301 = vunpack.c.h.b16 %v2215
    %v2302 = vunpack.c.l.b16 %v2216
    %v2303 = vunpack.c.h.b16 %v2216
    %v2304 = vunpack.c.l.b16 %v2217
    %v2305 = vunpack.c.h.b16 %v2217
    %v2306 = vunpack.c.l.b16 %v2218
    %v2307 = vunpack.c.h.b16 %v2218
    %v2308 = vunpack.c.l.b16 %v2219
    %v2309 = vunpack.c.h.b16 %v2219
    %v2310 = vunpack.c.l.b16 %v2220
    %v2311 = vunpack.c.h.b16 %v2220
    %v2312 = vunpack.c.l.b16 %v2221
    %v2313 = vunpack.c.h.b16 %v2221
    %v2314 = vunpack.c.l.b16 %v2222
    %v2315 = vunpack.c.h.b16 %v2222
    %v2316 = vunpack.c.l.b16 %v2223
    %v2317 = vunpack.c.h.b16 %v2223
    %v2318 = vunpack.c.l.b16 %v2224
    %v2319 = vunpack.c.h.b16 %v2224
    %v2320 = vunpack.c.l.b16 %v2225
    %v2321 = vunpack.c.h.b16 %v2225
    %v2322 = vpack.c.b16 %v2262, %v2258
    %v2323 = vpack.c.b16 %v2263, %v2259
    %v2324 = vpack.c.b16 %v2264, %v2260
    %v2325 = vpack.c.b16 %v2265, %v2261
    %v2326 = vpack.c.b16 %v2270, %v2266
    %v2327 = vpack.c.b16 %v2271, %v2267
    %v2328 = vpack.c.b16 %v2272, %v2268
    %v2329 = vpack.c.b16 %v2273, %v2269
    %v2330 = vpack.c.b16 %v2278, %v2274
    %v2331 = vpack.c.b16 %v2279, %v2275
    %v2332 = vpack.c.b16 %v2280, %v2276
    %v2333 = vpack.c.b16 %v2281, %v2277
    %v2334 = vpack.c.b16 %v2286, %v2282
    %v2335 = vpack.c.b16 %v2287, %v2283
    %v2336 = vpack.c.b16 %v2288, %v2284
    %v2337 = vpack.c.b16 %v2289, %v2285
    %v2338 = vpack.c.b16 %v2294, %v2290
    %v2339 = vpack.c.b16 %v2295, %v2291
    %v2340 = vpack.c.b16 %v2296, %v2292
    %v2341 = vpack.c.b16 %v2297, %v2293
    %v2342 = vpack.c.b16 %v2302, %v2298
    %v2343 = vpack.c.b16 %v2303, %v2299
    %v2344 = vpack.c.b16 %v2304, %v2300
    %v2345 = vpack.c.b16 %v2305, %v2301
    %v2346 = vpack.c.b16 %v2310, %v2306
    %v2347 = vpack.c.b16 %v2311, %v2307
    %v2348 = vpack.c.b16 %v2312, %v2308
    %v2349 = vpack.c.b16 %v2313, %v2309
    %v2350 = vpack.c.b16 %v2318, %v2314
    %v2351 = vpack.c.b16 %v2319, %v2315
    %v2352 = vpack.c.b16 %v2320, %v2316
    %v2353 = vpack.c.b16 %v2321, %v2317
    %2386 = vmatprep.subr.bf16.mxu0 %v2323
    %2387 = vmatpush1.bf16.msra.mxu0 %v2322
    %2388 = vmatprep.subr.bf16.mxu0 %v2327
    %2389 = vmatpush1.bf16.msra.mxu0 %v2326
    %2390 = vmatprep.subr.bf16.mxu0 %v2331
    %2391 = vmatpush1.bf16.msra.mxu0 %v2330
    %2392 = vmatprep.subr.bf16.mxu0 %v2335
    %2393 = vmatpush1.bf16.msra.mxu0 %v2334
    %2394 = vmatprep.subr.bf16.mxu0 %v2339
    %2395 = vmatpush1.bf16.msra.mxu0 %v2338
    %2396 = vmatprep.subr.bf16.mxu0 %v2343
    %2397 = vmatpush1.bf16.msra.mxu0 %v2342
    %2398 = vmatprep.subr.bf16.mxu0 %v2347
    %2399 = vmatpush1.bf16.msra.mxu0 %v2346
    %2400 = vmatprep.subr.bf16.mxu0 %v2351
    %2401 = vmatpush1.bf16.msra.mxu0 %v2350
    %2402 = vmatprep.subr.bf16.mxu0 0
    %2403 = vmatpush1.bf16.msra.mxu0 0
    %2404 = vmatprep.subr.bf16.mxu0 0
    %2405 = vmatpush1.bf16.msra.mxu0 0
    %2406 = vmatprep.subr.bf16.mxu0 0
    %2407 = vmatpush1.bf16.msra.mxu0 0
    %2408 = vmatprep.subr.bf16.mxu0 0
    %2409 = vmatpush1.bf16.msra.mxu0 0
    %2410 = vmatprep.subr.bf16.mxu0 0
    %2411 = vmatpush1.bf16.msra.mxu0 0
    %2412 = vmatprep.subr.bf16.mxu0 0
    %2413 = vmatpush1.bf16.msra.mxu0 0
    %2414 = vmatprep.subr.bf16.mxu0 0
    %2415 = vmatpush1.bf16.msra.mxu0 0
    %2416 = vmatprep.subr.bf16.mxu0 0
    %2417 = vmatpush1.bf16.msra.mxu0 0
    %2418 = vmatprep.mubr.bf16.mxu0 0
    %2419 = vmatmul.mubr.bf16.gmra.mrb[0].mxu0 %v2192
    %v2420 = vpop.f32.mrb[0].mxu0
    %v2421 = vadd.f32 0.0, %v2420
    %v2422 = vpop.f32.mrb[0].mxu0
    %v2423 = vadd.f32 0.0, %v2422
    %v2424 = vpop.f32.mrb[0].mxu0
    %v2425 = vadd.f32 0.0, %v2424
    %v2426 = vpop.f32.mrb[0].mxu0
    %v2427 = vadd.f32 0.0, %v2426
    %2428 = vdwg.mxu0
    %2429 = vmatprep.subr.bf16.mxu0 %v2325
    %2430 = vmatpush1.bf16.msra.mxu0 %v2324
    %2431 = vmatprep.subr.bf16.mxu0 %v2329
    %2432 = vmatpush1.bf16.msra.mxu0 %v2328
    %2433 = vmatprep.subr.bf16.mxu0 %v2333
    %2434 = vmatpush1.bf16.msra.mxu0 %v2332
    %2435 = vmatprep.subr.bf16.mxu0 %v2337
    %2436 = vmatpush1.bf16.msra.mxu0 %v2336
    %2437 = vmatprep.subr.bf16.mxu0 %v2341
    %2438 = vmatpush1.bf16.msra.mxu0 %v2340
    %2439 = vmatprep.subr.bf16.mxu0 %v2345
    %2440 = vmatpush1.bf16.msra.mxu0 %v2344
    %2441 = vmatprep.subr.bf16.mxu0 %v2349
    %2442 = vmatpush1.bf16.msra.mxu0 %v2348
    %2443 = vmatprep.subr.bf16.mxu0 %v2353
    %2444 = vmatpush1.bf16.msra.mxu0 %v2352
    %2445 = vmatprep.subr.bf16.mxu0 0
    %2446 = vmatpush1.bf16.msra.mxu0 0
    %2447 = vmatprep.subr.bf16.mxu0 0
    %2448 = vmatpush1.bf16.msra.mxu0 0
    %2449 = vmatprep.subr.bf16.mxu0 0
    %2450 = vmatpush1.bf16.msra.mxu0 0
    %2451 = vmatprep.subr.bf16.mxu0 0
    %2452 = vmatpush1.bf16.msra.mxu0 0
    %2453 = vmatprep.subr.bf16.mxu0 0
    %2454 = vmatpush1.bf16.msra.mxu0 0
    %2455 = vmatprep.subr.bf16.mxu0 0
    %2456 = vmatpush1.bf16.msra.mxu0 0
    %2457 = vmatprep.subr.bf16.mxu0 0
    %2458 = vmatpush1.bf16.msra.mxu0 0
    %2459 = vmatprep.subr.bf16.mxu0 0
    %2460 = vmatpush1.bf16.msra.mxu0 0
    %2461 = vmatprep.mubr.bf16.mxu0 0
    %2462 = vmatmul.mubr.bf16.gmra.mrb[0].mxu0 %v2192
    %v2463 = vpop.f32.mrb[0].mxu0
    %v2464 = vadd.f32 0.0, %v2463
    %v2465 = vpop.f32.mrb[0].mxu0
    %v2466 = vadd.f32 0.0, %v2465
    %v2467 = vpop.f32.mrb[0].mxu0
    %v2468 = vadd.f32 0.0, %v2467
    %v2469 = vpop.f32.mrb[0].mxu0
    %v2470 = vadd.f32 0.0, %v2469
    %2471 = vdwg.mxu0
    %v2472 = vmul.f32 %v2421, %v2421
    %v2473 = vmul.f32 %v2423, %v2423
    %v2474 = vmul.f32 %v2425, %v2425
    %v2475 = vmul.f32 %v2427, %v2427
    %v2476 = vmul.f32 %v2421, %v2472
    %v2477 = vmul.f32 %v2423, %v2473
    %v2478 = vmul.f32 %v2425, %v2474
    %v2479 = vmul.f32 %v2427, %v2475
    %v2480 = vmul.f32 %v2476, 0.044715
    %v2481 = vmul.f32 %v2477, 0.044715
    %v2482 = vmul.f32 %v2478, 0.044715
    %v2483 = vmul.f32 %v2479, 0.044715
    %v2484 = vadd.f32 %v2421, %v2480
    %v2485 = vadd.f32 %v2423, %v2481
    %v2486 = vadd.f32 %v2425, %v2482
    %v2487 = vadd.f32 %v2427, %v2483
    %v2488 = vmul.f32 %v2484, 0.7978846
    %v2489 = vmul.f32 %v2485, 0.7978846
    %v2490 = vmul.f32 %v2486, 0.7978846
    %v2491 = vmul.f32 %v2487, 0.7978846
    %v2492 = vtanh.pop %v2488
    %v2493 = vtanh.pop %v2489
    %v2494 = vtanh.pop %v2490
    %v2495 = vtanh.pop %v2491
    %v2496 = vadd.f32 %v2492, 1.0
    %v2497 = vadd.f32 %v2493, 1.0
    %v2498 = vadd.f32 %v2494, 1.0
    %v2499 = vadd.f32 %v2495, 1.0
    %v2500 = vmul.f32 %v2496, 0.5
    %v2501 = vmul.f32 %v2497, 0.5
    %v2502 = vmul.f32 %v2498, 0.5
    %v2503 = vmul.f32 %v2499, 0.5
    %v2504 = vmul.f32 %v2421, %v2500
    %v2505 = vmul.f32 %v2423, %v2501
    %v2506 = vmul.f32 %v2425, %v2502
    %v2507 = vmul.f32 %v2427, %v2503
    %v2508 = vmul.f32 %v2504, %v2464
    %v2509 = vmul.f32 %v2505, %v2466
    %v2510 = vmul.f32 %v2506, %v2468
    %v2511 = vmul.f32 %v2507, %v2470
    %v2512 = vpack.c.bf16 %v2510, %v2508
    %v2513 = vpack.c.bf16 %v2511, %v2509
    %s2514 = scalar_lea.vmem [#allocation5], 128
    %v2515 = vld [vmem:[%s2514] sm:$0xf]
    %v2516 = vld [vmem:[%s2514 + $0x4] sm:$0xf]
    %v2517 = vld [vmem:[%s2514 + $0x8] sm:$0xf]
    %v2518 = vld [vmem:[%s2514 + $0xc] sm:$0xf]
    %v2519 = vld [vmem:[%s2514 + $0x10] sm:$0xf]
    %v2520 = vld [vmem:[%s2514 + $0x14] sm:$0xf]
    %v2521 = vld [vmem:[%s2514 + $0x18] sm:$0xf]
    %v2522 = vld [vmem:[%s2514 + $0x1c] sm:$0xf]
    %v2523 = vld [vmem:[%s2514 + $0x20] sm:$0xf]
    %v2524 = vld [vmem:[%s2514 + $0x24] sm:$0xf]
    %v2525 = vld [vmem:[%s2514 + $0x28] sm:$0xf]
    %v2526 = vld [vmem:[%s2514 + $0x2c] sm:$0xf]
    %v2527 = vld [vmem:[%s2514 + $0x30] sm:$0xf]
    %v2528 = vld [vmem:[%s2514 + $0x34] sm:$0xf]
    %v2529 = vld [vmem:[%s2514 + $0x38] sm:$0xf]
    %v2530 = vld [vmem:[%s2514 + $0x3c] sm:$0xf]
    %v2531 = vld [vmem:[%s2514 + $0x40] sm:$0xf]
    %v2532 = vld [vmem:[%s2514 + $0x44] sm:$0xf]
    %v2533 = vld [vmem:[%s2514 + $0x48] sm:$0xf]
    %v2534 = vld [vmem:[%s2514 + $0x4c] sm:$0xf]
    %v2535 = vld [vmem:[%s2514 + $0x50] sm:$0xf]
    %v2536 = vld [vmem:[%s2514 + $0x54] sm:$0xf]
    %v2537 = vld [vmem:[%s2514 + $0x58] sm:$0xf]
    %v2538 = vld [vmem:[%s2514 + $0x5c] sm:$0xf]
    %v2539 = vld [vmem:[%s2514 + $0x60] sm:$0xf]
    %v2540 = vld [vmem:[%s2514 + $0x64] sm:$0xf]
    %v2541 = vld [vmem:[%s2514 + $0x68] sm:$0xf]
    %v2542 = vld [vmem:[%s2514 + $0x6c] sm:$0xf]
    %v2543 = vld [vmem:[%s2514 + $0x70] sm:$0xf]
    %v2544 = vld [vmem:[%s2514 + $0x74] sm:$0xf]
    %v2545 = vld [vmem:[%s2514 + $0x78] sm:$0xf]
    %v2546 = vld [vmem:[%s2514 + $0x7c] sm:$0xf]
    %v2579 = vunpack.c.l.b16 %v2515
    %v2580 = vunpack.c.l.b16 %v2516
    %v2581 = vunpack.c.l.b16 %v2517
    %v2582 = vunpack.c.l.b16 %v2518
    %v2583 = vunpack.c.l.b16 %v2519
    %v2584 = vunpack.c.l.b16 %v2520
    %v2585 = vunpack.c.l.b16 %v2521
    %v2586 = vunpack.c.l.b16 %v2522
    %v2587 = vunpack.c.l.b16 %v2523
    %v2588 = vunpack.c.l.b16 %v2524
    %v2589 = vunpack.c.l.b16 %v2525
    %v2590 = vunpack.c.l.b16 %v2526
    %v2591 = vunpack.c.l.b16 %v2527
    %v2592 = vunpack.c.l.b16 %v2528
    %v2593 = vunpack.c.l.b16 %v2529
    %v2594 = vunpack.c.l.b16 %v2530
    %v2595 = vunpack.c.l.b16 %v2531
    %v2596 = vunpack.c.l.b16 %v2532
    %v2597 = vunpack.c.l.b16 %v2533
    %v2598 = vunpack.c.l.b16 %v2534
    %v2599 = vunpack.c.l.b16 %v2535
    %v2600 = vunpack.c.l.b16 %v2536
    %v2601 = vunpack.c.l.b16 %v2537
    %v2602 = vunpack.c.l.b16 %v2538
    %v2603 = vunpack.c.l.b16 %v2539
    %v2604 = vunpack.c.l.b16 %v2540
    %v2605 = vunpack.c.l.b16 %v2541
    %v2606 = vunpack.c.l.b16 %v2542
    %v2607 = vunpack.c.l.b16 %v2543
    %v2608 = vunpack.c.l.b16 %v2544
    %v2609 = vunpack.c.l.b16 %v2545
    %v2610 = vunpack.c.l.b16 %v2546
    %v2611 = vpack.c.b16 %v2580, %v2579
    %v2612 = vpack.c.b16 %v2582, %v2581
    %v2613 = vpack.c.b16 %v2584, %v2583
    %v2614 = vpack.c.b16 %v2586, %v2585
    %v2615 = vpack.c.b16 %v2588, %v2587
    %v2616 = vpack.c.b16 %v2590, %v2589
    %v2617 = vpack.c.b16 %v2592, %v2591
    %v2618 = vpack.c.b16 %v2594, %v2593
    %v2619 = vpack.c.b16 %v2596, %v2595
    %v2620 = vpack.c.b16 %v2598, %v2597
    %v2621 = vpack.c.b16 %v2600, %v2599
    %v2622 = vpack.c.b16 %v2602, %v2601
    %v2623 = vpack.c.b16 %v2604, %v2603
    %v2624 = vpack.c.b16 %v2606, %v2605
    %v2625 = vpack.c.b16 %v2608, %v2607
    %v2626 = vpack.c.b16 %v2610, %v2609
    %2643 = vmatprep.subr.bf16.mxu0 0
    %2644 = vmatpush1.bf16.msra.mxu0 %v2611
    %2645 = vmatprep.subr.bf16.mxu0 0
    %2646 = vmatpush1.bf16.msra.mxu0 %v2612
    %2647 = vmatprep.subr.bf16.mxu0 0
    %2648 = vmatpush1.bf16.msra.mxu0 %v2613
    %2649 = vmatprep.subr.bf16.mxu0 0
    %2650 = vmatpush1.bf16.msra.mxu0 %v2614
    %2651 = vmatprep.subr.bf16.mxu0 0
    %2652 = vmatpush1.bf16.msra.mxu0 %v2615
    %2653 = vmatprep.subr.bf16.mxu0 0
    %2654 = vmatpush1.bf16.msra.mxu0 %v2616
    %2655 = vmatprep.subr.bf16.mxu0 0
    %2656 = vmatpush1.bf16.msra.mxu0 %v2617
    %2657 = vmatprep.subr.bf16.mxu0 0
    %2658 = vmatpush1.bf16.msra.mxu0 %v2618
    %2659 = vmatprep.subr.bf16.mxu0 0
    %2660 = vmatpush1.bf16.msra.mxu0 %v2619
    %2661 = vmatprep.subr.bf16.mxu0 0
    %2662 = vmatpush1.bf16.msra.mxu0 %v2620
    %2663 = vmatprep.subr.bf16.mxu0 0
    %2664 = vmatpush1.bf16.msra.mxu0 %v2621
    %2665 = vmatprep.subr.bf16.mxu0 0
    %2666 = vmatpush1.bf16.msra.mxu0 %v2622
    %2667 = vmatprep.subr.bf16.mxu0 0
    %2668 = vmatpush1.bf16.msra.mxu0 %v2623
    %2669 = vmatprep.subr.bf16.mxu0 0
    %2670 = vmatpush1.bf16.msra.mxu0 %v2624
    %2671 = vmatprep.subr.bf16.mxu0 0
    %2672 = vmatpush1.bf16.msra.mxu0 %v2625
    %2673 = vmatprep.subr.bf16.mxu0 0
    %2674 = vmatpush1.bf16.msra.mxu0 %v2626
    %2675 = vmatprep.mubr.bf16.mxu0 %v2513
    %2676 = vmatmul.mubr.bf16.gmra.mrb[0].mxu0 %v2512
    %v2677 = vpop.f32.mrb[0].mxu0
    %v2678 = vadd.f32 0.0, %v2677
    %v2679 = vpop.f32.mrb[0].mxu0
    %v2680 = vpop.f32.mrb[0].mxu0
    %v2681 = vadd.f32 0.0, %v2680
    %v2682 = vpop.f32.mrb[0].mxu0
    %2683 = vdwg.mxu0
    %v2684 = vadd.f32 %v2165, %v2678
    %v2685 = vadd.f32 %v2166, %v2681
    %v2686 = vld [vmem:[%s11] sm:$0x1]
    %v2687 = vmul.f32 %v2684, %v2684
    %v2688 = vmul.f32 %v2685, %v2685
    %2689 = vadd.xlane.f32.xlu0 %v2687
    %v2690 = vpop.xlane.xlu0 %2689
    %2691 = vadd.xlane.f32.xlu0 %v2688
    %v2692 = vpop.xlane.xlu0 %2691
    %v2693 = vmul.f32 %v2690, %v109
    %v2694 = vmul.f32 %v2692, %v109
    %v2695 = vadd.f32 %v2693, 1e-06
    %v2696 = vadd.f32 %v2694, 1e-06
    %v2697 = vrsqrt.pop %v2695
    %v2698 = vrsqrt.pop %v2696
    %v2699 = vmul.f32 %v2684, %v2697
    %v2700 = vmul.f32 %v2685, %v2698
    %v2701 = vadd.f32 %v2686, 1.0
    %v2703 = vlaneseq
    %v2704 = vshrl.u32 %v2703, 7
    %v2705 = vsub.s32 0, %v2704
    %v2706 = vrot.slane %v2701, %v2705
    %v2708 = vmul.f32 %v2699, %v2706
    %v2709 = vmul.f32 %v2700, %v2706
    %v2710 = vpack.c.bf16 %v2709, %v2708
    %v2711 = vld [vmem:[#allocation7] sm:$0xf]
    %v2712 = vld [vmem:[#allocation7 + $0x4] sm:$0xf]
    %v2713 = vld [vmem:[#allocation7 + $0x8] sm:$0xf]
    %v2714 = vld [vmem:[#allocation7 + $0xc] sm:$0xf]
    %v2715 = vld [vmem:[#allocation7 + $0x10] sm:$0xf]
    %v2716 = vld [vmem:[#allocation7 + $0x14] sm:$0xf]
    %v2717 = vld [vmem:[#allocation7 + $0x18] sm:$0xf]
    %v2718 = vld [vmem:[#allocation7 + $0x1c] sm:$0xf]
    %v2719 = vld [vmem:[#allocation7 + $0x20] sm:$0xf]
    %v2720 = vld [vmem:[#allocation7 + $0x24] sm:$0xf]
    %v2721 = vld [vmem:[#allocation7 + $0x28] sm:$0xf]
    %v2722 = vld [vmem:[#allocation7 + $0x2c] sm:$0xf]
    %v2723 = vld [vmem:[#allocation7 + $0x30] sm:$0xf]
    %v2724 = vld [vmem:[#allocation7 + $0x34] sm:$0xf]
    %v2725 = vld [vmem:[#allocation7 + $0x38] sm:$0xf]
    %v2726 = vld [vmem:[#allocation7 + $0x3c] sm:$0xf]
    %v2727 = vld [vmem:[#allocation7 + $0x40] sm:$0xf]
    %v2728 = vld [vmem:[#allocation7 + $0x44] sm:$0xf]
    %v2729 = vld [vmem:[#allocation7 + $0x48] sm:$0xf]
    %v2730 = vld [vmem:[#allocation7 + $0x4c] sm:$0xf]
    %v2731 = vld [vmem:[#allocation7 + $0x50] sm:$0xf]
    %v2732 = vld [vmem:[#allocation7 + $0x54] sm:$0xf]
    %v2733 = vld [vmem:[#allocation7 + $0x58] sm:$0xf]
    %v2734 = vld [vmem:[#allocation7 + $0x5c] sm:$0xf]
    %v2735 = vld [vmem:[#allocation7 + $0x60] sm:$0xf]
    %v2736 = vld [vmem:[#allocation7 + $0x64] sm:$0xf]
    %v2737 = vld [vmem:[#allocation7 + $0x68] sm:$0xf]
    %v2738 = vld [vmem:[#allocation7 + $0x6c] sm:$0xf]
    %v2739 = vld [vmem:[#allocation7 + $0x70] sm:$0xf]
    %v2740 = vld [vmem:[#allocation7 + $0x74] sm:$0xf]
    %v2741 = vld [vmem:[#allocation7 + $0x78] sm:$0xf]
    %v2742 = vld [vmem:[#allocation7 + $0x7c] sm:$0xf]
    %v2775 = vunpack.c.l.b16 %v2711
    %v2776 = vunpack.c.l.b16 %v2712
    %v2777 = vunpack.c.l.b16 %v2713
    %v2778 = vunpack.c.l.b16 %v2714
    %v2779 = vunpack.c.l.b16 %v2715
    %v2780 = vunpack.c.l.b16 %v2716
    %v2781 = vunpack.c.l.b16 %v2717
    %v2782 = vunpack.c.l.b16 %v2718
    %v2783 = vunpack.c.l.b16 %v2719
    %v2784 = vunpack.c.l.b16 %v2720
    %v2785 = vunpack.c.l.b16 %v2721
    %v2786 = vunpack.c.l.b16 %v2722
    %v2787 = vunpack.c.l.b16 %v2723
    %v2788 = vunpack.c.l.b16 %v2724
    %v2789 = vunpack.c.l.b16 %v2725
    %v2790 = vunpack.c.l.b16 %v2726
    %v2791 = vunpack.c.l.b16 %v2727
    %v2792 = vunpack.c.l.b16 %v2728
    %v2793 = vunpack.c.l.b16 %v2729
    %v2794 = vunpack.c.l.b16 %v2730
    %v2795 = vunpack.c.l.b16 %v2731
    %v2796 = vunpack.c.l.b16 %v2732
    %v2797 = vunpack.c.l.b16 %v2733
    %v2798 = vunpack.c.l.b16 %v2734
    %v2799 = vunpack.c.l.b16 %v2735
    %v2800 = vunpack.c.l.b16 %v2736
    %v2801 = vunpack.c.l.b16 %v2737
    %v2802 = vunpack.c.l.b16 %v2738
    %v2803 = vunpack.c.l.b16 %v2739
    %v2804 = vunpack.c.l.b16 %v2740
    %v2805 = vunpack.c.l.b16 %v2741
    %v2806 = vunpack.c.l.b16 %v2742
    %v2807 = vpack.c.b16 %v2776, %v2775
    %v2808 = vpack.c.b16 %v2778, %v2777
    %v2809 = vpack.c.b16 %v2780, %v2779
    %v2810 = vpack.c.b16 %v2782, %v2781
    %v2811 = vpack.c.b16 %v2784, %v2783
    %v2812 = vpack.c.b16 %v2786, %v2785
    %v2813 = vpack.c.b16 %v2788, %v2787
    %v2814 = vpack.c.b16 %v2790, %v2789
    %v2815 = vpack.c.b16 %v2792, %v2791
    %v2816 = vpack.c.b16 %v2794, %v2793
    %v2817 = vpack.c.b16 %v2796, %v2795
    %v2818 = vpack.c.b16 %v2798, %v2797
    %v2819 = vpack.c.b16 %v2800, %v2799
    %v2820 = vpack.c.b16 %v2802, %v2801
    %v2821 = vpack.c.b16 %v2804, %v2803
    %v2822 = vpack.c.b16 %v2806, %v2805
    %2839 = vmatprep.subr.bf16.mxu0 0
    %2840 = vmatpush1.bf16.xpose.msra.mxu0 %v2807
    %2841 = vmatprep.subr.bf16.mxu0 0
    %2842 = vmatpush1.bf16.xpose.msra.mxu0 %v2808
    %2843 = vmatprep.subr.bf16.mxu0 0
    %2844 = vmatpush1.bf16.xpose.msra.mxu0 %v2809
    %2845 = vmatprep.subr.bf16.mxu0 0
    %2846 = vmatpush1.bf16.xpose.msra.mxu0 %v2810
    %2847 = vmatprep.subr.bf16.mxu0 0
    %2848 = vmatpush1.bf16.xpose.msra.mxu0 %v2811
    %2849 = vmatprep.subr.bf16.mxu0 0
    %2850 = vmatpush1.bf16.xpose.msra.mxu0 %v2812
    %2851 = vmatprep.subr.bf16.mxu0 0
    %2852 = vmatpush1.bf16.xpose.msra.mxu0 %v2813
    %2853 = vmatprep.subr.bf16.mxu0 0
    %2854 = vmatpush1.bf16.xpose.msra.mxu0 %v2814
    %2855 = vmatprep.subr.bf16.mxu0 0
    %2856 = vmatpush1.bf16.xpose.msra.mxu0 %v2815
    %2857 = vmatprep.subr.bf16.mxu0 0
    %2858 = vmatpush1.bf16.xpose.msra.mxu0 %v2816
    %2859 = vmatprep.subr.bf16.mxu0 0
    %2860 = vmatpush1.bf16.xpose.msra.mxu0 %v2817
    %2861 = vmatprep.subr.bf16.mxu0 0
    %2862 = vmatpush1.bf16.xpose.msra.mxu0 %v2818
    %2863 = vmatprep.subr.bf16.mxu0 0
    %2864 = vmatpush1.bf16.xpose.msra.mxu0 %v2819
    %2865 = vmatprep.subr.bf16.mxu0 0
    %2866 = vmatpush1.bf16.xpose.msra.mxu0 %v2820
    %2867 = vmatprep.subr.bf16.mxu0 0
    %2868 = vmatpush1.bf16.xpose.msra.mxu0 %v2821
    %2869 = vmatprep.subr.bf16.mxu0 0
    %2870 = vmatpush1.bf16.xpose.msra.mxu0 %v2822
    %2871 = vmatprep.mubr.bf16.mxu0 0
    %2872 = vmatmul.mubr.bf16.gmra.mrb[0].mxu0 %v2710
    %v2873 = vpop.f32.mrb[0].mxu0
    %v2874 = vadd.f32 0.0, %v2873
    %v2875 = vpop.f32.mrb[0].mxu0
    %v2876 = vadd.f32 0.0, %v2875
    %v2877 = vpop.f32.mrb[0].mxu0
    %v2878 = vadd.f32 0.0, %v2877
    %v2879 = vpop.f32.mrb[0].mxu0
    %v2880 = vadd.f32 0.0, %v2879
    %2881 = vdwg.mxu0
    %2882 = vst [vmem:[#allocation8] sm:$0xff] %v2874
    %2883 = vst [vmem:[#allocation8 + $0x8] sm:$0xff] %v2876
    %2884 = vst [vmem:[#allocation8 + $0x10] sm:$0xff] %v2878
    %2885 = vst [vmem:[#allocation8 + $0x18] sm:$0xff] %v2880
    %v2886 = vld [vmem:[%s13] sm:$0xff]
    %v2887 = vld [vmem:[%s13 + $0x8] sm:$0xff]
    %v2888 = vmax.f32 %v2874, %v2876
    %2889 = vmax.xlane.f32.xlu0 %v2888
    %v2890 = vpop.xlane.xlu0 %2889
    %v2891 = vmax.f32 %v2878, %v2880
    %2892 = vmax.xlane.f32.xlu0 %v2891
    %v2893 = vpop.xlane.xlu0 %2892
    %v2894 = vsub.f32 %v2874, %v2890
    %v2895 = vsub.f32 %v2876, %v2890
    %v2896 = vsub.f32 %v2878, %v2893
    %v2897 = vsub.f32 %v2880, %v2893
    %v2898 = vmul.f32 %v2894, 1.442695
    %v2899 = vpow.pop %v2898
    %v2900 = vmul.f32 %v2895, 1.442695
    %v2901 = vpow.pop %v2900
    %v2902 = vmul.f32 %v2896, 1.442695
    %v2903 = vpow.pop %v2902
    %v2904 = vmul.f32 %v2897, 1.442695
    %v2905 = vpow.pop %v2904
    %v2906 = vadd.f32 %v2899, %v2901
    %2907 = vadd.xlane.f32.xlu0 %v2906
    %v2908 = vpop.xlane.xlu0 %2907
    %v2909 = vadd.f32 %v2903, %v2905
    %2910 = vadd.xlane.f32.xlu0 %v2909
    %v2911 = vpop.xlane.xlu0 %2910
    %v2912 = vlog2.pop %v2908
    %v2913 = vmul.f32 %v2912, 0.6931472
    %v2914 = vlog2.pop %v2911
    %v2915 = vmul.f32 %v2914, 0.6931472
    %v2916 = vadd.f32 %v2913, %v2890
    %v2917 = vadd.f32 %v2915, %v2893
    %v2918 = vlaneseq
    %v2919 = vand.u32 %v2918, 127
    %v2920 = vadd.s32 %v2919, 128
    %2921 = vset.pattern.permute.xlu0 0
    %2922 = vperm.xlu0 %2921, %v2886
    %v2923 = vpop.permute.xlu0 %2922
    %2924 = vset.pattern.permute.xlu0 0
    %2925 = vperm.xlu0 %2924, %v2887
    %v2926 = vpop.permute.xlu0 %2925
    %vm2927 = vcmp.eq.s32.totalorder %v2919, %v2923
    %vm2928 = vcmp.eq.s32.totalorder %v2920, %v2923
    %vm2929 = vcmp.eq.s32.totalorder %v2919, %v2926
    %vm2930 = vcmp.eq.s32.totalorder %v2920, %v2926
    %v2931 = vsel %vm2927, %v2874, 0.0
    %v2932 = vsel %vm2928, %v2876, 0.0
    %v2933 = vsel %vm2929, %v2878, 0.0
    %v2934 = vsel %vm2930, %v2880, 0.0
    %v2935 = vadd.f32 %v2931, %v2932
    %2936 = vadd.xlane.f32.xlu0 %v2935
    %v2937 = vpop.xlane.xlu0 %2936
    %v2938 = vadd.f32 %v2933, %v2934
    %2939 = vadd.xlane.f32.xlu0 %v2938
    %v2940 = vpop.xlane.xlu0 %2939
    %vm2941 = vcmp.ne.s32.totalorder %v2886, 0
    %vm2942 = vcmp.ne.s32.totalorder %v2887, 0
    %v2943 = vsel %vm2941, 1, 0
    %v2944 = vsel %vm2942, 1, 0
    %v2945 = vcvt.s32.f32 %v2943
    %v2946 = vcvt.s32.f32 %v2944
    %v2947 = vsub.f32 %v2916, %v2937
    %v2948 = vsub.f32 %v2917, %v2940
    %v2949 = vmul.f32 %v2947, %v2945
    %v2950 = vmul.f32 %v2948, %v2946
    %vm2951 = vcmask 7168
    %v2952 = vsel %vm2951, %v2949, 0.0
    %v2953 = vsel %vm2951, %v2950, 0.0
    %v2954 = vadd.f32 %v2952, %v2953
    %v2955 = vrot.slane %v2954, 4
    %v2956 = vadd.f32 %v2954, %v2955
    %v2957 = vrot.slane %v2956, 2
    %v2958 = vadd.f32 %v2956, %v2957
    %v2959 = vrot.slane %v2958, 1
    %v2960 = vadd.f32 %v2958, %v2959
    %v2961 = vsel %vm2951, %v2945, 0.0
    %v2962 = vsel %vm2951, %v2946, 0.0
    %v2963 = vadd.f32 %v2961, %v2962
    %v2964 = vrot.slane %v2963, 4
    %v2965 = vadd.f32 %v2963, %v2964
    %v2966 = vrot.slane %v2965, 2
    %v2967 = vadd.f32 %v2965, %v2966
    %v2968 = vrot.slane %v2967, 1
    %v2969 = vadd.f32 %v2967, %v2968
    %v2970 = vmax.f32 %v2969, 1.0
    %v2971 = vrcp.pop %v2970
    %v2972 = vmul.f32 %v2960, %v2971
    %vm2973 = vcmask 0
    %2974 = vst.msk [vmem:[#allocation9] sm:$0x1] %vm2973, %v2972
    // Predicated region
    $region70: #{gemma_forward.1} parent=1 // pred_check
      _
    $region71: #{gemma_forward.1} parent=1 // pred_check_branch
      %2976 = sbr.rel (0) target = $region73
    $region72: #{gemma_forward.1} parent=1 // pred_region
      %s2978 = ssub.s32 512, 512
      %2979 = vsyncadd [#allocation4], %s2978
      %s2980 = sshll.u32 [#allocation8], 4
      %s2981 = int_to_ptr.vmem [resolvable:$true] %s2980
      %2986 = dma.vmem_to_hbm [thread:$0]  %s2981, 512, %s14, [#allocation4], 256, 256, 16
    $region73: #{gemma_forward.1} parent=1 // pred_fallthru
      _
    // Predicated region
    $region74: #{gemma_forward.1} parent=1 // pred_check
      _
    $region75: #{gemma_forward.1} parent=1 // pred_check_branch
      %2988 = sbr.rel (0) target = $region77
    $region76: #{gemma_forward.1} parent=1 // pred_region
      %s2990 = ssub.s32 16, 16
      %2991 = vsyncadd [#allocation10], %s2990
      %s2993 = sshll.u32 [#allocation9], 4
      %s2994 = int_to_ptr.vmem [resolvable:$true] %s2993
      %2996 = dma.vmem_to_hbm [thread:$0]  %s2994, 16, %s15, [#allocation10]
    $region77: #{gemma_forward.1} parent=1 // pred_fallthru
      _
    // Predicated region
    $region78: #{gemma_forward.1} parent=1 // pred_check
      _
    $region79: #{gemma_forward.1} parent=1 // pred_check_branch
      %2998 = sbr.rel (0) target = $region81
    $region80: #{gemma_forward.1} parent=1 // pred_region
      %2999 = dma.done [#allocation4], 512
    $region81: #{gemma_forward.1} parent=1 // pred_fallthru
      _
    // Predicated region
    $region82: #{gemma_forward.1} parent=1 // pred_check
      _
    $region83: #{gemma_forward.1} parent=1 // pred_check_branch
      %3001 = sbr.rel (0) target = $region85
    $region84: #{gemma_forward.1} parent=1 // pred_region
      %3002 = dma.done [#allocation10], 16
    $region85: #{gemma_forward.1} parent=1 // pred_fallthru
      _
    %3003 = vsyncpa [#allocation3], 1
    %3004 = vsyncpa [#allocation6], 1
    %3005 = vsyncpa [#allocation4], 1
    %3006 = vsyncpa [#allocation10], 1

</llo_original>
